<compile_context>
chip_gen: v7x
topology: tpu7x:2x2x1
jax: 0.10.0
libtpu: 0.0.40
codegen_flags: <defaults>
</compile_context>

<pallas_src>
import functools

import numpy as np
import jax
import jax.numpy as jnp
from jax.experimental import pallas as pl
from jax.experimental.pallas import tpu as pltpu


# --------------------------------------------------------------------------
# In-kernel building blocks
# --------------------------------------------------------------------------
def _conv3x3_flat(x, w9, b, mask, wp, act):
    """3x3 'same' conv on a flattened, zero-ring-padded spatial grid.

    x:    (Cin, L) f32, L = (H+2)*(W+2), boundary ring is zero.
    w9:   (Cout, 9*Cin) tap-major ((kh,kw) outer, Cin inner) conv weights.
    b:    (Cout, 1) bias.
    mask: (1, L) 1.0 at interior positions, 0.0 on the ring.
    wp:   padded row width W+2 (flat stride of one spatial row).
    """
    cin, L = x.shape
    m = wp + 1  # max |tap shift| in flat coordinates
    zeros = jnp.zeros((cin, m), x.dtype)
    x_ext = jnp.concatenate([zeros, x, zeros], axis=1)      # (Cin, L + 2m)

    taps = []
    for dh in (-1, 0, 1):
        for dw in (-1, 0, 1):
            s = dh * wp + dw
            # shifted[:, p] == x[:, p + s]  (zeros outside; only interior p used)
            taps.append(x_ext[:, m + s:m + s + L])
    x9 = jnp.concatenate(taps, axis=0)                       # (9*Cin, L)

    y = jnp.dot(w9, x9, preferred_element_type=jnp.float32) + b   # (Cout, L)
    y = jnp.maximum(y, 0.0) if act == 'relu' else jnp.tanh(y)
    return y * mask  # re-zero the halo ring for the next layer


def _decoder_kernel(in3_ref, res2_ref, res1_ref,
                    m3_ref, m2_ref, m1_ref, s2_ref, s1_ref,
                    w33_ref, b33_ref, w32_ref, b32_ref, w31_ref, b31_ref,
                    w22_ref, b22_ref, w21_ref, b21_ref,
                    w12_ref, b12_ref, w11_ref, b11_ref,
                    out_ref, *, wp3, wp2, wp1):
    m3, m2, m1 = m3_ref[...], m2_ref[...], m1_ref[...]

    # ---- dec3 ----
    x = in3_ref[0]                                            # (4g, L3)
    x = _conv3x3_flat(x, w33_ref[...], b33_ref[...], m3, wp3, 'relu')
    x = _conv3x3_flat(x, w32_ref[...], b32_ref[...], m3, wp3, 'relu')
    x = _conv3x3_flat(x, w31_ref[...], b31_ref[...], m3, wp3, 'relu')

    # fixed_unpooling + residual add, entirely in VMEM (0/1 scatter matmul)
    x = jnp.dot(x, s2_ref[...], preferred_element_type=jnp.float32) + res2_ref[0]

    # ---- dec2 ----
    x = _conv3x3_flat(x, w22_ref[...], b22_ref[...], m2, wp2, 'relu')
    x = _conv3x3_flat(x, w21_ref[...], b21_ref[...], m2, wp2, 'relu')

    x = jnp.dot(x, s1_ref[...], preferred_element_type=jnp.float32) + res1_ref[0]

    # ---- dec1 ----
    x = _conv3x3_flat(x, w12_ref[...], b12_ref[...], m1, wp1, 'relu')
    x = _conv3x3_flat(x, w11_ref[...], b11_ref[...], m1, wp1, 'tanh')

    out_ref[0] = x.astype(out_ref.dtype)                      # (c_dim, L1)


# --------------------------------------------------------------------------
# Host-side (trace-time) constant builders and parameter prep
# --------------------------------------------------------------------------
def _interior_mask(hp, wp):
    m = np.zeros((hp, wp), np.float32)
    m[1:-1, 1:-1] = 1.0
    return jnp.asarray(m.reshape(1, hp * wp))


def _unpool_scatter(hs, ws):
    """0/1 matrix mapping padded-flat (hs+2, ws+2) -> padded-flat (2hs+2, 2ws+2):
    source interior (i, j) scatters to target interior (2i, 2j) (zero insert)."""
    wsp = ws + 2
    wtp = 2 * ws + 2
    htp = 2 * hs + 2
    s = np.zeros(((hs + 2) * wsp, htp * wtp), np.float32)
    for i in range(hs):
        for j in range(ws):
            s[(i + 1) * wsp + (j + 1), (2 * i + 1) * wtp + (2 * j + 1)] = 1.0
    return jnp.asarray(s)


def _prep_conv_weight(wt, b):
    """PyTorch ConvTranspose2d weight (Cin, Cout, 3, 3) -> (Cout, 9*Cin) matrix
    (flipped kernel, in/out swapped) matching the tap-major im2col order."""
    cin, cout = wt.shape[0], wt.shape[1]
    k = jnp.flip(wt, axis=(2, 3))                      # conv kernel (Cin, Cout, kh, kw)
    w9 = k.transpose(1, 2, 3, 0).reshape(cout, 9 * cin)
    return w9.astype(jnp.float32), b.reshape(cout, 1).astype(jnp.float32)


# --------------------------------------------------------------------------
# Fused forward
# --------------------------------------------------------------------------
def dec_cnn_forward(params, res1, res2, res3, comb):
    """DecCnn forward. Inputs/outputs use the PyTorch NCHW convention."""
    n, c3, h3s, w3s = res3.shape
    _, c2, h2s, w2s = res2.shape
    _, c1, h1s, w1s = res1.shape
    c_out = params['1_1'][0].shape[1]

    hp3, wp3 = h3s + 2, w3s + 2
    hp2, wp2 = h2s + 2, w2s + 2
    hp1, wp1 = h1s + 2, w1s + 2
    l3, l2, l1 = hp3 * wp3, hp2 * wp2, hp1 * wp1
    f32 = jnp.float32

    # stage-3 input = pad(fixed_unpooling(comb) + res3), channel-first, flattened
    up = jnp.zeros((n, c3, h3s, w3s), f32).at[:, :, ::2, ::2].set(comb)
    in3 = up + res3.astype(f32)
    pad4 = lambda t: jnp.pad(t, ((0, 0), (0, 0), (1, 1), (1, 1)))
    in3p = pad4(in3).reshape(n, c3, l3)
    res2p = pad4(res2.astype(f32)).reshape(n, c2, l2)
    res1p = pad4(res1.astype(f32)).reshape(n, c1, l1)

    # trace-time constants (folded under jit)
    m3, m2, m1 = (_interior_mask(hp3, wp3), _interior_mask(hp2, wp2),
                  _interior_mask(hp1, wp1))
    s2 = _unpool_scatter(h3s, w3s)                     # (l3, l2)
    s1 = _unpool_scatter(h2s, w2s)                     # (l2, l1)

    wb = []
    for name in ('3_3', '3_2', '3_1', '2_2', '2_1', '1_2', '1_1'):
        wb.extend(_prep_conv_weight(*params[name]))

    kernel = functools.partial(_decoder_kernel, wp3=wp3, wp2=wp2, wp1=wp1)

    def full_spec(a):           # whole array resident in VMEM, fetched once
        return pl.BlockSpec(a.shape, lambda i: (0, 0))

    def batch_spec(a):          # one batch element per grid step
        return pl.BlockSpec((1,) + a.shape[1:], lambda i: (i, 0, 0))

    args = [in3p, res2p, res1p, m3, m2, m1, s2, s1] + wb
    in_specs = ([batch_spec(in3p), batch_spec(res2p), batch_spec(res1p)]
                + [full_spec(a) for a in args[3:]])

    out_flat = pl.pallas_call(
        kernel,
        out_shape=jax.ShapeDtypeStruct((n, c_out, l1), f32),
        grid=(n,),
        in_specs=in_specs,
        out_specs=pl.BlockSpec((1, c_out, l1), lambda i: (i, 0, 0)),
        compiler_params=pltpu.CompilerParams(
            dimension_semantics=("parallel",)),
    )(*args)

    # drop the padding ring, back to NCHW
    return out_flat.reshape(n, c_out, hp1, wp1)[:, :, 1:-1, 1:-1]


# --------------------------------------------------------------------------
# Pure-JAX reference (independent of the kernel's layout tricks)
# --------------------------------------------------------------------------
def _dec_cnn_reference(params, res1, res2, res3, comb):
    def unpool(x):
        n, c, h, w = x.shape
        return jnp.zeros((n, c, 2 * h, 2 * w), x.dtype).at[:, :, ::2, ::2].set(x)

    def convt(x, wt, b, act):
        w = jnp.flip(wt, axis=(2, 3)).transpose(1, 0, 2, 3)   # OIHW conv kernel
        y = jax.lax.conv_general_dilated(
            x, w, window_strides=(1, 1), padding=((1, 1), (1, 1)),
            dimension_numbers=('NCHW', 'OIHW', 'NCHW'))
        y = y + b.reshape(1, -1, 1, 1)
        return jnp.maximum(y, 0.0) if act == 'relu' else jnp.tanh(y)

    x = unpool(comb) + res3
    for name in ('3_3', '3_2', '3_1'):
        x = convt(x, *params[name], act='relu')
    x = unpool(x) + res2
    for name in ('2_2', '2_1'):
        x = convt(x, *params[name], act='relu')
    x = unpool(x) + res1
    x = convt(x, *params['1_2'], act='relu')
    x = convt(x, *params['1_1'], act='tanh')
    return x


def init_params(key, c_dim, gf_dim):
    g = gf_dim
    layer_dims = {
        '3_3': (4 * g, 4 * g), '3_2': (4 * g, 4 * g), '3_1': (4 * g, 2 * g),
        '2_2': (2 * g, 2 * g), '2_1': (2 * g, g),
        '1_2': (g, g), '1_1': (g, c_dim),
    }
    params = {}
    for i, (name, (cin, cout)) in enumerate(layer_dims.items()):
        kw_key, kb_key = jax.random.split(jax.random.fold_in(key, i))
        bound = 1.0 / float(np.sqrt(cin * 9.0))
        w = jax.random.uniform(kw_key, (cin, cout, 3, 3), jnp.float32, -bound, bound)
        b = jax.random.uniform(kb_key, (cout,), jnp.float32, -bound, bound)
        params[name] = (w, b)
    return params


if __name__ == "__main__":
    c_dim, gf_dim = 3, 8
    n, h, w = 2, 4, 4  # spatial size of `comb`

    params = init_params(jax.random.PRNGKey(0), c_dim, gf_dim)
    k1, k2, k3, k4 = jax.random.split(jax.random.PRNGKey(0), 4)
    comb = jax.random.normal(k4, (n, 4 * gf_dim, h, w), jnp.float32)
    res3 = jax.random.normal(k3, (n, 4 * gf_dim, 2 * h, 2 * w), jnp.float32)
    res2 = jax.random.normal(k2, (n, 2 * gf_dim, 4 * h, 4 * w), jnp.float32)
    res1 = jax.random.normal(k1, (n, gf_dim, 8 * h, 8 * w), jnp.float32)

    fwd = jax.jit(dec_cnn_forward)
    out = jax.block_until_ready(fwd(params, res1, res2, res3, comb))
    assert out.shape == (n, c_dim, 8 * h, 8 * w), out.shape

    ref = _dec_cnn_reference(params, res1, res2, res3, comb)
    err = float(jnp.max(jnp.abs(out - ref)))
    assert jnp.allclose(out, ref, atol=1e-4, rtol=1e-4), err

    print("KERNEL_OK")
</pallas_src>

<mosaic_0001>
module attributes {stable_mosaic.version = 11 : i64} {
  func.func @_decoder_kernel(%arg0: i32, %arg1: memref<1x32x100xf32, #tpu.memory_space<vmem>>, %arg2: memref<1x16x324xf32, #tpu.memory_space<vmem>>, %arg3: memref<1x8x1156xf32, #tpu.memory_space<vmem>>, %arg4: memref<1x100xf32, #tpu.memory_space<vmem>>, %arg5: memref<1x324xf32, #tpu.memory_space<vmem>>, %arg6: memref<1x1156xf32, #tpu.memory_space<vmem>>, %arg7: memref<100x324xf32, #tpu.memory_space<vmem>>, %arg8: memref<324x1156xf32, #tpu.memory_space<vmem>>, %arg9: memref<32x288xf32, #tpu.memory_space<vmem>>, %arg10: memref<32x1xf32, #tpu.memory_space<vmem>>, %arg11: memref<32x288xf32, #tpu.memory_space<vmem>>, %arg12: memref<32x1xf32, #tpu.memory_space<vmem>>, %arg13: memref<16x288xf32, #tpu.memory_space<vmem>>, %arg14: memref<16x1xf32, #tpu.memory_space<vmem>>, %arg15: memref<16x144xf32, #tpu.memory_space<vmem>>, %arg16: memref<16x1xf32, #tpu.memory_space<vmem>>, %arg17: memref<8x144xf32, #tpu.memory_space<vmem>>, %arg18: memref<8x1xf32, #tpu.memory_space<vmem>>, %arg19: memref<8x72xf32, #tpu.memory_space<vmem>>, %arg20: memref<8x1xf32, #tpu.memory_space<vmem>>, %arg21: memref<3x72xf32, #tpu.memory_space<vmem>>, %arg22: memref<3x1xf32, #tpu.memory_space<vmem>>, %arg23: memref<1x3x1156xf32, #tpu.memory_space<vmem>>) attributes {dimension_semantics = [#tpu.dimension_semantics<parallel>], iteration_bounds = array<i64: 2>, scalar_prefetch = 0 : i64, scratch_operands = 0 : i64, tpu.core_type = #tpu.core_type<tc>, window_params = [{transform_indices = @transform_0, window_bounds = array<i64: 1, 32, 100>}, {transform_indices = @transform_1, window_bounds = array<i64: 1, 16, 324>}, {transform_indices = @transform_2, window_bounds = array<i64: 1, 8, 1156>}, {pipeline_mode = #tpu.pipeline_mode<synchronous>, transform_indices = @transform_3, window_bounds = array<i64: 1, 100>}, {pipeline_mode = #tpu.pipeline_mode<synchronous>, transform_indices = @transform_4, window_bounds = array<i64: 1, 324>}, {pipeline_mode = #tpu.pipeline_mode<synchronous>, transform_indices = @transform_5, window_bounds = array<i64: 1, 1156>}, {pipeline_mode = #tpu.pipeline_mode<synchronous>, transform_indices = @transform_6, window_bounds = array<i64: 100, 324>}, {pipeline_mode = #tpu.pipeline_mode<synchronous>, transform_indices = @transform_7, window_bounds = array<i64: 324, 1156>}, {pipeline_mode = #tpu.pipeline_mode<synchronous>, transform_indices = @transform_8, window_bounds = array<i64: 32, 288>}, {pipeline_mode = #tpu.pipeline_mode<synchronous>, transform_indices = @transform_9, window_bounds = array<i64: 32, 1>}, {pipeline_mode = #tpu.pipeline_mode<synchronous>, transform_indices = @transform_10, window_bounds = array<i64: 32, 288>}, {pipeline_mode = #tpu.pipeline_mode<synchronous>, transform_indices = @transform_11, window_bounds = array<i64: 32, 1>}, {pipeline_mode = #tpu.pipeline_mode<synchronous>, transform_indices = @transform_12, window_bounds = array<i64: 16, 288>}, {pipeline_mode = #tpu.pipeline_mode<synchronous>, transform_indices = @transform_13, window_bounds = array<i64: 16, 1>}, {pipeline_mode = #tpu.pipeline_mode<synchronous>, transform_indices = @transform_14, window_bounds = array<i64: 16, 144>}, {pipeline_mode = #tpu.pipeline_mode<synchronous>, transform_indices = @transform_15, window_bounds = array<i64: 16, 1>}, {pipeline_mode = #tpu.pipeline_mode<synchronous>, transform_indices = @transform_16, window_bounds = array<i64: 8, 144>}, {pipeline_mode = #tpu.pipeline_mode<synchronous>, transform_indices = @transform_17, window_bounds = array<i64: 8, 1>}, {pipeline_mode = #tpu.pipeline_mode<synchronous>, transform_indices = @transform_18, window_bounds = array<i64: 8, 72>}, {pipeline_mode = #tpu.pipeline_mode<synchronous>, transform_indices = @transform_19, window_bounds = array<i64: 8, 1>}, {pipeline_mode = #tpu.pipeline_mode<synchronous>, transform_indices = @transform_20, window_bounds = array<i64: 3, 72>}, {pipeline_mode = #tpu.pipeline_mode<synchronous>, transform_indices = @transform_21, window_bounds = array<i64: 3, 1>}, {transform_indices = @transform_22, window_bounds = array<i64: 1, 3, 1156>}]} {
    %c0 = arith.constant 0 : index
    %c0_0 = arith.constant 0 : index
    %0 = vector.load %arg4[%c0, %c0_0] : memref<1x100xf32, #tpu.memory_space<vmem>>, vector<1x100xf32>
    %c0_1 = arith.constant 0 : index
    %c0_2 = arith.constant 0 : index
    %1 = vector.load %arg5[%c0_1, %c0_2] : memref<1x324xf32, #tpu.memory_space<vmem>>, vector<1x324xf32>
    %c0_3 = arith.constant 0 : index
    %c0_4 = arith.constant 0 : index
    %2 = vector.load %arg6[%c0_3, %c0_4] : memref<1x1156xf32, #tpu.memory_space<vmem>>, vector<1x1156xf32>
    %c0_5 = arith.constant 0 : index
    %c0_6 = arith.constant 0 : index
    %c0_7 = arith.constant 0 : index
    %3 = vector.load %arg1[%c0_5, %c0_6, %c0_7] : memref<1x32x100xf32, #tpu.memory_space<vmem>>, vector<1x32x100xf32>
    %4 = vector.shape_cast %3 : vector<1x32x100xf32> to vector<32x100xf32>
    %c0_8 = arith.constant 0 : index
    %c0_9 = arith.constant 0 : index
    %5 = vector.load %arg9[%c0_8, %c0_9] : memref<32x288xf32, #tpu.memory_space<vmem>>, vector<32x288xf32>
    %c0_10 = arith.constant 0 : index
    %c0_11 = arith.constant 0 : index
    %6 = vector.load %arg10[%c0_10, %c0_11] : memref<32x1xf32, #tpu.memory_space<vmem>>, vector<32x1xf32>
    %cst = arith.constant 0.000000e+00 : f32
    %7 = vector.broadcast %cst : f32 to vector<32x11xf32>
    %8 = tpu.concatenate %7, %4, %7 in 1 : vector<32x11xf32>, vector<32x100xf32>, vector<32x11xf32> -> vector<32x122xf32>
    %9 = vector.extract_strided_slice %8 {offsets = [0, 0], sizes = [32, 100], strides = [1, 1]} : vector<32x122xf32> to vector<32x100xf32>
    %10 = vector.extract_strided_slice %8 {offsets = [0, 1], sizes = [32, 100], strides = [1, 1]} : vector<32x122xf32> to vector<32x100xf32>
    %11 = vector.extract_strided_slice %8 {offsets = [0, 2], sizes = [32, 100], strides = [1, 1]} : vector<32x122xf32> to vector<32x100xf32>
    %12 = vector.extract_strided_slice %8 {offsets = [0, 10], sizes = [32, 100], strides = [1, 1]} : vector<32x122xf32> to vector<32x100xf32>
    %13 = vector.extract_strided_slice %8 {offsets = [0, 11], sizes = [32, 100], strides = [1, 1]} : vector<32x122xf32> to vector<32x100xf32>
    %14 = vector.extract_strided_slice %8 {offsets = [0, 12], sizes = [32, 100], strides = [1, 1]} : vector<32x122xf32> to vector<32x100xf32>
    %15 = vector.extract_strided_slice %8 {offsets = [0, 20], sizes = [32, 100], strides = [1, 1]} : vector<32x122xf32> to vector<32x100xf32>
    %16 = vector.extract_strided_slice %8 {offsets = [0, 21], sizes = [32, 100], strides = [1, 1]} : vector<32x122xf32> to vector<32x100xf32>
    %17 = vector.extract_strided_slice %8 {offsets = [0, 22], sizes = [32, 100], strides = [1, 1]} : vector<32x122xf32> to vector<32x100xf32>
    %18 = tpu.concatenate %9, %10, %11, %12, %13, %14, %15, %16, %17 in 0 : vector<32x100xf32>, vector<32x100xf32>, vector<32x100xf32>, vector<32x100xf32>, vector<32x100xf32>, vector<32x100xf32>, vector<32x100xf32>, vector<32x100xf32>, vector<32x100xf32> -> vector<288x100xf32>
    %cst_12 = arith.constant dense<0.000000e+00> : vector<32x100xf32>
    %19 = tpu.matmul %5, %18, %cst_12 {dimension_numbers = #tpu.dot_dimension_numbers<[1], [0], [0], [1], [0, 0, 1, 1], [], []>} : vector<32x288xf32>, vector<288x100xf32>, vector<32x100xf32> -> vector<32x100xf32>
    %20 = vector.broadcast %6 : vector<32x1xf32> to vector<32x100xf32>
    %21 = arith.addf %19, %20 : vector<32x100xf32>
    %cst_13 = arith.constant 0.000000e+00 : f32
    %22 = vector.broadcast %cst_13 : f32 to vector<32x100xf32>
    %23 = arith.maximumf %21, %22 : vector<32x100xf32>
    %24 = vector.broadcast %0 : vector<1x100xf32> to vector<32x100xf32>
    %25 = arith.mulf %23, %24 : vector<32x100xf32>
    %c0_14 = arith.constant 0 : index
    %c0_15 = arith.constant 0 : index
    %26 = vector.load %arg11[%c0_14, %c0_15] : memref<32x288xf32, #tpu.memory_space<vmem>>, vector<32x288xf32>
    %c0_16 = arith.constant 0 : index
    %c0_17 = arith.constant 0 : index
    %27 = vector.load %arg12[%c0_16, %c0_17] : memref<32x1xf32, #tpu.memory_space<vmem>>, vector<32x1xf32>
    %cst_18 = arith.constant 0.000000e+00 : f32
    %28 = vector.broadcast %cst_18 : f32 to vector<32x11xf32>
    %29 = tpu.concatenate %28, %25, %28 in 1 : vector<32x11xf32>, vector<32x100xf32>, vector<32x11xf32> -> vector<32x122xf32>
    %30 = vector.extract_strided_slice %29 {offsets = [0, 0], sizes = [32, 100], strides = [1, 1]} : vector<32x122xf32> to vector<32x100xf32>
    %31 = vector.extract_strided_slice %29 {offsets = [0, 1], sizes = [32, 100], strides = [1, 1]} : vector<32x122xf32> to vector<32x100xf32>
    %32 = vector.extract_strided_slice %29 {offsets = [0, 2], sizes = [32, 100], strides = [1, 1]} : vector<32x122xf32> to vector<32x100xf32>
    %33 = vector.extract_strided_slice %29 {offsets = [0, 10], sizes = [32, 100], strides = [1, 1]} : vector<32x122xf32> to vector<32x100xf32>
    %34 = vector.extract_strided_slice %29 {offsets = [0, 11], sizes = [32, 100], strides = [1, 1]} : vector<32x122xf32> to vector<32x100xf32>
    %35 = vector.extract_strided_slice %29 {offsets = [0, 12], sizes = [32, 100], strides = [1, 1]} : vector<32x122xf32> to vector<32x100xf32>
    %36 = vector.extract_strided_slice %29 {offsets = [0, 20], sizes = [32, 100], strides = [1, 1]} : vector<32x122xf32> to vector<32x100xf32>
    %37 = vector.extract_strided_slice %29 {offsets = [0, 21], sizes = [32, 100], strides = [1, 1]} : vector<32x122xf32> to vector<32x100xf32>
    %38 = vector.extract_strided_slice %29 {offsets = [0, 22], sizes = [32, 100], strides = [1, 1]} : vector<32x122xf32> to vector<32x100xf32>
    %39 = tpu.concatenate %30, %31, %32, %33, %34, %35, %36, %37, %38 in 0 : vector<32x100xf32>, vector<32x100xf32>, vector<32x100xf32>, vector<32x100xf32>, vector<32x100xf32>, vector<32x100xf32>, vector<32x100xf32>, vector<32x100xf32>, vector<32x100xf32> -> vector<288x100xf32>
    %cst_19 = arith.constant dense<0.000000e+00> : vector<32x100xf32>
    %40 = tpu.matmul %26, %39, %cst_19 {dimension_numbers = #tpu.dot_dimension_numbers<[1], [0], [0], [1], [0, 0, 1, 1], [], []>} : vector<32x288xf32>, vector<288x100xf32>, vector<32x100xf32> -> vector<32x100xf32>
    %41 = vector.broadcast %27 : vector<32x1xf32> to vector<32x100xf32>
    %42 = arith.addf %40, %41 : vector<32x100xf32>
    %cst_20 = arith.constant 0.000000e+00 : f32
    %43 = vector.broadcast %cst_20 : f32 to vector<32x100xf32>
    %44 = arith.maximumf %42, %43 : vector<32x100xf32>
    %45 = vector.broadcast %0 : vector<1x100xf32> to vector<32x100xf32>
    %46 = arith.mulf %44, %45 : vector<32x100xf32>
    %c0_21 = arith.constant 0 : index
    %c0_22 = arith.constant 0 : index
    %47 = vector.load %arg13[%c0_21, %c0_22] : memref<16x288xf32, #tpu.memory_space<vmem>>, vector<16x288xf32>
    %c0_23 = arith.constant 0 : index
    %c0_24 = arith.constant 0 : index
    %48 = vector.load %arg14[%c0_23, %c0_24] : memref<16x1xf32, #tpu.memory_space<vmem>>, vector<16x1xf32>
    %cst_25 = arith.constant 0.000000e+00 : f32
    %49 = vector.broadcast %cst_25 : f32 to vector<32x11xf32>
    %50 = tpu.concatenate %49, %46, %49 in 1 : vector<32x11xf32>, vector<32x100xf32>, vector<32x11xf32> -> vector<32x122xf32>
    %51 = vector.extract_strided_slice %50 {offsets = [0, 0], sizes = [32, 100], strides = [1, 1]} : vector<32x122xf32> to vector<32x100xf32>
    %52 = vector.extract_strided_slice %50 {offsets = [0, 1], sizes = [32, 100], strides = [1, 1]} : vector<32x122xf32> to vector<32x100xf32>
    %53 = vector.extract_strided_slice %50 {offsets = [0, 2], sizes = [32, 100], strides = [1, 1]} : vector<32x122xf32> to vector<32x100xf32>
    %54 = vector.extract_strided_slice %50 {offsets = [0, 10], sizes = [32, 100], strides = [1, 1]} : vector<32x122xf32> to vector<32x100xf32>
    %55 = vector.extract_strided_slice %50 {offsets = [0, 11], sizes = [32, 100], strides = [1, 1]} : vector<32x122xf32> to vector<32x100xf32>
    %56 = vector.extract_strided_slice %50 {offsets = [0, 12], sizes = [32, 100], strides = [1, 1]} : vector<32x122xf32> to vector<32x100xf32>
    %57 = vector.extract_strided_slice %50 {offsets = [0, 20], sizes = [32, 100], strides = [1, 1]} : vector<32x122xf32> to vector<32x100xf32>
    %58 = vector.extract_strided_slice %50 {offsets = [0, 21], sizes = [32, 100], strides = [1, 1]} : vector<32x122xf32> to vector<32x100xf32>
    %59 = vector.extract_strided_slice %50 {offsets = [0, 22], sizes = [32, 100], strides = [1, 1]} : vector<32x122xf32> to vector<32x100xf32>
    %60 = tpu.concatenate %51, %52, %53, %54, %55, %56, %57, %58, %59 in 0 : vector<32x100xf32>, vector<32x100xf32>, vector<32x100xf32>, vector<32x100xf32>, vector<32x100xf32>, vector<32x100xf32>, vector<32x100xf32>, vector<32x100xf32>, vector<32x100xf32> -> vector<288x100xf32>
    %cst_26 = arith.constant dense<0.000000e+00> : vector<16x100xf32>
    %61 = tpu.matmul %47, %60, %cst_26 {dimension_numbers = #tpu.dot_dimension_numbers<[1], [0], [0], [1], [0, 0, 1, 1], [], []>} : vector<16x288xf32>, vector<288x100xf32>, vector<16x100xf32> -> vector<16x100xf32>
    %62 = vector.broadcast %48 : vector<16x1xf32> to vector<16x100xf32>
    %63 = arith.addf %61, %62 : vector<16x100xf32>
    %cst_27 = arith.constant 0.000000e+00 : f32
    %64 = vector.broadcast %cst_27 : f32 to vector<16x100xf32>
    %65 = arith.maximumf %63, %64 : vector<16x100xf32>
    %66 = vector.broadcast %0 : vector<1x100xf32> to vector<16x100xf32>
    %67 = arith.mulf %65, %66 : vector<16x100xf32>
    %c0_28 = arith.constant 0 : index
    %c0_29 = arith.constant 0 : index
    %68 = vector.load %arg7[%c0_28, %c0_29] : memref<100x324xf32, #tpu.memory_space<vmem>>, vector<100x324xf32>
    %cst_30 = arith.constant dense<0.000000e+00> : vector<16x324xf32>
    %69 = tpu.matmul %67, %68, %cst_30 {dimension_numbers = #tpu.dot_dimension_numbers<[1], [0], [0], [1], [0, 0, 1, 1], [], []>} : vector<16x100xf32>, vector<100x324xf32>, vector<16x324xf32> -> vector<16x324xf32>
    %c0_31 = arith.constant 0 : index
    %c0_32 = arith.constant 0 : index
    %c0_33 = arith.constant 0 : index
    %70 = vector.load %arg2[%c0_31, %c0_32, %c0_33] : memref<1x16x324xf32, #tpu.memory_space<vmem>>, vector<1x16x324xf32>
    %71 = vector.shape_cast %70 : vector<1x16x324xf32> to vector<16x324xf32>
    %72 = arith.addf %69, %71 : vector<16x324xf32>
    %c0_34 = arith.constant 0 : index
    %c0_35 = arith.constant 0 : index
    %73 = vector.load %arg15[%c0_34, %c0_35] : memref<16x144xf32, #tpu.memory_space<vmem>>, vector<16x144xf32>
    %c0_36 = arith.constant 0 : index
    %c0_37 = arith.constant 0 : index
    %74 = vector.load %arg16[%c0_36, %c0_37] : memref<16x1xf32, #tpu.memory_space<vmem>>, vector<16x1xf32>
    %cst_38 = arith.constant 0.000000e+00 : f32
    %75 = vector.broadcast %cst_38 : f32 to vector<16x19xf32>
    %76 = tpu.concatenate %75, %72, %75 in 1 : vector<16x19xf32>, vector<16x324xf32>, vector<16x19xf32> -> vector<16x362xf32>
    %77 = vector.extract_strided_slice %76 {offsets = [0, 0], sizes = [16, 324], strides = [1, 1]} : vector<16x362xf32> to vector<16x324xf32>
    %78 = vector.extract_strided_slice %76 {offsets = [0, 1], sizes = [16, 324], strides = [1, 1]} : vector<16x362xf32> to vector<16x324xf32>
    %79 = vector.extract_strided_slice %76 {offsets = [0, 2], sizes = [16, 324], strides = [1, 1]} : vector<16x362xf32> to vector<16x324xf32>
    %80 = vector.extract_strided_slice %76 {offsets = [0, 18], sizes = [16, 324], strides = [1, 1]} : vector<16x362xf32> to vector<16x324xf32>
    %81 = vector.extract_strided_slice %76 {offsets = [0, 19], sizes = [16, 324], strides = [1, 1]} : vector<16x362xf32> to vector<16x324xf32>
    %82 = vector.extract_strided_slice %76 {offsets = [0, 20], sizes = [16, 324], strides = [1, 1]} : vector<16x362xf32> to vector<16x324xf32>
    %83 = vector.extract_strided_slice %76 {offsets = [0, 36], sizes = [16, 324], strides = [1, 1]} : vector<16x362xf32> to vector<16x324xf32>
    %84 = vector.extract_strided_slice %76 {offsets = [0, 37], sizes = [16, 324], strides = [1, 1]} : vector<16x362xf32> to vector<16x324xf32>
    %85 = vector.extract_strided_slice %76 {offsets = [0, 38], sizes = [16, 324], strides = [1, 1]} : vector<16x362xf32> to vector<16x324xf32>
    %86 = tpu.concatenate %77, %78, %79, %80, %81, %82, %83, %84, %85 in 0 : vector<16x324xf32>, vector<16x324xf32>, vector<16x324xf32>, vector<16x324xf32>, vector<16x324xf32>, vector<16x324xf32>, vector<16x324xf32>, vector<16x324xf32>, vector<16x324xf32> -> vector<144x324xf32>
    %cst_39 = arith.constant dense<0.000000e+00> : vector<16x324xf32>
    %87 = tpu.matmul %73, %86, %cst_39 {dimension_numbers = #tpu.dot_dimension_numbers<[1], [0], [0], [1], [0, 0, 1, 1], [], []>} : vector<16x144xf32>, vector<144x324xf32>, vector<16x324xf32> -> vector<16x324xf32>
    %88 = vector.broadcast %74 : vector<16x1xf32> to vector<16x324xf32>
    %89 = arith.addf %87, %88 : vector<16x324xf32>
    %cst_40 = arith.constant 0.000000e+00 : f32
    %90 = vector.broadcast %cst_40 : f32 to vector<16x324xf32>
    %91 = arith.maximumf %89, %90 : vector<16x324xf32>
    %92 = vector.broadcast %1 : vector<1x324xf32> to vector<16x324xf32>
    %93 = arith.mulf %91, %92 : vector<16x324xf32>
    %c0_41 = arith.constant 0 : index
    %c0_42 = arith.constant 0 : index
    %94 = vector.load %arg17[%c0_41, %c0_42] : memref<8x144xf32, #tpu.memory_space<vmem>>, vector<8x144xf32>
    %c0_43 = arith.constant 0 : index
    %c0_44 = arith.constant 0 : index
    %95 = vector.load %arg18[%c0_43, %c0_44] : memref<8x1xf32, #tpu.memory_space<vmem>>, vector<8x1xf32>
    %cst_45 = arith.constant 0.000000e+00 : f32
    %96 = vector.broadcast %cst_45 : f32 to vector<16x19xf32>
    %97 = tpu.concatenate %96, %93, %96 in 1 : vector<16x19xf32>, vector<16x324xf32>, vector<16x19xf32> -> vector<16x362xf32>
    %98 = vector.extract_strided_slice %97 {offsets = [0, 0], sizes = [16, 324], strides = [1, 1]} : vector<16x362xf32> to vector<16x324xf32>
    %99 = vector.extract_strided_slice %97 {offsets = [0, 1], sizes = [16, 324], strides = [1, 1]} : vector<16x362xf32> to vector<16x324xf32>
    %100 = vector.extract_strided_slice %97 {offsets = [0, 2], sizes = [16, 324], strides = [1, 1]} : vector<16x362xf32> to vector<16x324xf32>
    %101 = vector.extract_strided_slice %97 {offsets = [0, 18], sizes = [16, 324], strides = [1, 1]} : vector<16x362xf32> to vector<16x324xf32>
    %102 = vector.extract_strided_slice %97 {offsets = [0, 19], sizes = [16, 324], strides = [1, 1]} : vector<16x362xf32> to vector<16x324xf32>
    %103 = vector.extract_strided_slice %97 {offsets = [0, 20], sizes = [16, 324], strides = [1, 1]} : vector<16x362xf32> to vector<16x324xf32>
    %104 = vector.extract_strided_slice %97 {offsets = [0, 36], sizes = [16, 324], strides = [1, 1]} : vector<16x362xf32> to vector<16x324xf32>
    %105 = vector.extract_strided_slice %97 {offsets = [0, 37], sizes = [16, 324], strides = [1, 1]} : vector<16x362xf32> to vector<16x324xf32>
    %106 = vector.extract_strided_slice %97 {offsets = [0, 38], sizes = [16, 324], strides = [1, 1]} : vector<16x362xf32> to vector<16x324xf32>
    %107 = tpu.concatenate %98, %99, %100, %101, %102, %103, %104, %105, %106 in 0 : vector<16x324xf32>, vector<16x324xf32>, vector<16x324xf32>, vector<16x324xf32>, vector<16x324xf32>, vector<16x324xf32>, vector<16x324xf32>, vector<16x324xf32>, vector<16x324xf32> -> vector<144x324xf32>
    %cst_46 = arith.constant dense<0.000000e+00> : vector<8x324xf32>
    %108 = tpu.matmul %94, %107, %cst_46 {dimension_numbers = #tpu.dot_dimension_numbers<[1], [0], [0], [1], [0, 0, 1, 1], [], []>} : vector<8x144xf32>, vector<144x324xf32>, vector<8x324xf32> -> vector<8x324xf32>
    %109 = vector.broadcast %95 : vector<8x1xf32> to vector<8x324xf32>
    %110 = arith.addf %108, %109 : vector<8x324xf32>
    %cst_47 = arith.constant 0.000000e+00 : f32
    %111 = vector.broadcast %cst_47 : f32 to vector<8x324xf32>
    %112 = arith.maximumf %110, %111 : vector<8x324xf32>
    %113 = vector.broadcast %1 : vector<1x324xf32> to vector<8x324xf32>
    %114 = arith.mulf %112, %113 : vector<8x324xf32>
    %c0_48 = arith.constant 0 : index
    %c0_49 = arith.constant 0 : index
    %115 = vector.load %arg8[%c0_48, %c0_49] : memref<324x1156xf32, #tpu.memory_space<vmem>>, vector<324x1156xf32>
    %cst_50 = arith.constant dense<0.000000e+00> : vector<8x1156xf32>
    %116 = tpu.matmul %114, %115, %cst_50 {dimension_numbers = #tpu.dot_dimension_numbers<[1], [0], [0], [1], [0, 0, 1, 1], [], []>} : vector<8x324xf32>, vector<324x1156xf32>, vector<8x1156xf32> -> vector<8x1156xf32>
    %c0_51 = arith.constant 0 : index
    %c0_52 = arith.constant 0 : index
    %c0_53 = arith.constant 0 : index
    %117 = vector.load %arg3[%c0_51, %c0_52, %c0_53] : memref<1x8x1156xf32, #tpu.memory_space<vmem>>, vector<1x8x1156xf32>
    %118 = vector.shape_cast %117 : vector<1x8x1156xf32> to vector<8x1156xf32>
    %119 = arith.addf %116, %118 : vector<8x1156xf32>
    %c0_54 = arith.constant 0 : index
    %c0_55 = arith.constant 0 : index
    %120 = vector.load %arg19[%c0_54, %c0_55] : memref<8x72xf32, #tpu.memory_space<vmem>>, vector<8x72xf32>
    %c0_56 = arith.constant 0 : index
    %c0_57 = arith.constant 0 : index
    %121 = vector.load %arg20[%c0_56, %c0_57] : memref<8x1xf32, #tpu.memory_space<vmem>>, vector<8x1xf32>
    %cst_58 = arith.constant 0.000000e+00 : f32
    %122 = vector.broadcast %cst_58 : f32 to vector<8x35xf32>
    %123 = tpu.concatenate %122, %119, %122 in 1 : vector<8x35xf32>, vector<8x1156xf32>, vector<8x35xf32> -> vector<8x1226xf32>
    %124 = vector.extract_strided_slice %123 {offsets = [0, 0], sizes = [8, 1156], strides = [1, 1]} : vector<8x1226xf32> to vector<8x1156xf32>
    %125 = vector.extract_strided_slice %123 {offsets = [0, 1], sizes = [8, 1156], strides = [1, 1]} : vector<8x1226xf32> to vector<8x1156xf32>
    %126 = vector.extract_strided_slice %123 {offsets = [0, 2], sizes = [8, 1156], strides = [1, 1]} : vector<8x1226xf32> to vector<8x1156xf32>
    %127 = vector.extract_strided_slice %123 {offsets = [0, 34], sizes = [8, 1156], strides = [1, 1]} : vector<8x1226xf32> to vector<8x1156xf32>
    %128 = vector.extract_strided_slice %123 {offsets = [0, 35], sizes = [8, 1156], strides = [1, 1]} : vector<8x1226xf32> to vector<8x1156xf32>
    %129 = vector.extract_strided_slice %123 {offsets = [0, 36], sizes = [8, 1156], strides = [1, 1]} : vector<8x1226xf32> to vector<8x1156xf32>
    %130 = vector.extract_strided_slice %123 {offsets = [0, 68], sizes = [8, 1156], strides = [1, 1]} : vector<8x1226xf32> to vector<8x1156xf32>
    %131 = vector.extract_strided_slice %123 {offsets = [0, 69], sizes = [8, 1156], strides = [1, 1]} : vector<8x1226xf32> to vector<8x1156xf32>
    %132 = vector.extract_strided_slice %123 {offsets = [0, 70], sizes = [8, 1156], strides = [1, 1]} : vector<8x1226xf32> to vector<8x1156xf32>
    %133 = tpu.concatenate %124, %125, %126, %127, %128, %129, %130, %131, %132 in 0 : vector<8x1156xf32>, vector<8x1156xf32>, vector<8x1156xf32>, vector<8x1156xf32>, vector<8x1156xf32>, vector<8x1156xf32>, vector<8x1156xf32>, vector<8x1156xf32>, vector<8x1156xf32> -> vector<72x1156xf32>
    %cst_59 = arith.constant dense<0.000000e+00> : vector<8x1156xf32>
    %134 = tpu.matmul %120, %133, %cst_59 {dimension_numbers = #tpu.dot_dimension_numbers<[1], [0], [0], [1], [0, 0, 1, 1], [], []>} : vector<8x72xf32>, vector<72x1156xf32>, vector<8x1156xf32> -> vector<8x1156xf32>
    %135 = vector.broadcast %121 : vector<8x1xf32> to vector<8x1156xf32>
    %136 = arith.addf %134, %135 : vector<8x1156xf32>
    %cst_60 = arith.constant 0.000000e+00 : f32
    %137 = vector.broadcast %cst_60 : f32 to vector<8x1156xf32>
    %138 = arith.maximumf %136, %137 : vector<8x1156xf32>
    %139 = vector.broadcast %2 : vector<1x1156xf32> to vector<8x1156xf32>
    %140 = arith.mulf %138, %139 : vector<8x1156xf32>
    %c0_61 = arith.constant 0 : index
    %c0_62 = arith.constant 0 : index
    %141 = vector.load %arg21[%c0_61, %c0_62] : memref<3x72xf32, #tpu.memory_space<vmem>>, vector<3x72xf32>
    %c0_63 = arith.constant 0 : index
    %c0_64 = arith.constant 0 : index
    %142 = vector.load %arg22[%c0_63, %c0_64] : memref<3x1xf32, #tpu.memory_space<vmem>>, vector<3x1xf32>
    %cst_65 = arith.constant 0.000000e+00 : f32
    %143 = vector.broadcast %cst_65 : f32 to vector<8x35xf32>
    %144 = tpu.concatenate %143, %140, %143 in 1 : vector<8x35xf32>, vector<8x1156xf32>, vector<8x35xf32> -> vector<8x1226xf32>
    %145 = vector.extract_strided_slice %144 {offsets = [0, 0], sizes = [8, 1156], strides = [1, 1]} : vector<8x1226xf32> to vector<8x1156xf32>
    %146 = vector.extract_strided_slice %144 {offsets = [0, 1], sizes = [8, 1156], strides = [1, 1]} : vector<8x1226xf32> to vector<8x1156xf32>
    %147 = vector.extract_strided_slice %144 {offsets = [0, 2], sizes = [8, 1156], strides = [1, 1]} : vector<8x1226xf32> to vector<8x1156xf32>
    %148 = vector.extract_strided_slice %144 {offsets = [0, 34], sizes = [8, 1156], strides = [1, 1]} : vector<8x1226xf32> to vector<8x1156xf32>
    %149 = vector.extract_strided_slice %144 {offsets = [0, 35], sizes = [8, 1156], strides = [1, 1]} : vector<8x1226xf32> to vector<8x1156xf32>
    %150 = vector.extract_strided_slice %144 {offsets = [0, 36], sizes = [8, 1156], strides = [1, 1]} : vector<8x1226xf32> to vector<8x1156xf32>
    %151 = vector.extract_strided_slice %144 {offsets = [0, 68], sizes = [8, 1156], strides = [1, 1]} : vector<8x1226xf32> to vector<8x1156xf32>
    %152 = vector.extract_strided_slice %144 {offsets = [0, 69], sizes = [8, 1156], strides = [1, 1]} : vector<8x1226xf32> to vector<8x1156xf32>
    %153 = vector.extract_strided_slice %144 {offsets = [0, 70], sizes = [8, 1156], strides = [1, 1]} : vector<8x1226xf32> to vector<8x1156xf32>
    %154 = tpu.concatenate %145, %146, %147, %148, %149, %150, %151, %152, %153 in 0 : vector<8x1156xf32>, vector<8x1156xf32>, vector<8x1156xf32>, vector<8x1156xf32>, vector<8x1156xf32>, vector<8x1156xf32>, vector<8x1156xf32>, vector<8x1156xf32>, vector<8x1156xf32> -> vector<72x1156xf32>
    %cst_66 = arith.constant dense<0.000000e+00> : vector<3x1156xf32>
    %155 = tpu.matmul %141, %154, %cst_66 {dimension_numbers = #tpu.dot_dimension_numbers<[1], [0], [0], [1], [0, 0, 1, 1], [], []>} : vector<3x72xf32>, vector<72x1156xf32>, vector<3x1156xf32> -> vector<3x1156xf32>
    %156 = vector.broadcast %142 : vector<3x1xf32> to vector<3x1156xf32>
    %157 = arith.addf %155, %156 : vector<3x1156xf32>
    %158 = math.tanh %157 : vector<3x1156xf32>
    %159 = vector.broadcast %2 : vector<1x1156xf32> to vector<3x1156xf32>
    %160 = arith.mulf %158, %159 : vector<3x1156xf32>
    %c0_67 = arith.constant 0 : index
    %c0_68 = arith.constant 0 : index
    %c0_69 = arith.constant 0 : index
    %161 = vector.load %arg23[%c0_67, %c0_68, %c0_69] : memref<1x3x1156xf32, #tpu.memory_space<vmem>>, vector<1x3x1156xf32>
    %162 = vector.shape_cast %161 : vector<1x3x1156xf32> to vector<3x1156xf32>
    %163 = vector.shape_cast %160 : vector<3x1156xf32> to vector<1x3x1156xf32>
    tpu.vector_store %arg23[%c0_67, %c0_68, %c0_69], %163 {strides = array<i32>} : memref<1x3x1156xf32, #tpu.memory_space<vmem>>, vector<1x3x1156xf32>,
    return
  }
  func.func @transform_0(%arg0: i32) -> (i32, i32, i32) {
    %c0_i32 = arith.constant 0 : i32
    %c0_i32_0 = arith.constant 0 : i32
    %c0_i32_1 = arith.constant 0 : i32
    return %arg0, %c0_i32, %c0_i32_0 : i32, i32, i32
  }
  func.func @transform_1(%arg0: i32) -> (i32, i32, i32) {
    %c0_i32 = arith.constant 0 : i32
    %c0_i32_0 = arith.constant 0 : i32
    %c0_i32_1 = arith.constant 0 : i32
    return %arg0, %c0_i32, %c0_i32_0 : i32, i32, i32
  }
  func.func @transform_2(%arg0: i32) -> (i32, i32, i32) {
    %c0_i32 = arith.constant 0 : i32
    %c0_i32_0 = arith.constant 0 : i32
    %c0_i32_1 = arith.constant 0 : i32
    return %arg0, %c0_i32, %c0_i32_0 : i32, i32, i32
  }
  func.func @transform_3(%arg0: i32) -> (i32, i32) {
    %c0_i32 = arith.constant 0 : i32
    %c0_i32_0 = arith.constant 0 : i32
    %c0_i32_1 = arith.constant 0 : i32
    return %c0_i32, %c0_i32_0 : i32, i32
  }
  func.func @transform_4(%arg0: i32) -> (i32, i32) {
    %c0_i32 = arith.constant 0 : i32
    %c0_i32_0 = arith.constant 0 : i32
    %c0_i32_1 = arith.constant 0 : i32
    return %c0_i32, %c0_i32_0 : i32, i32
  }
  func.func @transform_5(%arg0: i32) -> (i32, i32) {
    %c0_i32 = arith.constant 0 : i32
    %c0_i32_0 = arith.constant 0 : i32
    %c0_i32_1 = arith.constant 0 : i32
    return %c0_i32, %c0_i32_0 : i32, i32
  }
  func.func @transform_6(%arg0: i32) -> (i32, i32) {
    %c0_i32 = arith.constant 0 : i32
    %c0_i32_0 = arith.constant 0 : i32
    %c0_i32_1 = arith.constant 0 : i32
    return %c0_i32, %c0_i32_0 : i32, i32
  }
  func.func @transform_7(%arg0: i32) -> (i32, i32) {
    %c0_i32 = arith.constant 0 : i32
    %c0_i32_0 = arith.constant 0 : i32
    %c0_i32_1 = arith.constant 0 : i32
    return %c0_i32, %c0_i32_0 : i32, i32
  }
  func.func @transform_8(%arg0: i32) -> (i32, i32) {
    %c0_i32 = arith.constant 0 : i32
    %c0_i32_0 = arith.constant 0 : i32
    %c0_i32_1 = arith.constant 0 : i32
    return %c0_i32, %c0_i32_0 : i32, i32
  }
  func.func @transform_9(%arg0: i32) -> (i32, i32) {
    %c0_i32 = arith.constant 0 : i32
    %c0_i32_0 = arith.constant 0 : i32
    %c0_i32_1 = arith.constant 0 : i32
    return %c0_i32, %c0_i32_0 : i32, i32
  }
  func.func @transform_10(%arg0: i32) -> (i32, i32) {
    %c0_i32 = arith.constant 0 : i32
    %c0_i32_0 = arith.constant 0 : i32
    %c0_i32_1 = arith.constant 0 : i32
    return %c0_i32, %c0_i32_0 : i32, i32
  }
  func.func @transform_11(%arg0: i32) -> (i32, i32) {
    %c0_i32 = arith.constant 0 : i32
    %c0_i32_0 = arith.constant 0 : i32
    %c0_i32_1 = arith.constant 0 : i32
    return %c0_i32, %c0_i32_0 : i32, i32
  }
  func.func @transform_12(%arg0: i32) -> (i32, i32) {
    %c0_i32 = arith.constant 0 : i32
    %c0_i32_0 = arith.constant 0 : i32
    %c0_i32_1 = arith.constant 0 : i32
    return %c0_i32, %c0_i32_0 : i32, i32
  }
  func.func @transform_13(%arg0: i32) -> (i32, i32) {
    %c0_i32 = arith.constant 0 : i32
    %c0_i32_0 = arith.constant 0 : i32
    %c0_i32_1 = arith.constant 0 : i32
    return %c0_i32, %c0_i32_0 : i32, i32
  }
  func.func @transform_14(%arg0: i32) -> (i32, i32) {
    %c0_i32 = arith.constant 0 : i32
    %c0_i32_0 = arith.constant 0 : i32
    %c0_i32_1 = arith.constant 0 : i32
    return %c0_i32, %c0_i32_0 : i32, i32
  }
  func.func @transform_15(%arg0: i32) -> (i32, i32) {
    %c0_i32 = arith.constant 0 : i32
    %c0_i32_0 = arith.constant 0 : i32
    %c0_i32_1 = arith.constant 0 : i32
    return %c0_i32, %c0_i32_0 : i32, i32
  }
  func.func @transform_16(%arg0: i32) -> (i32, i32) {
    %c0_i32 = arith.constant 0 : i32
    %c0_i32_0 = arith.constant 0 : i32
    %c0_i32_1 = arith.constant 0 : i32
    return %c0_i32, %c0_i32_0 : i32, i32
  }
  func.func @transform_17(%arg0: i32) -> (i32, i32) {
    %c0_i32 = arith.constant 0 : i32
    %c0_i32_0 = arith.constant 0 : i32
    %c0_i32_1 = arith.constant 0 : i32
    return %c0_i32, %c0_i32_0 : i32, i32
  }
  func.func @transform_18(%arg0: i32) -> (i32, i32) {
    %c0_i32 = arith.constant 0 : i32
    %c0_i32_0 = arith.constant 0 : i32
    %c0_i32_1 = arith.constant 0 : i32
    return %c0_i32, %c0_i32_0 : i32, i32
  }
  func.func @transform_19(%arg0: i32) -> (i32, i32) {
    %c0_i32 = arith.constant 0 : i32
    %c0_i32_0 = arith.constant 0 : i32
    %c0_i32_1 = arith.constant 0 : i32
    return %c0_i32, %c0_i32_0 : i32, i32
  }
  func.func @transform_20(%arg0: i32) -> (i32, i32) {
    %c0_i32 = arith.constant 0 : i32
    %c0_i32_0 = arith.constant 0 : i32
    %c0_i32_1 = arith.constant 0 : i32
    return %c0_i32, %c0_i32_0 : i32, i32
  }
  func.func @transform_21(%arg0: i32) -> (i32, i32) {
    %c0_i32 = arith.constant 0 : i32
    %c0_i32_0 = arith.constant 0 : i32
    %c0_i32_1 = arith.constant 0 : i32
    return %c0_i32, %c0_i32_0 : i32, i32
  }
  func.func @transform_22(%arg0: i32) -> (i32, i32, i32) {
    %c0_i32 = arith.constant 0 : i32
    %c0_i32_0 = arith.constant 0 : i32
    %c0_i32_1 = arith.constant 0 : i32
    return %arg0, %c0_i32, %c0_i32_0 : i32, i32, i32
  }
}

</mosaic_0001>

<llo_original>
// kernel: dec_cnn_forward.1
$region0: #{dec_cnn_forward.1}
  #allocation0 [shape = 'u32[]', space=smem, size = 0x4, offset = 0x4, fixed_abs, tag = 'smem constant byte address 0x4 - core index']
  #allocation1 [shape = 'u32[144,128]{1,0:T(1,128)}', space=vmem, size = 0x12000, scoped, tag = 'internal scratch']
  %s0 = inlined_call_operand.vmem [shape: f32[2,32,100], index: 0, kind: input, shape index: {}]
  %s1 = inlined_call_operand.vmem [shape: f32[2,16,324], index: 1, kind: input, shape index: {}]
  %s2 = inlined_call_operand.vmem [shape: f32[2,8,1156], index: 2, kind: input, shape index: {}]
  %s3 = inlined_call_operand.vmem [shape: f32[1,100], index: 3, kind: input, shape index: {}]
  %s4 = inlined_call_operand.vmem [shape: f32[1,324], index: 4, kind: input, shape index: {}]
  %s5 = inlined_call_operand.vmem [shape: f32[1,1156], index: 5, kind: input, shape index: {}]
  %s6 = inlined_call_operand.vmem [shape: f32[100,324], index: 6, kind: input, shape index: {}]
  %s7 = inlined_call_operand.vmem [shape: f32[324,1156], index: 7, kind: input, shape index: {}]
  %s8 = inlined_call_operand.vmem [shape: f32[32,288], index: 8, kind: input, shape index: {}]
  %s9 = inlined_call_operand.vmem [shape: f32[32,1], index: 9, kind: input, shape index: {}]
  %s10 = inlined_call_operand.vmem [shape: f32[32,288], index: 10, kind: input, shape index: {}]
  %s11 = inlined_call_operand.vmem [shape: f32[32,1], index: 11, kind: input, shape index: {}]
  %s12 = inlined_call_operand.vmem [shape: f32[16,288], index: 12, kind: input, shape index: {}]
  %s13 = inlined_call_operand.vmem [shape: f32[16,1], index: 13, kind: input, shape index: {}]
  %s14 = inlined_call_operand.vmem [shape: f32[16,144], index: 14, kind: input, shape index: {}]
  %s15 = inlined_call_operand.vmem [shape: f32[16,1], index: 15, kind: input, shape index: {}]
  %s16 = inlined_call_operand.vmem [shape: f32[8,144], index: 16, kind: input, shape index: {}]
  %s17 = inlined_call_operand.vmem [shape: f32[8,1], index: 17, kind: input, shape index: {}]
  %s18 = inlined_call_operand.vmem [shape: f32[8,72], index: 18, kind: input, shape index: {}]
  %s19 = inlined_call_operand.vmem [shape: f32[8,1], index: 19, kind: input, shape index: {}]
  %s20 = inlined_call_operand.vmem [shape: f32[3,72], index: 20, kind: input, shape index: {}]
  %s21 = inlined_call_operand.vmem [shape: f32[3,1], index: 21, kind: input, shape index: {}]
  %s22 = inlined_call_operand.vmem [shape: f32[2,3,1156], index: 22, kind: output, shape index: {}]
  %s23 = sld [smem:[#allocation0]]
  $region121: #{dec_cnn_forward.1} parent=0
    _
  %s25 = ssub.s32 1, %s23
  %s26 = scalar_select 0, %s25, %s23
  loop: start=0, step=1, limit=4
  $region2: #{dec_cnn_forward.1} parent=0 // loop_pre_header
    _
  $region3: #{dec_cnn_forward.1} parent=0 // loop_header
    %s28 = sphi 0, %s32
    %p29 = scmp.ge.s32.totalorder %s28, 4
    %s38 = sphi 0, %s40
    %s41 = sphi 0, %s38
    %s42 = sphi 0, %s41
    %s58 = sphi 0, %s42
    %s64 = sphi 0, %s66
    %s67 = sphi 0, %s64
    %s68 = sphi 0, %s67
    %s84 = sphi 0, %s68
    %s90 = sphi 0, %s92
    %s93 = sphi 0, %s90
    %s94 = sphi 0, %s93
    %s110 = sphi 0, %s94
    %s114 = sphi 0, %s114
    %s116 = sphi 0, %s114
    %s117 = sphi 0, %s116
    %s131 = sphi 0, %s117
    %s135 = sphi 0, %s135
    %s137 = sphi 0, %s135
    %s138 = sphi 0, %s137
    %s152 = sphi 0, %s138
    %s156 = sphi 0, %s156
    %s158 = sphi 0, %s156
    %s159 = sphi 0, %s158
    %s173 = sphi 0, %s159
    %s177 = sphi 0, %s177
    %s179 = sphi 0, %s177
    %s180 = sphi 0, %s179
    %s194 = sphi 0, %s180
    %s198 = sphi 0, %s198
    %s200 = sphi 0, %s198
    %s201 = sphi 0, %s200
    %s215 = sphi 0, %s201
    %s219 = sphi 0, %s219
    %s221 = sphi 0, %s219
    %s222 = sphi 0, %s221
    %s236 = sphi 0, %s222
    %s240 = sphi 0, %s240
    %s242 = sphi 0, %s240
    %s243 = sphi 0, %s242
    %s257 = sphi 0, %s243
    %s261 = sphi 0, %s261
    %s263 = sphi 0, %s261
    %s264 = sphi 0, %s263
    %s278 = sphi 0, %s264
    %s282 = sphi 0, %s282
    %s284 = sphi 0, %s282
    %s285 = sphi 0, %s284
    %s299 = sphi 0, %s285
    %s303 = sphi 0, %s303
    %s305 = sphi 0, %s303
    %s306 = sphi 0, %s305
    %s320 = sphi 0, %s306
    %s324 = sphi 0, %s324
    %s326 = sphi 0, %s324
    %s327 = sphi 0, %s326
    %s341 = sphi 0, %s327
    %s345 = sphi 0, %s345
    %s347 = sphi 0, %s345
    %s348 = sphi 0, %s347
    %s362 = sphi 0, %s348
    %s366 = sphi 0, %s366
    %s368 = sphi 0, %s366
    %s369 = sphi 0, %s368
    %s383 = sphi 0, %s369
    %s387 = sphi 0, %s387
    %s389 = sphi 0, %s387
    %s390 = sphi 0, %s389
    %s404 = sphi 0, %s390
    %s408 = sphi 0, %s408
    %s410 = sphi 0, %s408
    %s411 = sphi 0, %s410
    %s425 = sphi 0, %s411
    %s429 = sphi 0, %s429
    %s431 = sphi 0, %s429
    %s432 = sphi 0, %s431
    %s446 = sphi 0, %s432
    %s450 = sphi 0, %s450
    %s452 = sphi 0, %s450
    %s453 = sphi 0, %s452
    %s467 = sphi 0, %s453
    %s471 = sphi 0, %s471
    %s473 = sphi 0, %s471
    %s474 = sphi 0, %s473
    %s488 = sphi 0, %s474
    %s492 = sphi 0, %s492
    %s494 = sphi 0, %s492
    %s495 = sphi 0, %s494
    %s509 = sphi 0, %s495
    %s515 = sphi 0, %s517
    %s518 = sphi 0, %s515
    %s519 = sphi 0, %s518
    %s535 = sphi 0, %s519
  $region4: #{dec_cnn_forward.1} parent=0 // loop_header_branch
    %31 = sbr.rel (%p29) target = $region8
  $region5: #{dec_cnn_forward.1} parent=0 // loop_body
    %s33 = ssub.s32 %s28, 1
    %s34 = ssub.s32 %s28, 2
    %s35 = sadd.s32 %s28, 1
    %s36 = ssub.s32 %s28, %s35
    %p37 = scmp.eq.s32.totalorder %s36, 0
    %s39 = sadd.s32 %s38, 1
    %s40 = scalar_select %p37, %s38, %s39
    %p43 = pneg %p37
    %p44 = scmp.eq.s32.totalorder %s28, 1
    %p45 = por %p43, %p44
    %p46 = scmp.ne.s32.totalorder %s38, %s41
    %p47 = scmp.eq.s32.totalorder %s28, 0
    %p48 = por %p46, %p47
    %p49 = scmp.ne.s32.totalorder %s38, %s41
    %p50 = scmp.eq.s32.totalorder %s33, 1
    %p51 = por %p49, %p50
    %p52 = scmp.ne.s32.totalorder %s41, %s42
    %p53 = scmp.eq.s32.totalorder %s33, 0
    %p54 = por %p52, %p53
    %p55 = scmp.ne.s32.totalorder %s41, %s42
    %p56 = scmp.eq.s32.totalorder %s34, 1
    %p57 = por %p55, %p56
    %p59 = scmp.ne.s32.totalorder %s42, %s58
    %p60 = scmp.eq.s32.totalorder %s34, 0
    %p61 = por %p59, %p60
    %s62 = ssub.s32 %s28, %s35
    %p63 = scmp.eq.s32.totalorder %s62, 0
    %s65 = sadd.s32 %s64, 1
    %s66 = scalar_select %p63, %s64, %s65
    %p69 = pneg %p63
    %p70 = scmp.eq.s32.totalorder %s28, 1
    %p71 = por %p69, %p70
    %p72 = scmp.ne.s32.totalorder %s64, %s67
    %p73 = scmp.eq.s32.totalorder %s28, 0
    %p74 = por %p72, %p73
    %p75 = scmp.ne.s32.totalorder %s64, %s67
    %p76 = scmp.eq.s32.totalorder %s33, 1
    %p77 = por %p75, %p76
    %p78 = scmp.ne.s32.totalorder %s67, %s68
    %p79 = scmp.eq.s32.totalorder %s33, 0
    %p80 = por %p78, %p79
    %p81 = scmp.ne.s32.totalorder %s67, %s68
    %p82 = scmp.eq.s32.totalorder %s34, 1
    %p83 = por %p81, %p82
    %p85 = scmp.ne.s32.totalorder %s68, %s84
    %p86 = scmp.eq.s32.totalorder %s34, 0
    %p87 = por %p85, %p86
    %s88 = ssub.s32 %s28, %s35
    %p89 = scmp.eq.s32.totalorder %s88, 0
    %s91 = sadd.s32 %s90, 1
    %s92 = scalar_select %p89, %s90, %s91
    %p95 = pneg %p89
    %p96 = scmp.eq.s32.totalorder %s28, 1
    %p97 = por %p95, %p96
    %p98 = scmp.ne.s32.totalorder %s90, %s93
    %p99 = scmp.eq.s32.totalorder %s28, 0
    %p100 = por %p98, %p99
    %p101 = scmp.ne.s32.totalorder %s90, %s93
    %p102 = scmp.eq.s32.totalorder %s33, 1
    %p103 = por %p101, %p102
    %p104 = scmp.ne.s32.totalorder %s93, %s94
    %p105 = scmp.eq.s32.totalorder %s33, 0
    %p106 = por %p104, %p105
    %p107 = scmp.ne.s32.totalorder %s93, %s94
    %p108 = scmp.eq.s32.totalorder %s34, 1
    %p109 = por %p107, %p108
    %p111 = scmp.ne.s32.totalorder %s94, %s110
    %p112 = scmp.eq.s32.totalorder %s34, 0
    %p113 = por %p111, %p112
    %s115 = sadd.s32 %s114, 1
    %p118 = scmp.eq.s32.totalorder %s28, 1
    %p119 = scmp.ne.s32.totalorder %s114, %s116
    %p120 = scmp.eq.s32.totalorder %s28, 0
    %p121 = por %p119, %p120
    %p122 = scmp.ne.s32.totalorder %s114, %s116
    %p123 = scmp.eq.s32.totalorder %s33, 1
    %p124 = por %p122, %p123
    %p125 = scmp.ne.s32.totalorder %s116, %s117
    %p126 = scmp.eq.s32.totalorder %s33, 0
    %p127 = por %p125, %p126
    %p128 = scmp.ne.s32.totalorder %s116, %s117
    %p129 = scmp.eq.s32.totalorder %s34, 1
    %p130 = por %p128, %p129
    %p132 = scmp.ne.s32.totalorder %s117, %s131
    %p133 = scmp.eq.s32.totalorder %s34, 0
    %p134 = por %p132, %p133
    %s136 = sadd.s32 %s135, 1
    %p139 = scmp.eq.s32.totalorder %s28, 1
    %p140 = scmp.ne.s32.totalorder %s135, %s137
    %p141 = scmp.eq.s32.totalorder %s28, 0
    %p142 = por %p140, %p141
    %p143 = scmp.ne.s32.totalorder %s135, %s137
    %p144 = scmp.eq.s32.totalorder %s33, 1
    %p145 = por %p143, %p144
    %p146 = scmp.ne.s32.totalorder %s137, %s138
    %p147 = scmp.eq.s32.totalorder %s33, 0
    %p148 = por %p146, %p147
    %p149 = scmp.ne.s32.totalorder %s137, %s138
    %p150 = scmp.eq.s32.totalorder %s34, 1
    %p151 = por %p149, %p150
    %p153 = scmp.ne.s32.totalorder %s138, %s152
    %p154 = scmp.eq.s32.totalorder %s34, 0
    %p155 = por %p153, %p154
    %s157 = sadd.s32 %s156, 1
    %p160 = scmp.eq.s32.totalorder %s28, 1
    %p161 = scmp.ne.s32.totalorder %s156, %s158
    %p162 = scmp.eq.s32.totalorder %s28, 0
    %p163 = por %p161, %p162
    %p164 = scmp.ne.s32.totalorder %s156, %s158
    %p165 = scmp.eq.s32.totalorder %s33, 1
    %p166 = por %p164, %p165
    %p167 = scmp.ne.s32.totalorder %s158, %s159
    %p168 = scmp.eq.s32.totalorder %s33, 0
    %p169 = por %p167, %p168
    %p170 = scmp.ne.s32.totalorder %s158, %s159
    %p171 = scmp.eq.s32.totalorder %s34, 1
    %p172 = por %p170, %p171
    %p174 = scmp.ne.s32.totalorder %s159, %s173
    %p175 = scmp.eq.s32.totalorder %s34, 0
    %p176 = por %p174, %p175
    %s178 = sadd.s32 %s177, 1
    %p181 = scmp.eq.s32.totalorder %s28, 1
    %p182 = scmp.ne.s32.totalorder %s177, %s179
    %p183 = scmp.eq.s32.totalorder %s28, 0
    %p184 = por %p182, %p183
    %p185 = scmp.ne.s32.totalorder %s177, %s179
    %p186 = scmp.eq.s32.totalorder %s33, 1
    %p187 = por %p185, %p186
    %p188 = scmp.ne.s32.totalorder %s179, %s180
    %p189 = scmp.eq.s32.totalorder %s33, 0
    %p190 = por %p188, %p189
    %p191 = scmp.ne.s32.totalorder %s179, %s180
    %p192 = scmp.eq.s32.totalorder %s34, 1
    %p193 = por %p191, %p192
    %p195 = scmp.ne.s32.totalorder %s180, %s194
    %p196 = scmp.eq.s32.totalorder %s34, 0
    %p197 = por %p195, %p196
    %s199 = sadd.s32 %s198, 1
    %p202 = scmp.eq.s32.totalorder %s28, 1
    %p203 = scmp.ne.s32.totalorder %s198, %s200
    %p204 = scmp.eq.s32.totalorder %s28, 0
    %p205 = por %p203, %p204
    %p206 = scmp.ne.s32.totalorder %s198, %s200
    %p207 = scmp.eq.s32.totalorder %s33, 1
    %p208 = por %p206, %p207
    %p209 = scmp.ne.s32.totalorder %s200, %s201
    %p210 = scmp.eq.s32.totalorder %s33, 0
    %p211 = por %p209, %p210
    %p212 = scmp.ne.s32.totalorder %s200, %s201
    %p213 = scmp.eq.s32.totalorder %s34, 1
    %p214 = por %p212, %p213
    %p216 = scmp.ne.s32.totalorder %s201, %s215
    %p217 = scmp.eq.s32.totalorder %s34, 0
    %p218 = por %p216, %p217
    %s220 = sadd.s32 %s219, 1
    %p223 = scmp.eq.s32.totalorder %s28, 1
    %p224 = scmp.ne.s32.totalorder %s219, %s221
    %p225 = scmp.eq.s32.totalorder %s28, 0
    %p226 = por %p224, %p225
    %p227 = scmp.ne.s32.totalorder %s219, %s221
    %p228 = scmp.eq.s32.totalorder %s33, 1
    %p229 = por %p227, %p228
    %p230 = scmp.ne.s32.totalorder %s221, %s222
    %p231 = scmp.eq.s32.totalorder %s33, 0
    %p232 = por %p230, %p231
    %p233 = scmp.ne.s32.totalorder %s221, %s222
    %p234 = scmp.eq.s32.totalorder %s34, 1
    %p235 = por %p233, %p234
    %p237 = scmp.ne.s32.totalorder %s222, %s236
    %p238 = scmp.eq.s32.totalorder %s34, 0
    %p239 = por %p237, %p238
    %s241 = sadd.s32 %s240, 1
    %p244 = scmp.eq.s32.totalorder %s28, 1
    %p245 = scmp.ne.s32.totalorder %s240, %s242
    %p246 = scmp.eq.s32.totalorder %s28, 0
    %p247 = por %p245, %p246
    %p248 = scmp.ne.s32.totalorder %s240, %s242
    %p249 = scmp.eq.s32.totalorder %s33, 1
    %p250 = por %p248, %p249
    %p251 = scmp.ne.s32.totalorder %s242, %s243
    %p252 = scmp.eq.s32.totalorder %s33, 0
    %p253 = por %p251, %p252
    %p254 = scmp.ne.s32.totalorder %s242, %s243
    %p255 = scmp.eq.s32.totalorder %s34, 1
    %p256 = por %p254, %p255
    %p258 = scmp.ne.s32.totalorder %s243, %s257
    %p259 = scmp.eq.s32.totalorder %s34, 0
    %p260 = por %p258, %p259
    %s262 = sadd.s32 %s261, 1
    %p265 = scmp.eq.s32.totalorder %s28, 1
    %p266 = scmp.ne.s32.totalorder %s261, %s263
    %p267 = scmp.eq.s32.totalorder %s28, 0
    %p268 = por %p266, %p267
    %p269 = scmp.ne.s32.totalorder %s261, %s263
    %p270 = scmp.eq.s32.totalorder %s33, 1
    %p271 = por %p269, %p270
    %p272 = scmp.ne.s32.totalorder %s263, %s264
    %p273 = scmp.eq.s32.totalorder %s33, 0
    %p274 = por %p272, %p273
    %p275 = scmp.ne.s32.totalorder %s263, %s264
    %p276 = scmp.eq.s32.totalorder %s34, 1
    %p277 = por %p275, %p276
    %p279 = scmp.ne.s32.totalorder %s264, %s278
    %p280 = scmp.eq.s32.totalorder %s34, 0
    %p281 = por %p279, %p280
    %s283 = sadd.s32 %s282, 1
    %p286 = scmp.eq.s32.totalorder %s28, 1
    %p287 = scmp.ne.s32.totalorder %s282, %s284
    %p288 = scmp.eq.s32.totalorder %s28, 0
    %p289 = por %p287, %p288
    %p290 = scmp.ne.s32.totalorder %s282, %s284
    %p291 = scmp.eq.s32.totalorder %s33, 1
    %p292 = por %p290, %p291
    %p293 = scmp.ne.s32.totalorder %s284, %s285
    %p294 = scmp.eq.s32.totalorder %s33, 0
    %p295 = por %p293, %p294
    %p296 = scmp.ne.s32.totalorder %s284, %s285
    %p297 = scmp.eq.s32.totalorder %s34, 1
    %p298 = por %p296, %p297
    %p300 = scmp.ne.s32.totalorder %s285, %s299
    %p301 = scmp.eq.s32.totalorder %s34, 0
    %p302 = por %p300, %p301
    %s304 = sadd.s32 %s303, 1
    %p307 = scmp.eq.s32.totalorder %s28, 1
    %p308 = scmp.ne.s32.totalorder %s303, %s305
    %p309 = scmp.eq.s32.totalorder %s28, 0
    %p310 = por %p308, %p309
    %p311 = scmp.ne.s32.totalorder %s303, %s305
    %p312 = scmp.eq.s32.totalorder %s33, 1
    %p313 = por %p311, %p312
    %p314 = scmp.ne.s32.totalorder %s305, %s306
    %p315 = scmp.eq.s32.totalorder %s33, 0
    %p316 = por %p314, %p315
    %p317 = scmp.ne.s32.totalorder %s305, %s306
    %p318 = scmp.eq.s32.totalorder %s34, 1
    %p319 = por %p317, %p318
    %p321 = scmp.ne.s32.totalorder %s306, %s320
    %p322 = scmp.eq.s32.totalorder %s34, 0
    %p323 = por %p321, %p322
    %s325 = sadd.s32 %s324, 1
    %p328 = scmp.eq.s32.totalorder %s28, 1
    %p329 = scmp.ne.s32.totalorder %s324, %s326
    %p330 = scmp.eq.s32.totalorder %s28, 0
    %p331 = por %p329, %p330
    %p332 = scmp.ne.s32.totalorder %s324, %s326
    %p333 = scmp.eq.s32.totalorder %s33, 1
    %p334 = por %p332, %p333
    %p335 = scmp.ne.s32.totalorder %s326, %s327
    %p336 = scmp.eq.s32.totalorder %s33, 0
    %p337 = por %p335, %p336
    %p338 = scmp.ne.s32.totalorder %s326, %s327
    %p339 = scmp.eq.s32.totalorder %s34, 1
    %p340 = por %p338, %p339
    %p342 = scmp.ne.s32.totalorder %s327, %s341
    %p343 = scmp.eq.s32.totalorder %s34, 0
    %p344 = por %p342, %p343
    %s346 = sadd.s32 %s345, 1
    %p349 = scmp.eq.s32.totalorder %s28, 1
    %p350 = scmp.ne.s32.totalorder %s345, %s347
    %p351 = scmp.eq.s32.totalorder %s28, 0
    %p352 = por %p350, %p351
    %p353 = scmp.ne.s32.totalorder %s345, %s347
    %p354 = scmp.eq.s32.totalorder %s33, 1
    %p355 = por %p353, %p354
    %p356 = scmp.ne.s32.totalorder %s347, %s348
    %p357 = scmp.eq.s32.totalorder %s33, 0
    %p358 = por %p356, %p357
    %p359 = scmp.ne.s32.totalorder %s347, %s348
    %p360 = scmp.eq.s32.totalorder %s34, 1
    %p361 = por %p359, %p360
    %p363 = scmp.ne.s32.totalorder %s348, %s362
    %p364 = scmp.eq.s32.totalorder %s34, 0
    %p365 = por %p363, %p364
    %s367 = sadd.s32 %s366, 1
    %p370 = scmp.eq.s32.totalorder %s28, 1
    %p371 = scmp.ne.s32.totalorder %s366, %s368
    %p372 = scmp.eq.s32.totalorder %s28, 0
    %p373 = por %p371, %p372
    %p374 = scmp.ne.s32.totalorder %s366, %s368
    %p375 = scmp.eq.s32.totalorder %s33, 1
    %p376 = por %p374, %p375
    %p377 = scmp.ne.s32.totalorder %s368, %s369
    %p378 = scmp.eq.s32.totalorder %s33, 0
    %p379 = por %p377, %p378
    %p380 = scmp.ne.s32.totalorder %s368, %s369
    %p381 = scmp.eq.s32.totalorder %s34, 1
    %p382 = por %p380, %p381
    %p384 = scmp.ne.s32.totalorder %s369, %s383
    %p385 = scmp.eq.s32.totalorder %s34, 0
    %p386 = por %p384, %p385
    %s388 = sadd.s32 %s387, 1
    %p391 = scmp.eq.s32.totalorder %s28, 1
    %p392 = scmp.ne.s32.totalorder %s387, %s389
    %p393 = scmp.eq.s32.totalorder %s28, 0
    %p394 = por %p392, %p393
    %p395 = scmp.ne.s32.totalorder %s387, %s389
    %p396 = scmp.eq.s32.totalorder %s33, 1
    %p397 = por %p395, %p396
    %p398 = scmp.ne.s32.totalorder %s389, %s390
    %p399 = scmp.eq.s32.totalorder %s33, 0
    %p400 = por %p398, %p399
    %p401 = scmp.ne.s32.totalorder %s389, %s390
    %p402 = scmp.eq.s32.totalorder %s34, 1
    %p403 = por %p401, %p402
    %p405 = scmp.ne.s32.totalorder %s390, %s404
    %p406 = scmp.eq.s32.totalorder %s34, 0
    %p407 = por %p405, %p406
    %s409 = sadd.s32 %s408, 1
    %p412 = scmp.eq.s32.totalorder %s28, 1
    %p413 = scmp.ne.s32.totalorder %s408, %s410
    %p414 = scmp.eq.s32.totalorder %s28, 0
    %p415 = por %p413, %p414
    %p416 = scmp.ne.s32.totalorder %s408, %s410
    %p417 = scmp.eq.s32.totalorder %s33, 1
    %p418 = por %p416, %p417
    %p419 = scmp.ne.s32.totalorder %s410, %s411
    %p420 = scmp.eq.s32.totalorder %s33, 0
    %p421 = por %p419, %p420
    %p422 = scmp.ne.s32.totalorder %s410, %s411
    %p423 = scmp.eq.s32.totalorder %s34, 1
    %p424 = por %p422, %p423
    %p426 = scmp.ne.s32.totalorder %s411, %s425
    %p427 = scmp.eq.s32.totalorder %s34, 0
    %p428 = por %p426, %p427
    %s430 = sadd.s32 %s429, 1
    %p433 = scmp.eq.s32.totalorder %s28, 1
    %p434 = scmp.ne.s32.totalorder %s429, %s431
    %p435 = scmp.eq.s32.totalorder %s28, 0
    %p436 = por %p434, %p435
    %p437 = scmp.ne.s32.totalorder %s429, %s431
    %p438 = scmp.eq.s32.totalorder %s33, 1
    %p439 = por %p437, %p438
    %p440 = scmp.ne.s32.totalorder %s431, %s432
    %p441 = scmp.eq.s32.totalorder %s33, 0
    %p442 = por %p440, %p441
    %p443 = scmp.ne.s32.totalorder %s431, %s432
    %p444 = scmp.eq.s32.totalorder %s34, 1
    %p445 = por %p443, %p444
    %p447 = scmp.ne.s32.totalorder %s432, %s446
    %p448 = scmp.eq.s32.totalorder %s34, 0
    %p449 = por %p447, %p448
    %s451 = sadd.s32 %s450, 1
    %p454 = scmp.eq.s32.totalorder %s28, 1
    %p455 = scmp.ne.s32.totalorder %s450, %s452
    %p456 = scmp.eq.s32.totalorder %s28, 0
    %p457 = por %p455, %p456
    %p458 = scmp.ne.s32.totalorder %s450, %s452
    %p459 = scmp.eq.s32.totalorder %s33, 1
    %p460 = por %p458, %p459
    %p461 = scmp.ne.s32.totalorder %s452, %s453
    %p462 = scmp.eq.s32.totalorder %s33, 0
    %p463 = por %p461, %p462
    %p464 = scmp.ne.s32.totalorder %s452, %s453
    %p465 = scmp.eq.s32.totalorder %s34, 1
    %p466 = por %p464, %p465
    %p468 = scmp.ne.s32.totalorder %s453, %s467
    %p469 = scmp.eq.s32.totalorder %s34, 0
    %p470 = por %p468, %p469
    %s472 = sadd.s32 %s471, 1
    %p475 = scmp.eq.s32.totalorder %s28, 1
    %p476 = scmp.ne.s32.totalorder %s471, %s473
    %p477 = scmp.eq.s32.totalorder %s28, 0
    %p478 = por %p476, %p477
    %p479 = scmp.ne.s32.totalorder %s471, %s473
    %p480 = scmp.eq.s32.totalorder %s33, 1
    %p481 = por %p479, %p480
    %p482 = scmp.ne.s32.totalorder %s473, %s474
    %p483 = scmp.eq.s32.totalorder %s33, 0
    %p484 = por %p482, %p483
    %p485 = scmp.ne.s32.totalorder %s473, %s474
    %p486 = scmp.eq.s32.totalorder %s34, 1
    %p487 = por %p485, %p486
    %p489 = scmp.ne.s32.totalorder %s474, %s488
    %p490 = scmp.eq.s32.totalorder %s34, 0
    %p491 = por %p489, %p490
    %s493 = sadd.s32 %s492, 1
    %p496 = scmp.eq.s32.totalorder %s28, 1
    %p497 = scmp.ne.s32.totalorder %s492, %s494
    %p498 = scmp.eq.s32.totalorder %s28, 0
    %p499 = por %p497, %p498
    %p500 = scmp.ne.s32.totalorder %s492, %s494
    %p501 = scmp.eq.s32.totalorder %s33, 1
    %p502 = por %p500, %p501
    %p503 = scmp.ne.s32.totalorder %s494, %s495
    %p504 = scmp.eq.s32.totalorder %s33, 0
    %p505 = por %p503, %p504
    %p506 = scmp.ne.s32.totalorder %s494, %s495
    %p507 = scmp.eq.s32.totalorder %s34, 1
    %p508 = por %p506, %p507
    %p510 = scmp.ne.s32.totalorder %s495, %s509
    %p511 = scmp.eq.s32.totalorder %s34, 0
    %p512 = por %p510, %p511
    %s513 = ssub.s32 %s28, %s35
    %p514 = scmp.eq.s32.totalorder %s513, 0
    %s516 = sadd.s32 %s515, 1
    %s517 = scalar_select %p514, %s515, %s516
    %p520 = pneg %p514
    %p521 = scmp.eq.s32.totalorder %s28, 1
    %p522 = por %p520, %p521
    %p523 = scmp.ne.s32.totalorder %s515, %s518
    %p524 = scmp.eq.s32.totalorder %s28, 0
    %p525 = por %p523, %p524
    %p526 = scmp.ne.s32.totalorder %s515, %s518
    %p527 = scmp.eq.s32.totalorder %s33, 1
    %p528 = por %p526, %p527
    %p529 = scmp.ne.s32.totalorder %s518, %s519
    %p530 = scmp.eq.s32.totalorder %s33, 0
    %p531 = por %p529, %p530
    %p532 = scmp.ne.s32.totalorder %s518, %s519
    %p533 = scmp.eq.s32.totalorder %s34, 1
    %p534 = por %p532, %p533
    %p536 = scmp.ne.s32.totalorder %s519, %s535
    %p537 = scmp.eq.s32.totalorder %s34, 0
    %p538 = por %p536, %p537
    %p539 = scmp.le.s32.totalorder 1, %s28
    %p540 = scmp.lt.s32.totalorder %s28, 3
    %p541 = pnand %p539, %p540
    %p542 = pneg %p541
    // Predicated region
    $region9: #{dec_cnn_forward.1} parent=5 // pred_check
      _
    $region10: #{dec_cnn_forward.1} parent=5 // pred_check_branch
      %544 = sbr.rel (%p541) target = $region12
    $region11: #{dec_cnn_forward.1} parent=5 // pred_region
      %s545 = ssub.s32 %s28, 1
      // Predicated region
      $region13: #{dec_cnn_forward.1} parent=11 // pred_check
        %p546 = pneg %p127
      $region14: #{dec_cnn_forward.1} parent=11 // pred_check_branch
        %548 = sbr.rel (%p546) target = $region16
      $region15: #{dec_cnn_forward.1} parent=11 // pred_region
        _
      $region16: #{dec_cnn_forward.1} parent=11 // pred_fallthru
        _
      // Predicated region
      $region17: #{dec_cnn_forward.1} parent=11 // pred_check
        %p549 = pneg %p148
      $region18: #{dec_cnn_forward.1} parent=11 // pred_check_branch
        %551 = sbr.rel (%p549) target = $region20
      $region19: #{dec_cnn_forward.1} parent=11 // pred_region
        _
      $region20: #{dec_cnn_forward.1} parent=11 // pred_fallthru
        _
      // Predicated region
      $region21: #{dec_cnn_forward.1} parent=11 // pred_check
        %p552 = pneg %p169
      $region22: #{dec_cnn_forward.1} parent=11 // pred_check_branch
        %554 = sbr.rel (%p552) target = $region24
      $region23: #{dec_cnn_forward.1} parent=11 // pred_region
        _
      $region24: #{dec_cnn_forward.1} parent=11 // pred_fallthru
        _
      // Predicated region
      $region25: #{dec_cnn_forward.1} parent=11 // pred_check
        %p555 = pneg %p190
      $region26: #{dec_cnn_forward.1} parent=11 // pred_check_branch
        %557 = sbr.rel (%p555) target = $region28
      $region27: #{dec_cnn_forward.1} parent=11 // pred_region
        _
      $region28: #{dec_cnn_forward.1} parent=11 // pred_fallthru
        _
      // Predicated region
      $region29: #{dec_cnn_forward.1} parent=11 // pred_check
        %p558 = pneg %p211
      $region30: #{dec_cnn_forward.1} parent=11 // pred_check_branch
        %560 = sbr.rel (%p558) target = $region32
      $region31: #{dec_cnn_forward.1} parent=11 // pred_region
        _
      $region32: #{dec_cnn_forward.1} parent=11 // pred_fallthru
        _
      // Predicated region
      $region33: #{dec_cnn_forward.1} parent=11 // pred_check
        %p561 = pneg %p232
      $region34: #{dec_cnn_forward.1} parent=11 // pred_check_branch
        %563 = sbr.rel (%p561) target = $region36
      $region35: #{dec_cnn_forward.1} parent=11 // pred_region
        _
      $region36: #{dec_cnn_forward.1} parent=11 // pred_fallthru
        _
      // Predicated region
      $region37: #{dec_cnn_forward.1} parent=11 // pred_check
        %p564 = pneg %p253
      $region38: #{dec_cnn_forward.1} parent=11 // pred_check_branch
        %566 = sbr.rel (%p564) target = $region40
      $region39: #{dec_cnn_forward.1} parent=11 // pred_region
        _
      $region40: #{dec_cnn_forward.1} parent=11 // pred_fallthru
        _
      // Predicated region
      $region41: #{dec_cnn_forward.1} parent=11 // pred_check
        %p567 = pneg %p274
      $region42: #{dec_cnn_forward.1} parent=11 // pred_check_branch
        %569 = sbr.rel (%p567) target = $region44
      $region43: #{dec_cnn_forward.1} parent=11 // pred_region
        _
      $region44: #{dec_cnn_forward.1} parent=11 // pred_fallthru
        _
      // Predicated region
      $region45: #{dec_cnn_forward.1} parent=11 // pred_check
        %p570 = pneg %p295
      $region46: #{dec_cnn_forward.1} parent=11 // pred_check_branch
        %572 = sbr.rel (%p570) target = $region48
      $region47: #{dec_cnn_forward.1} parent=11 // pred_region
        _
      $region48: #{dec_cnn_forward.1} parent=11 // pred_fallthru
        _
      // Predicated region
      $region49: #{dec_cnn_forward.1} parent=11 // pred_check
        %p573 = pneg %p316
      $region50: #{dec_cnn_forward.1} parent=11 // pred_check_branch
        %575 = sbr.rel (%p573) target = $region52
      $region51: #{dec_cnn_forward.1} parent=11 // pred_region
        _
      $region52: #{dec_cnn_forward.1} parent=11 // pred_fallthru
        _
      // Predicated region
      $region53: #{dec_cnn_forward.1} parent=11 // pred_check
        %p576 = pneg %p337
      $region54: #{dec_cnn_forward.1} parent=11 // pred_check_branch
        %578 = sbr.rel (%p576) target = $region56
      $region55: #{dec_cnn_forward.1} parent=11 // pred_region
        _
      $region56: #{dec_cnn_forward.1} parent=11 // pred_fallthru
        _
      // Predicated region
      $region57: #{dec_cnn_forward.1} parent=11 // pred_check
        %p579 = pneg %p358
      $region58: #{dec_cnn_forward.1} parent=11 // pred_check_branch
        %581 = sbr.rel (%p579) target = $region60
      $region59: #{dec_cnn_forward.1} parent=11 // pred_region
        _
      $region60: #{dec_cnn_forward.1} parent=11 // pred_fallthru
        _
      // Predicated region
      $region61: #{dec_cnn_forward.1} parent=11 // pred_check
        %p582 = pneg %p379
      $region62: #{dec_cnn_forward.1} parent=11 // pred_check_branch
        %584 = sbr.rel (%p582) target = $region64
      $region63: #{dec_cnn_forward.1} parent=11 // pred_region
        _
      $region64: #{dec_cnn_forward.1} parent=11 // pred_fallthru
        _
      // Predicated region
      $region65: #{dec_cnn_forward.1} parent=11 // pred_check
        %p585 = pneg %p400
      $region66: #{dec_cnn_forward.1} parent=11 // pred_check_branch
        %587 = sbr.rel (%p585) target = $region68
      $region67: #{dec_cnn_forward.1} parent=11 // pred_region
        _
      $region68: #{dec_cnn_forward.1} parent=11 // pred_fallthru
        _
      // Predicated region
      $region69: #{dec_cnn_forward.1} parent=11 // pred_check
        %p588 = pneg %p421
      $region70: #{dec_cnn_forward.1} parent=11 // pred_check_branch
        %590 = sbr.rel (%p588) target = $region72
      $region71: #{dec_cnn_forward.1} parent=11 // pred_region
        _
      $region72: #{dec_cnn_forward.1} parent=11 // pred_fallthru
        _
      // Predicated region
      $region73: #{dec_cnn_forward.1} parent=11 // pred_check
        %p591 = pneg %p442
      $region74: #{dec_cnn_forward.1} parent=11 // pred_check_branch
        %593 = sbr.rel (%p591) target = $region76
      $region75: #{dec_cnn_forward.1} parent=11 // pred_region
        _
      $region76: #{dec_cnn_forward.1} parent=11 // pred_fallthru
        _
      // Predicated region
      $region77: #{dec_cnn_forward.1} parent=11 // pred_check
        %p594 = pneg %p463
      $region78: #{dec_cnn_forward.1} parent=11 // pred_check_branch
        %596 = sbr.rel (%p594) target = $region80
      $region79: #{dec_cnn_forward.1} parent=11 // pred_region
        _
      $region80: #{dec_cnn_forward.1} parent=11 // pred_fallthru
        _
      // Predicated region
      $region81: #{dec_cnn_forward.1} parent=11 // pred_check
        %p597 = pneg %p484
      $region82: #{dec_cnn_forward.1} parent=11 // pred_check_branch
        %599 = sbr.rel (%p597) target = $region84
      $region83: #{dec_cnn_forward.1} parent=11 // pred_region
        _
      $region84: #{dec_cnn_forward.1} parent=11 // pred_fallthru
        _
      // Predicated region
      $region85: #{dec_cnn_forward.1} parent=11 // pred_check
        %p600 = pneg %p505
      $region86: #{dec_cnn_forward.1} parent=11 // pred_check_branch
        %602 = sbr.rel (%p600) target = $region88
      $region87: #{dec_cnn_forward.1} parent=11 // pred_region
        _
      $region88: #{dec_cnn_forward.1} parent=11 // pred_fallthru
        _
    $region12: #{dec_cnn_forward.1} parent=5 // pred_fallthru
      _
    %p603 = scmp.lt.s32.totalorder %s28, 2
    // Predicated region
    $region89: #{dec_cnn_forward.1} parent=5 // pred_check
      %p604 = pneg %p603
    $region90: #{dec_cnn_forward.1} parent=5 // pred_check_branch
      %606 = sbr.rel (%p604) target = $region92
    $region91: #{dec_cnn_forward.1} parent=5 // pred_region
      // Predicated region
      $region93: #{dec_cnn_forward.1} parent=91 // pred_check
        %p607 = pneg %p48
      $region94: #{dec_cnn_forward.1} parent=91 // pred_check_branch
        %609 = sbr.rel (%p607) target = $region96
      $region95: #{dec_cnn_forward.1} parent=91 // pred_region
        %p610 = scmp.lt.s32.totalorder %s28, 1
        %s611 = scalar_select %p610, %s28, 1
        %s612 = smul.addr %s611, 4
        %s613 = smul.addr %s612, 8
        %s614 = scalar_lea.vmem %s0, %s613
      $region96: #{dec_cnn_forward.1} parent=91 // pred_fallthru
        _
      // Predicated region
      $region97: #{dec_cnn_forward.1} parent=91 // pred_check
        %p615 = pneg %p74
      $region98: #{dec_cnn_forward.1} parent=91 // pred_check_branch
        %617 = sbr.rel (%p615) target = $region100
      $region99: #{dec_cnn_forward.1} parent=91 // pred_region
        %p618 = scmp.lt.s32.totalorder %s28, 1
        %s619 = scalar_select %p618, %s28, 1
        %s620 = smul.addr %s619, 6
        %s621 = smul.addr %s620, 8
        %s622 = scalar_lea.vmem %s1, %s621
      $region100: #{dec_cnn_forward.1} parent=91 // pred_fallthru
        _
      // Predicated region
      $region101: #{dec_cnn_forward.1} parent=91 // pred_check
        %p623 = pneg %p100
      $region102: #{dec_cnn_forward.1} parent=91 // pred_check_branch
        %625 = sbr.rel (%p623) target = $region104
      $region103: #{dec_cnn_forward.1} parent=91 // pred_region
        %p626 = scmp.lt.s32.totalorder %s28, 1
        %s627 = scalar_select %p626, %s28, 1
        %s628 = smul.addr %s627, 10
        %s629 = smul.addr %s628, 8
        %s630 = scalar_lea.vmem %s2, %s629
      $region104: #{dec_cnn_forward.1} parent=91 // pred_fallthru
        _
    $region92: #{dec_cnn_forward.1} parent=5 // pred_fallthru
      _
    %p631 = scmp.le.s32.totalorder 1, %s28
    %p632 = scmp.lt.s32.totalorder %s28, 3
    %p633 = pnand %p631, %p632
    %p634 = pneg %p633
    // Predicated region
    $region105: #{dec_cnn_forward.1} parent=5 // pred_check
      _
    $region106: #{dec_cnn_forward.1} parent=5 // pred_check_branch
      %636 = sbr.rel (%p633) target = $region108
    $region107: #{dec_cnn_forward.1} parent=5 // pred_region
      %s637 = ssub.s32 %s28, 1
      %p638 = scmp.lt.s32.totalorder %s33, 1
      %s639 = scalar_select %p638, %s33, 1
      %s640 = smul.addr %s639, 4
      %s641 = smul.addr %s640, 8
      %s642 = scalar_lea.vmem %s0, %s641
      %p643 = pneg %p54
      %p644 = pneg %p51
      %p645 = scmp.lt.s32.totalorder %s33, 1
      %s646 = scalar_select %p645, %s33, 1
      %s647 = smul.addr %s646, 6
      %s648 = smul.addr %s647, 8
      %s649 = scalar_lea.vmem %s1, %s648
      %p650 = pneg %p80
      %p651 = pneg %p77
      %p652 = scmp.lt.s32.totalorder %s33, 1
      %s653 = scalar_select %p652, %s33, 1
      %s654 = smul.addr %s653, 10
      %s655 = smul.addr %s654, 8
      %s656 = scalar_lea.vmem %s2, %s655
      %p657 = pneg %p106
      %p658 = pneg %p103
      %p659 = pneg %p127
      %p660 = pneg %p124
      %p661 = pneg %p148
      %p662 = pneg %p145
      %p663 = pneg %p169
      %p664 = pneg %p166
      %p665 = pneg %p190
      %p666 = pneg %p187
      %p667 = pneg %p211
      %p668 = pneg %p208
      %p669 = pneg %p232
      %p670 = pneg %p229
      %p671 = pneg %p253
      %p672 = pneg %p250
      %p673 = pneg %p274
      %p674 = pneg %p271
      %p675 = pneg %p295
      %p676 = pneg %p292
      %p677 = pneg %p316
      %p678 = pneg %p313
      %p679 = pneg %p337
      %p680 = pneg %p334
      %p681 = pneg %p358
      %p682 = pneg %p355
      %p683 = pneg %p379
      %p684 = pneg %p376
      %p685 = pneg %p400
      %p686 = pneg %p397
      %p687 = pneg %p421
      %p688 = pneg %p418
      %p689 = pneg %p442
      %p690 = pneg %p439
      %p691 = pneg %p463
      %p692 = pneg %p460
      %p693 = pneg %p484
      %p694 = pneg %p481
      %p695 = pneg %p505
      %p696 = pneg %p502
      %p697 = pneg %p531
      %p698 = pneg %p528
      %p699 = scmp.lt.s32.totalorder %s33, 1
      %s700 = scalar_select %p699, %s33, 1
      %s701 = smul.addr %s700, 10
      %s702 = smul.addr %s701, 4
      %s703 = scalar_lea.vmem %s22, %s702
      %p704 = scmp.lt.s32.totalorder %s33, 1
      %s705 = scalar_select %p704, %s33, 1
      %s706 = smul.addr %s705, 4
      %s707 = smul.addr %s706, 8
      %s708 = scalar_lea.vmem %s0, %s707
      %p709 = scmp.lt.s32.totalorder %s33, 1
      %s710 = scalar_select %p709, %s33, 1
      %s711 = smul.addr %s710, 6
      %s712 = smul.addr %s711, 8
      %s713 = scalar_lea.vmem %s1, %s712
      %p714 = scmp.lt.s32.totalorder %s33, 1
      %s715 = scalar_select %p714, %s33, 1
      %s716 = smul.addr %s715, 10
      %s717 = smul.addr %s716, 8
      %s718 = scalar_lea.vmem %s2, %s717
      %p719 = scmp.lt.s32.totalorder %s33, 1
      %s720 = scalar_select %p719, %s33, 1
      %s721 = smul.addr %s720, 10
      %s722 = smul.addr %s721, 4
      %s723 = scalar_lea.vmem %s22, %s722
      %v724 = vld [vmem:[%s3] sm:$0x1]
      %v725 = vld [vmem:[%s4] sm:$0x7]
      %v726 = vld [vmem:[%s5] sm:$0xff]
      %v727 = vld [vmem:[%s5 + $0x8] sm:$0x3]
      %v728 = vld [vmem:[%s708] sm:$0xff]
      %v729 = vld [vmem:[%s708 + $0x8] sm:$0xff]
      %v730 = vld [vmem:[%s708 + $0x10] sm:$0xff]
      %v731 = vld [vmem:[%s708 + $0x18] sm:$0xff]
      %v732 = vld [vmem:[%s8] sm:$0xff]
      %v733 = vld [vmem:[%s8 + $0x8] sm:$0xff]
      %v734 = vld [vmem:[%s8 + $0x10] sm:$0xff]
      %v735 = vld [vmem:[%s8 + $0x18] sm:$0xff]
      %v736 = vld [vmem:[%s8 + $0x20] sm:$0xff]
      %v737 = vld [vmem:[%s8 + $0x28] sm:$0xff]
      %v738 = vld [vmem:[%s8 + $0x30] sm:$0xff]
      %v739 = vld [vmem:[%s8 + $0x38] sm:$0xff]
      %v740 = vld [vmem:[%s8 + $0x40] sm:$0xff]
      %v741 = vld [vmem:[%s8 + $0x48] sm:$0xff]
      %v742 = vld [vmem:[%s8 + $0x50] sm:$0xff]
      %v743 = vld [vmem:[%s8 + $0x58] sm:$0xff]
      %v744 = vld [vmem:[%s9] sm:$0xff]
      %v745 = vld [vmem:[%s9 + $0x8] sm:$0xff]
      %v746 = vld [vmem:[%s9 + $0x10] sm:$0xff]
      %v747 = vld [vmem:[%s9 + $0x18] sm:$0xff]
      %752 = vrot.lane.b32.xlu0 %v728, 11
      %v753 = vpop.permute.xlu0 %752
      %754 = vrot.lane.b32.xlu0 %v729, 11
      %v755 = vpop.permute.xlu0 %754
      %756 = vrot.lane.b32.xlu0 %v730, 11
      %v757 = vpop.permute.xlu0 %756
      %758 = vrot.lane.b32.xlu0 %v731, 11
      %v759 = vpop.permute.xlu0 %758
      %vm764 = vcmask 89088
      %v765 = vsel %vm764, 0.0, %v753
      %v766 = vsel %vm764, 0.0, %v755
      %v767 = vsel %vm764, 0.0, %v757
      %v768 = vsel %vm764, 0.0, %v759
      %vm769 = vcmask 908288
      %v770 = vsel %vm769, %v765, 0.0
      %v771 = vsel %vm769, %v766, 0.0
      %v772 = vsel %vm769, %v767, 0.0
      %v773 = vsel %vm769, %v768, 0.0
      %778 = vrot.lane.b32.xlu0 %v770, 127
      %v779 = vpop.permute.xlu0 %778
      %780 = vrot.lane.b32.xlu0 %v771, 127
      %v781 = vpop.permute.xlu0 %780
      %782 = vrot.lane.b32.xlu0 %v772, 127
      %v783 = vpop.permute.xlu0 %782
      %784 = vrot.lane.b32.xlu0 %v773, 127
      %v785 = vpop.permute.xlu0 %784
      %790 = vrot.lane.b32.xlu0 %v770, 126
      %v791 = vpop.permute.xlu0 %790
      %792 = vrot.lane.b32.xlu0 %v771, 126
      %v793 = vpop.permute.xlu0 %792
      %794 = vrot.lane.b32.xlu0 %v772, 126
      %v795 = vpop.permute.xlu0 %794
      %796 = vrot.lane.b32.xlu0 %v773, 126
      %v797 = vpop.permute.xlu0 %796
      %802 = vrot.lane.b32.xlu0 %v770, 118
      %v803 = vpop.permute.xlu0 %802
      %804 = vrot.lane.b32.xlu0 %v771, 118
      %v805 = vpop.permute.xlu0 %804
      %806 = vrot.lane.b32.xlu0 %v772, 118
      %v807 = vpop.permute.xlu0 %806
      %808 = vrot.lane.b32.xlu0 %v773, 118
      %v809 = vpop.permute.xlu0 %808
      %814 = vrot.lane.b32.xlu0 %v770, 117
      %v815 = vpop.permute.xlu0 %814
      %816 = vrot.lane.b32.xlu0 %v771, 117
      %v817 = vpop.permute.xlu0 %816
      %818 = vrot.lane.b32.xlu0 %v772, 117
      %v819 = vpop.permute.xlu0 %818
      %820 = vrot.lane.b32.xlu0 %v773, 117
      %v821 = vpop.permute.xlu0 %820
      %826 = vrot.lane.b32.xlu0 %v770, 116
      %v827 = vpop.permute.xlu0 %826
      %828 = vrot.lane.b32.xlu0 %v771, 116
      %v829 = vpop.permute.xlu0 %828
      %830 = vrot.lane.b32.xlu0 %v772, 116
      %v831 = vpop.permute.xlu0 %830
      %832 = vrot.lane.b32.xlu0 %v773, 116
      %v833 = vpop.permute.xlu0 %832
      %838 = vrot.lane.b32.xlu0 %v770, 108
      %v839 = vpop.permute.xlu0 %838
      %840 = vrot.lane.b32.xlu0 %v771, 108
      %v841 = vpop.permute.xlu0 %840
      %842 = vrot.lane.b32.xlu0 %v772, 108
      %v843 = vpop.permute.xlu0 %842
      %844 = vrot.lane.b32.xlu0 %v773, 108
      %v845 = vpop.permute.xlu0 %844
      %850 = vrot.lane.b32.xlu0 %v770, 107
      %v851 = vpop.permute.xlu0 %850
      %852 = vrot.lane.b32.xlu0 %v771, 107
      %v853 = vpop.permute.xlu0 %852
      %854 = vrot.lane.b32.xlu0 %v772, 107
      %v855 = vpop.permute.xlu0 %854
      %856 = vrot.lane.b32.xlu0 %v773, 107
      %v857 = vpop.permute.xlu0 %856
      %862 = vrot.lane.b32.xlu0 %v770, 106
      %v863 = vpop.permute.xlu0 %862
      %864 = vrot.lane.b32.xlu0 %v771, 106
      %v865 = vpop.permute.xlu0 %864
      %866 = vrot.lane.b32.xlu0 %v772, 106
      %v867 = vpop.permute.xlu0 %866
      %868 = vrot.lane.b32.xlu0 %v773, 106
      %v869 = vpop.permute.xlu0 %868
      %875 = vset.pattern.permute.xlu0 0
      %876 = vperm.xlu0 %875, %v744
      %v877 = vpop.permute.xlu0 %876
      %880 = vset.pattern.permute.xlu0 0
      %881 = vperm.xlu0 %880, %v745
      %v882 = vpop.permute.xlu0 %881
      %885 = vset.pattern.permute.xlu0 0
      %886 = vperm.xlu0 %885, %v746
      %v887 = vpop.permute.xlu0 %886
      %890 = vset.pattern.permute.xlu0 0
      %891 = vperm.xlu0 %890, %v747
      %v892 = vpop.permute.xlu0 %891
      %vm894 = vcmask 261120
      %v896 = vsel %vm894, %v734, 0
      %v899 = vsel %vm894, %v737, 0
      %v902 = vsel %vm894, %v740, 0
      %v905 = vsel %vm894, %v743, 0
      %907 = vmatprep.subr.mxu0 0.0
      %908 = vmatpush1.msra.mxu0 %v770
      %909 = vmatprep.subr.mxu0 0.0
      %910 = vmatpush1.msra.mxu0 %v771
      %911 = vmatprep.subr.mxu0 0.0
      %912 = vmatpush1.msra.mxu0 %v772
      %913 = vmatprep.subr.mxu0 0.0
      %914 = vmatpush1.msra.mxu0 %v773
      %915 = vmatprep.subr.mxu0 0.0
      %916 = vmatpush1.msra.mxu0 %v779
      %917 = vmatprep.subr.mxu0 0.0
      %918 = vmatpush1.msra.mxu0 %v781
      %919 = vmatprep.subr.mxu0 0.0
      %920 = vmatpush1.msra.mxu0 %v783
      %921 = vmatprep.subr.mxu0 0.0
      %922 = vmatpush1.msra.mxu0 %v785
      %923 = vmatprep.subr.mxu0 0.0
      %924 = vmatpush1.msra.mxu0 %v791
      %925 = vmatprep.subr.mxu0 0.0
      %926 = vmatpush1.msra.mxu0 %v793
      %927 = vmatprep.subr.mxu0 0.0
      %928 = vmatpush1.msra.mxu0 %v795
      %929 = vmatprep.subr.mxu0 0.0
      %930 = vmatpush1.msra.mxu0 %v797
      %931 = vmatprep.subr.mxu0 0.0
      %932 = vmatpush1.msra.mxu0 %v803
      %933 = vmatprep.subr.mxu0 0.0
      %934 = vmatpush1.msra.mxu0 %v805
      %935 = vmatprep.subr.mxu0 0.0
      %936 = vmatpush1.msra.mxu0 %v807
      %937 = vmatprep.subr.mxu0 0.0
      %938 = vmatpush1.msra.mxu0 %v809
      %939 = vmatprep.subr.mxu0 0.0
      %940 = vmatpush1.msra.mxu0 %v815
      %941 = vmatprep.subr.mxu0 0.0
      %942 = vmatpush1.msra.mxu0 %v817
      %943 = vmatprep.subr.mxu0 0.0
      %944 = vmatpush1.msra.mxu0 %v819
      %945 = vmatprep.subr.mxu0 0.0
      %946 = vmatpush1.msra.mxu0 %v821
      %947 = vmatprep.subr.mxu0 0.0
      %948 = vmatpush1.msra.mxu0 %v827
      %949 = vmatprep.subr.mxu0 0.0
      %950 = vmatpush1.msra.mxu0 %v829
      %951 = vmatprep.subr.mxu0 0.0
      %952 = vmatpush1.msra.mxu0 %v831
      %953 = vmatprep.subr.mxu0 0.0
      %954 = vmatpush1.msra.mxu0 %v833
      %955 = vmatprep.subr.mxu0 0.0
      %956 = vmatpush1.msra.mxu0 %v839
      %957 = vmatprep.subr.mxu0 0.0
      %958 = vmatpush1.msra.mxu0 %v841
      %959 = vmatprep.subr.mxu0 0.0
      %960 = vmatpush1.msra.mxu0 %v843
      %961 = vmatprep.subr.mxu0 0.0
      %962 = vmatpush1.msra.mxu0 %v845
      %963 = vmatprep.subr.mxu0 0.0
      %964 = vmatpush1.msra.mxu0 %v851
      %965 = vmatprep.subr.mxu0 0.0
      %966 = vmatpush1.msra.mxu0 %v853
      %967 = vmatprep.subr.mxu0 0.0
      %968 = vmatpush1.msra.mxu0 %v855
      %969 = vmatprep.subr.mxu0 0.0
      %970 = vmatpush1.msra.mxu0 %v857
      %971 = vmatprep.mubr.f32.mxu0 %v733
      %972 = vmatmul.mubr.f32.gmra.mrb[0].mxu0 %v732
      %v973 = vpop.f32.mrb[0].mxu0
      %v974 = vadd.f32 %v877, %v973
      %v975 = vpop.f32.mrb[0].mxu0
      %976 = vmatprep.mubr.f32.mxu0 %v736
      %977 = vmatmul.mubr.f32.gmra.mrb[0].mxu0 %v735
      %v978 = vpop.f32.mrb[0].mxu0
      %v979 = vadd.f32 %v882, %v978
      %v980 = vpop.f32.mrb[0].mxu0
      %981 = vmatprep.mubr.f32.mxu0 %v739
      %982 = vmatmul.mubr.f32.gmra.mrb[0].mxu0 %v738
      %v983 = vpop.f32.mrb[0].mxu0
      %v984 = vadd.f32 %v887, %v983
      %v985 = vpop.f32.mrb[0].mxu0
      %986 = vmatprep.mubr.f32.mxu0 %v742
      %987 = vmatmul.mubr.f32.gmra.mrb[0].mxu0 %v741
      %v988 = vpop.f32.mrb[0].mxu0
      %v989 = vadd.f32 %v892, %v988
      %v990 = vpop.f32.mrb[0].mxu0
      %991 = vdwg.mxu0
      %992 = vmatprep.subr.mxu0 0.0
      %993 = vmatpush1.msra.mxu0 %v863
      %994 = vmatprep.subr.mxu0 0.0
      %995 = vmatpush1.msra.mxu0 %v865
      %996 = vmatprep.subr.mxu0 0.0
      %997 = vmatpush1.msra.mxu0 %v867
      %998 = vmatprep.subr.mxu0 0.0
      %999 = vmatpush1.msra.mxu0 %v869
      %1000 = vmatprep.subr.mxu0 0.0
      %1001 = vmatpush1.msra.mxu0 0.0
      %1002 = vmatprep.subr.mxu0 0.0
      %1003 = vmatpush1.msra.mxu0 0.0
      %1004 = vmatprep.subr.mxu0 0.0
      %1005 = vmatpush1.msra.mxu0 0.0
      %1006 = vmatprep.subr.mxu0 0.0
      %1007 = vmatpush1.msra.mxu0 0.0
      %1008 = vmatprep.subr.mxu0 0.0
      %1009 = vmatpush1.msra.mxu0 0.0
      %1010 = vmatprep.subr.mxu0 0.0
      %1011 = vmatpush1.msra.mxu0 0.0
      %1012 = vmatprep.subr.mxu0 0.0
      %1013 = vmatpush1.msra.mxu0 0.0
      %1014 = vmatprep.subr.mxu0 0.0
      %1015 = vmatpush1.msra.mxu0 0.0
      %1016 = vmatprep.subr.mxu0 0.0
      %1017 = vmatpush1.msra.mxu0 0.0
      %1018 = vmatprep.subr.mxu0 0.0
      %1019 = vmatpush1.msra.mxu0 0.0
      %1020 = vmatprep.subr.mxu0 0.0
      %1021 = vmatpush1.msra.mxu0 0.0
      %1022 = vmatprep.subr.mxu0 0.0
      %1023 = vmatpush1.msra.mxu0 0.0
      %1024 = vmatprep.subr.mxu0 0.0
      %1025 = vmatpush1.msra.mxu0 0.0
      %1026 = vmatprep.subr.mxu0 0.0
      %1027 = vmatpush1.msra.mxu0 0.0
      %1028 = vmatprep.subr.mxu0 0.0
      %1029 = vmatpush1.msra.mxu0 0.0
      %1030 = vmatprep.subr.mxu0 0.0
      %1031 = vmatpush1.msra.mxu0 0.0
      %1032 = vmatprep.subr.mxu0 0.0
      %1033 = vmatpush1.msra.mxu0 0.0
      %1034 = vmatprep.subr.mxu0 0.0
      %1035 = vmatpush1.msra.mxu0 0.0
      %1036 = vmatprep.subr.mxu0 0.0
      %1037 = vmatpush1.msra.mxu0 0.0
      %1038 = vmatprep.subr.mxu0 0.0
      %1039 = vmatpush1.msra.mxu0 0.0
      %1040 = vmatprep.subr.mxu0 0.0
      %1041 = vmatpush1.msra.mxu0 0.0
      %1042 = vmatprep.subr.mxu0 0.0
      %1043 = vmatpush1.msra.mxu0 0.0
      %1044 = vmatprep.subr.mxu0 0.0
      %1045 = vmatpush1.msra.mxu0 0.0
      %1046 = vmatprep.subr.mxu0 0.0
      %1047 = vmatpush1.msra.mxu0 0.0
      %1048 = vmatprep.subr.mxu0 0.0
      %1049 = vmatpush1.msra.mxu0 0.0
      %1050 = vmatprep.subr.mxu0 0.0
      %1051 = vmatpush1.msra.mxu0 0.0
      %1052 = vmatprep.subr.mxu0 0.0
      %1053 = vmatpush1.msra.mxu0 0.0
      %1054 = vmatprep.subr.mxu0 0.0
      %1055 = vmatpush1.msra.mxu0 0.0
      %1056 = vmatprep.mubr.f32.mxu0 0.0
      %1057 = vmatmul.mubr.f32.gmra.mrb[0].mxu0 %v896
      %v1058 = vpop.f32.mrb[0].mxu0
      %v1059 = vadd.f32 %v974, %v1058
      %v1060 = vpop.f32.mrb[0].mxu0
      %1061 = vmatprep.mubr.f32.mxu0 0.0
      %1062 = vmatmul.mubr.f32.gmra.mrb[0].mxu0 %v899
      %v1063 = vpop.f32.mrb[0].mxu0
      %v1064 = vadd.f32 %v979, %v1063
      %v1065 = vpop.f32.mrb[0].mxu0
      %1066 = vmatprep.mubr.f32.mxu0 0.0
      %1067 = vmatmul.mubr.f32.gmra.mrb[0].mxu0 %v902
      %v1068 = vpop.f32.mrb[0].mxu0
      %v1069 = vadd.f32 %v984, %v1068
      %v1070 = vpop.f32.mrb[0].mxu0
      %1071 = vmatprep.mubr.f32.mxu0 0.0
      %1072 = vmatmul.mubr.f32.gmra.mrb[0].mxu0 %v905
      %v1073 = vpop.f32.mrb[0].mxu0
      %v1074 = vadd.f32 %v989, %v1073
      %v1075 = vpop.f32.mrb[0].mxu0
      %1076 = vdwg.mxu0
      %v1077 = vmax.f32 %v1059, 0.0
      %v1078 = vmax.f32 %v1064, 0.0
      %v1079 = vmax.f32 %v1069, 0.0
      %v1080 = vmax.f32 %v1074, 0.0
      %v1082 = vlaneseq
      %v1083 = vshrl.u32 %v1082, 7
      %v1084 = vsub.s32 0, %v1083
      %v1085 = vrot.slane %v724, %v1084
      %v1087 = vmul.f32 %v1077, %v1085
      %v1088 = vmul.f32 %v1078, %v1085
      %v1089 = vmul.f32 %v1079, %v1085
      %v1090 = vmul.f32 %v1080, %v1085
      %v1091 = vld [vmem:[%s10] sm:$0xff]
      %v1092 = vld [vmem:[%s10 + $0x8] sm:$0xff]
      %v1093 = vld [vmem:[%s10 + $0x10] sm:$0xff]
      %v1094 = vld [vmem:[%s10 + $0x18] sm:$0xff]
      %v1095 = vld [vmem:[%s10 + $0x20] sm:$0xff]
      %v1096 = vld [vmem:[%s10 + $0x28] sm:$0xff]
      %v1097 = vld [vmem:[%s10 + $0x30] sm:$0xff]
      %v1098 = vld [vmem:[%s10 + $0x38] sm:$0xff]
      %v1099 = vld [vmem:[%s10 + $0x40] sm:$0xff]
      %v1100 = vld [vmem:[%s10 + $0x48] sm:$0xff]
      %v1101 = vld [vmem:[%s10 + $0x50] sm:$0xff]
      %v1102 = vld [vmem:[%s10 + $0x58] sm:$0xff]
      %v1103 = vld [vmem:[%s11] sm:$0xff]
      %v1104 = vld [vmem:[%s11 + $0x8] sm:$0xff]
      %v1105 = vld [vmem:[%s11 + $0x10] sm:$0xff]
      %v1106 = vld [vmem:[%s11 + $0x18] sm:$0xff]
      %1111 = vrot.lane.b32.xlu0 %v1087, 11
      %v1112 = vpop.permute.xlu0 %1111
      %1113 = vrot.lane.b32.xlu0 %v1088, 11
      %v1114 = vpop.permute.xlu0 %1113
      %1115 = vrot.lane.b32.xlu0 %v1089, 11
      %v1116 = vpop.permute.xlu0 %1115
      %1117 = vrot.lane.b32.xlu0 %v1090, 11
      %v1118 = vpop.permute.xlu0 %1117
      %v1123 = vsel %vm764, 0.0, %v1112
      %v1124 = vsel %vm764, 0.0, %v1114
      %v1125 = vsel %vm764, 0.0, %v1116
      %v1126 = vsel %vm764, 0.0, %v1118
      %v1127 = vsel %vm769, %v1123, 0.0
      %v1128 = vsel %vm769, %v1124, 0.0
      %v1129 = vsel %vm769, %v1125, 0.0
      %v1130 = vsel %vm769, %v1126, 0.0
      %1135 = vrot.lane.b32.xlu0 %v1127, 127
      %v1136 = vpop.permute.xlu0 %1135
      %1137 = vrot.lane.b32.xlu0 %v1128, 127
      %v1138 = vpop.permute.xlu0 %1137
      %1139 = vrot.lane.b32.xlu0 %v1129, 127
      %v1140 = vpop.permute.xlu0 %1139
      %1141 = vrot.lane.b32.xlu0 %v1130, 127
      %v1142 = vpop.permute.xlu0 %1141
      %1147 = vrot.lane.b32.xlu0 %v1127, 126
      %v1148 = vpop.permute.xlu0 %1147
      %1149 = vrot.lane.b32.xlu0 %v1128, 126
      %v1150 = vpop.permute.xlu0 %1149
      %1151 = vrot.lane.b32.xlu0 %v1129, 126
      %v1152 = vpop.permute.xlu0 %1151
      %1153 = vrot.lane.b32.xlu0 %v1130, 126
      %v1154 = vpop.permute.xlu0 %1153
      %1159 = vrot.lane.b32.xlu0 %v1127, 118
      %v1160 = vpop.permute.xlu0 %1159
      %1161 = vrot.lane.b32.xlu0 %v1128, 118
      %v1162 = vpop.permute.xlu0 %1161
      %1163 = vrot.lane.b32.xlu0 %v1129, 118
      %v1164 = vpop.permute.xlu0 %1163
      %1165 = vrot.lane.b32.xlu0 %v1130, 118
      %v1166 = vpop.permute.xlu0 %1165
      %1171 = vrot.lane.b32.xlu0 %v1127, 117
      %v1172 = vpop.permute.xlu0 %1171
      %1173 = vrot.lane.b32.xlu0 %v1128, 117
      %v1174 = vpop.permute.xlu0 %1173
      %1175 = vrot.lane.b32.xlu0 %v1129, 117
      %v1176 = vpop.permute.xlu0 %1175
      %1177 = vrot.lane.b32.xlu0 %v1130, 117
      %v1178 = vpop.permute.xlu0 %1177
      %1183 = vrot.lane.b32.xlu0 %v1127, 116
      %v1184 = vpop.permute.xlu0 %1183
      %1185 = vrot.lane.b32.xlu0 %v1128, 116
      %v1186 = vpop.permute.xlu0 %1185
      %1187 = vrot.lane.b32.xlu0 %v1129, 116
      %v1188 = vpop.permute.xlu0 %1187
      %1189 = vrot.lane.b32.xlu0 %v1130, 116
      %v1190 = vpop.permute.xlu0 %1189
      %1195 = vrot.lane.b32.xlu0 %v1127, 108
      %v1196 = vpop.permute.xlu0 %1195
      %1197 = vrot.lane.b32.xlu0 %v1128, 108
      %v1198 = vpop.permute.xlu0 %1197
      %1199 = vrot.lane.b32.xlu0 %v1129, 108
      %v1200 = vpop.permute.xlu0 %1199
      %1201 = vrot.lane.b32.xlu0 %v1130, 108
      %v1202 = vpop.permute.xlu0 %1201
      %1207 = vrot.lane.b32.xlu0 %v1127, 107
      %v1208 = vpop.permute.xlu0 %1207
      %1209 = vrot.lane.b32.xlu0 %v1128, 107
      %v1210 = vpop.permute.xlu0 %1209
      %1211 = vrot.lane.b32.xlu0 %v1129, 107
      %v1212 = vpop.permute.xlu0 %1211
      %1213 = vrot.lane.b32.xlu0 %v1130, 107
      %v1214 = vpop.permute.xlu0 %1213
      %1219 = vrot.lane.b32.xlu0 %v1127, 106
      %v1220 = vpop.permute.xlu0 %1219
      %1221 = vrot.lane.b32.xlu0 %v1128, 106
      %v1222 = vpop.permute.xlu0 %1221
      %1223 = vrot.lane.b32.xlu0 %v1129, 106
      %v1224 = vpop.permute.xlu0 %1223
      %1225 = vrot.lane.b32.xlu0 %v1130, 106
      %v1226 = vpop.permute.xlu0 %1225
      %1232 = vset.pattern.permute.xlu0 0
      %1233 = vperm.xlu0 %1232, %v1103
      %v1234 = vpop.permute.xlu0 %1233
      %1237 = vset.pattern.permute.xlu0 0
      %1238 = vperm.xlu0 %1237, %v1104
      %v1239 = vpop.permute.xlu0 %1238
      %1242 = vset.pattern.permute.xlu0 0
      %1243 = vperm.xlu0 %1242, %v1105
      %v1244 = vpop.permute.xlu0 %1243
      %1247 = vset.pattern.permute.xlu0 0
      %1248 = vperm.xlu0 %1247, %v1106
      %v1249 = vpop.permute.xlu0 %1248
      %v1252 = vsel %vm894, %v1093, 0
      %v1255 = vsel %vm894, %v1096, 0
      %v1258 = vsel %vm894, %v1099, 0
      %v1261 = vsel %vm894, %v1102, 0
      %1263 = vmatprep.subr.mxu0 0.0
      %1264 = vmatpush1.msra.mxu0 %v1127
      %1265 = vmatprep.subr.mxu0 0.0
      %1266 = vmatpush1.msra.mxu0 %v1128
      %1267 = vmatprep.subr.mxu0 0.0
      %1268 = vmatpush1.msra.mxu0 %v1129
      %1269 = vmatprep.subr.mxu0 0.0
      %1270 = vmatpush1.msra.mxu0 %v1130
      %1271 = vmatprep.subr.mxu0 0.0
      %1272 = vmatpush1.msra.mxu0 %v1136
      %1273 = vmatprep.subr.mxu0 0.0
      %1274 = vmatpush1.msra.mxu0 %v1138
      %1275 = vmatprep.subr.mxu0 0.0
      %1276 = vmatpush1.msra.mxu0 %v1140
      %1277 = vmatprep.subr.mxu0 0.0
      %1278 = vmatpush1.msra.mxu0 %v1142
      %1279 = vmatprep.subr.mxu0 0.0
      %1280 = vmatpush1.msra.mxu0 %v1148
      %1281 = vmatprep.subr.mxu0 0.0
      %1282 = vmatpush1.msra.mxu0 %v1150
      %1283 = vmatprep.subr.mxu0 0.0
      %1284 = vmatpush1.msra.mxu0 %v1152
      %1285 = vmatprep.subr.mxu0 0.0
      %1286 = vmatpush1.msra.mxu0 %v1154
      %1287 = vmatprep.subr.mxu0 0.0
      %1288 = vmatpush1.msra.mxu0 %v1160
      %1289 = vmatprep.subr.mxu0 0.0
      %1290 = vmatpush1.msra.mxu0 %v1162
      %1291 = vmatprep.subr.mxu0 0.0
      %1292 = vmatpush1.msra.mxu0 %v1164
      %1293 = vmatprep.subr.mxu0 0.0
      %1294 = vmatpush1.msra.mxu0 %v1166
      %1295 = vmatprep.subr.mxu0 0.0
      %1296 = vmatpush1.msra.mxu0 %v1172
      %1297 = vmatprep.subr.mxu0 0.0
      %1298 = vmatpush1.msra.mxu0 %v1174
      %1299 = vmatprep.subr.mxu0 0.0
      %1300 = vmatpush1.msra.mxu0 %v1176
      %1301 = vmatprep.subr.mxu0 0.0
      %1302 = vmatpush1.msra.mxu0 %v1178
      %1303 = vmatprep.subr.mxu0 0.0
      %1304 = vmatpush1.msra.mxu0 %v1184
      %1305 = vmatprep.subr.mxu0 0.0
      %1306 = vmatpush1.msra.mxu0 %v1186
      %1307 = vmatprep.subr.mxu0 0.0
      %1308 = vmatpush1.msra.mxu0 %v1188
      %1309 = vmatprep.subr.mxu0 0.0
      %1310 = vmatpush1.msra.mxu0 %v1190
      %1311 = vmatprep.subr.mxu0 0.0
      %1312 = vmatpush1.msra.mxu0 %v1196
      %1313 = vmatprep.subr.mxu0 0.0
      %1314 = vmatpush1.msra.mxu0 %v1198
      %1315 = vmatprep.subr.mxu0 0.0
      %1316 = vmatpush1.msra.mxu0 %v1200
      %1317 = vmatprep.subr.mxu0 0.0
      %1318 = vmatpush1.msra.mxu0 %v1202
      %1319 = vmatprep.subr.mxu0 0.0
      %1320 = vmatpush1.msra.mxu0 %v1208
      %1321 = vmatprep.subr.mxu0 0.0
      %1322 = vmatpush1.msra.mxu0 %v1210
      %1323 = vmatprep.subr.mxu0 0.0
      %1324 = vmatpush1.msra.mxu0 %v1212
      %1325 = vmatprep.subr.mxu0 0.0
      %1326 = vmatpush1.msra.mxu0 %v1214
      %1327 = vmatprep.mubr.f32.mxu0 %v1092
      %1328 = vmatmul.mubr.f32.gmra.mrb[0].mxu0 %v1091
      %v1329 = vpop.f32.mrb[0].mxu0
      %v1330 = vadd.f32 %v1234, %v1329
      %v1331 = vpop.f32.mrb[0].mxu0
      %1332 = vmatprep.mubr.f32.mxu0 %v1095
      %1333 = vmatmul.mubr.f32.gmra.mrb[0].mxu0 %v1094
      %v1334 = vpop.f32.mrb[0].mxu0
      %v1335 = vadd.f32 %v1239, %v1334
      %v1336 = vpop.f32.mrb[0].mxu0
      %1337 = vmatprep.mubr.f32.mxu0 %v1098
      %1338 = vmatmul.mubr.f32.gmra.mrb[0].mxu0 %v1097
      %v1339 = vpop.f32.mrb[0].mxu0
      %v1340 = vadd.f32 %v1244, %v1339
      %v1341 = vpop.f32.mrb[0].mxu0
      %1342 = vmatprep.mubr.f32.mxu0 %v1101
      %1343 = vmatmul.mubr.f32.gmra.mrb[0].mxu0 %v1100
      %v1344 = vpop.f32.mrb[0].mxu0
      %v1345 = vadd.f32 %v1249, %v1344
      %v1346 = vpop.f32.mrb[0].mxu0
      %1347 = vdwg.mxu0
      %1348 = vmatprep.subr.mxu0 0.0
      %1349 = vmatpush1.msra.mxu0 %v1220
      %1350 = vmatprep.subr.mxu0 0.0
      %1351 = vmatpush1.msra.mxu0 %v1222
      %1352 = vmatprep.subr.mxu0 0.0
      %1353 = vmatpush1.msra.mxu0 %v1224
      %1354 = vmatprep.subr.mxu0 0.0
      %1355 = vmatpush1.msra.mxu0 %v1226
      %1356 = vmatprep.subr.mxu0 0.0
      %1357 = vmatpush1.msra.mxu0 0.0
      %1358 = vmatprep.subr.mxu0 0.0
      %1359 = vmatpush1.msra.mxu0 0.0
      %1360 = vmatprep.subr.mxu0 0.0
      %1361 = vmatpush1.msra.mxu0 0.0
      %1362 = vmatprep.subr.mxu0 0.0
      %1363 = vmatpush1.msra.mxu0 0.0
      %1364 = vmatprep.subr.mxu0 0.0
      %1365 = vmatpush1.msra.mxu0 0.0
      %1366 = vmatprep.subr.mxu0 0.0
      %1367 = vmatpush1.msra.mxu0 0.0
      %1368 = vmatprep.subr.mxu0 0.0
      %1369 = vmatpush1.msra.mxu0 0.0
      %1370 = vmatprep.subr.mxu0 0.0
      %1371 = vmatpush1.msra.mxu0 0.0
      %1372 = vmatprep.subr.mxu0 0.0
      %1373 = vmatpush1.msra.mxu0 0.0
      %1374 = vmatprep.subr.mxu0 0.0
      %1375 = vmatpush1.msra.mxu0 0.0
      %1376 = vmatprep.subr.mxu0 0.0
      %1377 = vmatpush1.msra.mxu0 0.0
      %1378 = vmatprep.subr.mxu0 0.0
      %1379 = vmatpush1.msra.mxu0 0.0
      %1380 = vmatprep.subr.mxu0 0.0
      %1381 = vmatpush1.msra.mxu0 0.0
      %1382 = vmatprep.subr.mxu0 0.0
      %1383 = vmatpush1.msra.mxu0 0.0
      %1384 = vmatprep.subr.mxu0 0.0
      %1385 = vmatpush1.msra.mxu0 0.0
      %1386 = vmatprep.subr.mxu0 0.0
      %1387 = vmatpush1.msra.mxu0 0.0
      %1388 = vmatprep.subr.mxu0 0.0
      %1389 = vmatpush1.msra.mxu0 0.0
      %1390 = vmatprep.subr.mxu0 0.0
      %1391 = vmatpush1.msra.mxu0 0.0
      %1392 = vmatprep.subr.mxu0 0.0
      %1393 = vmatpush1.msra.mxu0 0.0
      %1394 = vmatprep.subr.mxu0 0.0
      %1395 = vmatpush1.msra.mxu0 0.0
      %1396 = vmatprep.subr.mxu0 0.0
      %1397 = vmatpush1.msra.mxu0 0.0
      %1398 = vmatprep.subr.mxu0 0.0
      %1399 = vmatpush1.msra.mxu0 0.0
      %1400 = vmatprep.subr.mxu0 0.0
      %1401 = vmatpush1.msra.mxu0 0.0
      %1402 = vmatprep.subr.mxu0 0.0
      %1403 = vmatpush1.msra.mxu0 0.0
      %1404 = vmatprep.subr.mxu0 0.0
      %1405 = vmatpush1.msra.mxu0 0.0
      %1406 = vmatprep.subr.mxu0 0.0
      %1407 = vmatpush1.msra.mxu0 0.0
      %1408 = vmatprep.subr.mxu0 0.0
      %1409 = vmatpush1.msra.mxu0 0.0
      %1410 = vmatprep.subr.mxu0 0.0
      %1411 = vmatpush1.msra.mxu0 0.0
      %1412 = vmatprep.mubr.f32.mxu0 0.0
      %1413 = vmatmul.mubr.f32.gmra.mrb[0].mxu0 %v1252
      %v1414 = vpop.f32.mrb[0].mxu0
      %v1415 = vadd.f32 %v1330, %v1414
      %v1416 = vpop.f32.mrb[0].mxu0
      %1417 = vmatprep.mubr.f32.mxu0 0.0
      %1418 = vmatmul.mubr.f32.gmra.mrb[0].mxu0 %v1255
      %v1419 = vpop.f32.mrb[0].mxu0
      %v1420 = vadd.f32 %v1335, %v1419
      %v1421 = vpop.f32.mrb[0].mxu0
      %1422 = vmatprep.mubr.f32.mxu0 0.0
      %1423 = vmatmul.mubr.f32.gmra.mrb[0].mxu0 %v1258
      %v1424 = vpop.f32.mrb[0].mxu0
      %v1425 = vadd.f32 %v1340, %v1424
      %v1426 = vpop.f32.mrb[0].mxu0
      %1427 = vmatprep.mubr.f32.mxu0 0.0
      %1428 = vmatmul.mubr.f32.gmra.mrb[0].mxu0 %v1261
      %v1429 = vpop.f32.mrb[0].mxu0
      %v1430 = vadd.f32 %v1345, %v1429
      %v1431 = vpop.f32.mrb[0].mxu0
      %1432 = vdwg.mxu0
      %v1433 = vmax.f32 %v1415, 0.0
      %v1434 = vmax.f32 %v1420, 0.0
      %v1435 = vmax.f32 %v1425, 0.0
      %v1436 = vmax.f32 %v1430, 0.0
      %v1437 = vmul.f32 %v1433, %v1085
      %v1438 = vmul.f32 %v1434, %v1085
      %v1439 = vmul.f32 %v1435, %v1085
      %v1440 = vmul.f32 %v1436, %v1085
      %v1441 = vld [vmem:[%s12] sm:$0xff]
      %v1442 = vld [vmem:[%s12 + $0x8] sm:$0xff]
      %v1443 = vld [vmem:[%s12 + $0x10] sm:$0xff]
      %v1444 = vld [vmem:[%s12 + $0x18] sm:$0xff]
      %v1445 = vld [vmem:[%s12 + $0x20] sm:$0xff]
      %v1446 = vld [vmem:[%s12 + $0x28] sm:$0xff]
      %v1447 = vld [vmem:[%s13] sm:$0xff]
      %v1448 = vld [vmem:[%s13 + $0x8] sm:$0xff]
      %1453 = vrot.lane.b32.xlu0 %v1437, 11
      %v1454 = vpop.permute.xlu0 %1453
      %1455 = vrot.lane.b32.xlu0 %v1438, 11
      %v1456 = vpop.permute.xlu0 %1455
      %1457 = vrot.lane.b32.xlu0 %v1439, 11
      %v1458 = vpop.permute.xlu0 %1457
      %1459 = vrot.lane.b32.xlu0 %v1440, 11
      %v1460 = vpop.permute.xlu0 %1459
      %v1465 = vsel %vm764, 0.0, %v1454
      %v1466 = vsel %vm764, 0.0, %v1456
      %v1467 = vsel %vm764, 0.0, %v1458
      %v1468 = vsel %vm764, 0.0, %v1460
      %v1469 = vsel %vm769, %v1465, 0.0
      %v1470 = vsel %vm769, %v1466, 0.0
      %v1471 = vsel %vm769, %v1467, 0.0
      %v1472 = vsel %vm769, %v1468, 0.0
      %1477 = vrot.lane.b32.xlu0 %v1469, 127
      %v1478 = vpop.permute.xlu0 %1477
      %1479 = vrot.lane.b32.xlu0 %v1470, 127
      %v1480 = vpop.permute.xlu0 %1479
      %1481 = vrot.lane.b32.xlu0 %v1471, 127
      %v1482 = vpop.permute.xlu0 %1481
      %1483 = vrot.lane.b32.xlu0 %v1472, 127
      %v1484 = vpop.permute.xlu0 %1483
      %1489 = vrot.lane.b32.xlu0 %v1469, 126
      %v1490 = vpop.permute.xlu0 %1489
      %1491 = vrot.lane.b32.xlu0 %v1470, 126
      %v1492 = vpop.permute.xlu0 %1491
      %1493 = vrot.lane.b32.xlu0 %v1471, 126
      %v1494 = vpop.permute.xlu0 %1493
      %1495 = vrot.lane.b32.xlu0 %v1472, 126
      %v1496 = vpop.permute.xlu0 %1495
      %1501 = vrot.lane.b32.xlu0 %v1469, 118
      %v1502 = vpop.permute.xlu0 %1501
      %1503 = vrot.lane.b32.xlu0 %v1470, 118
      %v1504 = vpop.permute.xlu0 %1503
      %1505 = vrot.lane.b32.xlu0 %v1471, 118
      %v1506 = vpop.permute.xlu0 %1505
      %1507 = vrot.lane.b32.xlu0 %v1472, 118
      %v1508 = vpop.permute.xlu0 %1507
      %1513 = vrot.lane.b32.xlu0 %v1469, 117
      %v1514 = vpop.permute.xlu0 %1513
      %1515 = vrot.lane.b32.xlu0 %v1470, 117
      %v1516 = vpop.permute.xlu0 %1515
      %1517 = vrot.lane.b32.xlu0 %v1471, 117
      %v1518 = vpop.permute.xlu0 %1517
      %1519 = vrot.lane.b32.xlu0 %v1472, 117
      %v1520 = vpop.permute.xlu0 %1519
      %1525 = vrot.lane.b32.xlu0 %v1469, 116
      %v1526 = vpop.permute.xlu0 %1525
      %1527 = vrot.lane.b32.xlu0 %v1470, 116
      %v1528 = vpop.permute.xlu0 %1527
      %1529 = vrot.lane.b32.xlu0 %v1471, 116
      %v1530 = vpop.permute.xlu0 %1529
      %1531 = vrot.lane.b32.xlu0 %v1472, 116
      %v1532 = vpop.permute.xlu0 %1531
      %1537 = vrot.lane.b32.xlu0 %v1469, 108
      %v1538 = vpop.permute.xlu0 %1537
      %1539 = vrot.lane.b32.xlu0 %v1470, 108
      %v1540 = vpop.permute.xlu0 %1539
      %1541 = vrot.lane.b32.xlu0 %v1471, 108
      %v1542 = vpop.permute.xlu0 %1541
      %1543 = vrot.lane.b32.xlu0 %v1472, 108
      %v1544 = vpop.permute.xlu0 %1543
      %1549 = vrot.lane.b32.xlu0 %v1469, 107
      %v1550 = vpop.permute.xlu0 %1549
      %1551 = vrot.lane.b32.xlu0 %v1470, 107
      %v1552 = vpop.permute.xlu0 %1551
      %1553 = vrot.lane.b32.xlu0 %v1471, 107
      %v1554 = vpop.permute.xlu0 %1553
      %1555 = vrot.lane.b32.xlu0 %v1472, 107
      %v1556 = vpop.permute.xlu0 %1555
      %1561 = vrot.lane.b32.xlu0 %v1469, 106
      %v1562 = vpop.permute.xlu0 %1561
      %1563 = vrot.lane.b32.xlu0 %v1470, 106
      %v1564 = vpop.permute.xlu0 %1563
      %1565 = vrot.lane.b32.xlu0 %v1471, 106
      %v1566 = vpop.permute.xlu0 %1565
      %1567 = vrot.lane.b32.xlu0 %v1472, 106
      %v1568 = vpop.permute.xlu0 %1567
      %1574 = vset.pattern.permute.xlu0 0
      %1575 = vperm.xlu0 %1574, %v1447
      %v1576 = vpop.permute.xlu0 %1575
      %1579 = vset.pattern.permute.xlu0 0
      %1580 = vperm.xlu0 %1579, %v1448
      %v1581 = vpop.permute.xlu0 %1580
      %v1584 = vsel %vm894, %v1443, 0
      %v1587 = vsel %vm894, %v1446, 0
      %1589 = vmatprep.subr.mxu0 0.0
      %1590 = vmatpush1.msra.mxu0 %v1469
      %1591 = vmatprep.subr.mxu0 0.0
      %1592 = vmatpush1.msra.mxu0 %v1470
      %1593 = vmatprep.subr.mxu0 0.0
      %1594 = vmatpush1.msra.mxu0 %v1471
      %1595 = vmatprep.subr.mxu0 0.0
      %1596 = vmatpush1.msra.mxu0 %v1472
      %1597 = vmatprep.subr.mxu0 0.0
      %1598 = vmatpush1.msra.mxu0 %v1478
      %1599 = vmatprep.subr.mxu0 0.0
      %1600 = vmatpush1.msra.mxu0 %v1480
      %1601 = vmatprep.subr.mxu0 0.0
      %1602 = vmatpush1.msra.mxu0 %v1482
      %1603 = vmatprep.subr.mxu0 0.0
      %1604 = vmatpush1.msra.mxu0 %v1484
      %1605 = vmatprep.subr.mxu0 0.0
      %1606 = vmatpush1.msra.mxu0 %v1490
      %1607 = vmatprep.subr.mxu0 0.0
      %1608 = vmatpush1.msra.mxu0 %v1492
      %1609 = vmatprep.subr.mxu0 0.0
      %1610 = vmatpush1.msra.mxu0 %v1494
      %1611 = vmatprep.subr.mxu0 0.0
      %1612 = vmatpush1.msra.mxu0 %v1496
      %1613 = vmatprep.subr.mxu0 0.0
      %1614 = vmatpush1.msra.mxu0 %v1502
      %1615 = vmatprep.subr.mxu0 0.0
      %1616 = vmatpush1.msra.mxu0 %v1504
      %1617 = vmatprep.subr.mxu0 0.0
      %1618 = vmatpush1.msra.mxu0 %v1506
      %1619 = vmatprep.subr.mxu0 0.0
      %1620 = vmatpush1.msra.mxu0 %v1508
      %1621 = vmatprep.subr.mxu0 0.0
      %1622 = vmatpush1.msra.mxu0 %v1514
      %1623 = vmatprep.subr.mxu0 0.0
      %1624 = vmatpush1.msra.mxu0 %v1516
      %1625 = vmatprep.subr.mxu0 0.0
      %1626 = vmatpush1.msra.mxu0 %v1518
      %1627 = vmatprep.subr.mxu0 0.0
      %1628 = vmatpush1.msra.mxu0 %v1520
      %1629 = vmatprep.subr.mxu0 0.0
      %1630 = vmatpush1.msra.mxu0 %v1526
      %1631 = vmatprep.subr.mxu0 0.0
      %1632 = vmatpush1.msra.mxu0 %v1528
      %1633 = vmatprep.subr.mxu0 0.0
      %1634 = vmatpush1.msra.mxu0 %v1530
      %1635 = vmatprep.subr.mxu0 0.0
      %1636 = vmatpush1.msra.mxu0 %v1532
      %1637 = vmatprep.subr.mxu0 0.0
      %1638 = vmatpush1.msra.mxu0 %v1538
      %1639 = vmatprep.subr.mxu0 0.0
      %1640 = vmatpush1.msra.mxu0 %v1540
      %1641 = vmatprep.subr.mxu0 0.0
      %1642 = vmatpush1.msra.mxu0 %v1542
      %1643 = vmatprep.subr.mxu0 0.0
      %1644 = vmatpush1.msra.mxu0 %v1544
      %1645 = vmatprep.subr.mxu0 0.0
      %1646 = vmatpush1.msra.mxu0 %v1550
      %1647 = vmatprep.subr.mxu0 0.0
      %1648 = vmatpush1.msra.mxu0 %v1552
      %1649 = vmatprep.subr.mxu0 0.0
      %1650 = vmatpush1.msra.mxu0 %v1554
      %1651 = vmatprep.subr.mxu0 0.0
      %1652 = vmatpush1.msra.mxu0 %v1556
      %1653 = vmatprep.mubr.f32.mxu0 %v1442
      %1654 = vmatmul.mubr.f32.gmra.mrb[0].mxu0 %v1441
      %v1655 = vpop.f32.mrb[0].mxu0
      %v1656 = vadd.f32 %v1576, %v1655
      %v1657 = vpop.f32.mrb[0].mxu0
      %1658 = vmatprep.mubr.f32.mxu0 %v1445
      %1659 = vmatmul.mubr.f32.gmra.mrb[0].mxu0 %v1444
      %v1660 = vpop.f32.mrb[0].mxu0
      %v1661 = vadd.f32 %v1581, %v1660
      %v1662 = vpop.f32.mrb[0].mxu0
      %1663 = vdwg.mxu0
      %1664 = vmatprep.subr.mxu0 0.0
      %1665 = vmatpush1.msra.mxu0 %v1562
      %1666 = vmatprep.subr.mxu0 0.0
      %1667 = vmatpush1.msra.mxu0 %v1564
      %1668 = vmatprep.subr.mxu0 0.0
      %1669 = vmatpush1.msra.mxu0 %v1566
      %1670 = vmatprep.subr.mxu0 0.0
      %1671 = vmatpush1.msra.mxu0 %v1568
      %1672 = vmatprep.subr.mxu0 0.0
      %1673 = vmatpush1.msra.mxu0 0.0
      %1674 = vmatprep.subr.mxu0 0.0
      %1675 = vmatpush1.msra.mxu0 0.0
      %1676 = vmatprep.subr.mxu0 0.0
      %1677 = vmatpush1.msra.mxu0 0.0
      %1678 = vmatprep.subr.mxu0 0.0
      %1679 = vmatpush1.msra.mxu0 0.0
      %1680 = vmatprep.subr.mxu0 0.0
      %1681 = vmatpush1.msra.mxu0 0.0
      %1682 = vmatprep.subr.mxu0 0.0
      %1683 = vmatpush1.msra.mxu0 0.0
      %1684 = vmatprep.subr.mxu0 0.0
      %1685 = vmatpush1.msra.mxu0 0.0
      %1686 = vmatprep.subr.mxu0 0.0
      %1687 = vmatpush1.msra.mxu0 0.0
      %1688 = vmatprep.subr.mxu0 0.0
      %1689 = vmatpush1.msra.mxu0 0.0
      %1690 = vmatprep.subr.mxu0 0.0
      %1691 = vmatpush1.msra.mxu0 0.0
      %1692 = vmatprep.subr.mxu0 0.0
      %1693 = vmatpush1.msra.mxu0 0.0
      %1694 = vmatprep.subr.mxu0 0.0
      %1695 = vmatpush1.msra.mxu0 0.0
      %1696 = vmatprep.subr.mxu0 0.0
      %1697 = vmatpush1.msra.mxu0 0.0
      %1698 = vmatprep.subr.mxu0 0.0
      %1699 = vmatpush1.msra.mxu0 0.0
      %1700 = vmatprep.subr.mxu0 0.0
      %1701 = vmatpush1.msra.mxu0 0.0
      %1702 = vmatprep.subr.mxu0 0.0
      %1703 = vmatpush1.msra.mxu0 0.0
      %1704 = vmatprep.subr.mxu0 0.0
      %1705 = vmatpush1.msra.mxu0 0.0
      %1706 = vmatprep.subr.mxu0 0.0
      %1707 = vmatpush1.msra.mxu0 0.0
      %1708 = vmatprep.subr.mxu0 0.0
      %1709 = vmatpush1.msra.mxu0 0.0
      %1710 = vmatprep.subr.mxu0 0.0
      %1711 = vmatpush1.msra.mxu0 0.0
      %1712 = vmatprep.subr.mxu0 0.0
      %1713 = vmatpush1.msra.mxu0 0.0
      %1714 = vmatprep.subr.mxu0 0.0
      %1715 = vmatpush1.msra.mxu0 0.0
      %1716 = vmatprep.subr.mxu0 0.0
      %1717 = vmatpush1.msra.mxu0 0.0
      %1718 = vmatprep.subr.mxu0 0.0
      %1719 = vmatpush1.msra.mxu0 0.0
      %1720 = vmatprep.subr.mxu0 0.0
      %1721 = vmatpush1.msra.mxu0 0.0
      %1722 = vmatprep.subr.mxu0 0.0
      %1723 = vmatpush1.msra.mxu0 0.0
      %1724 = vmatprep.subr.mxu0 0.0
      %1725 = vmatpush1.msra.mxu0 0.0
      %1726 = vmatprep.subr.mxu0 0.0
      %1727 = vmatpush1.msra.mxu0 0.0
      %1728 = vmatprep.mubr.f32.mxu0 0.0
      %1729 = vmatmul.mubr.f32.gmra.mrb[0].mxu0 %v1584
      %v1730 = vpop.f32.mrb[0].mxu0
      %v1731 = vadd.f32 %v1656, %v1730
      %v1732 = vpop.f32.mrb[0].mxu0
      %1733 = vmatprep.mubr.f32.mxu0 0.0
      %1734 = vmatmul.mubr.f32.gmra.mrb[0].mxu0 %v1587
      %v1735 = vpop.f32.mrb[0].mxu0
      %v1736 = vadd.f32 %v1661, %v1735
      %v1737 = vpop.f32.mrb[0].mxu0
      %1738 = vdwg.mxu0
      %v1739 = vmax.f32 %v1731, 0.0
      %v1740 = vmax.f32 %v1736, 0.0
      %v1741 = vmul.f32 %v1739, %v1085
      %v1742 = vmul.f32 %v1740, %v1085
      %v1743 = vld [vmem:[%s6] sm:$0xff]
      %v1744 = vld [vmem:[%s6 + $0x8] sm:$0xff]
      %v1745 = vld [vmem:[%s6 + $0x10] sm:$0xff]
      %v1746 = vld [vmem:[%s6 + $0x18] sm:$0xff]
      %v1747 = vld [vmem:[%s6 + $0x20] sm:$0xff]
      %v1748 = vld [vmem:[%s6 + $0x28] sm:$0xff]
      %v1749 = vld [vmem:[%s6 + $0x30] sm:$0xff]
      %v1750 = vld [vmem:[%s6 + $0x38] sm:$0xff]
      %v1751 = vld [vmem:[%s6 + $0x40] sm:$0xff]
      %v1752 = vld [vmem:[%s6 + $0x48] sm:$0xff]
      %v1753 = vld [vmem:[%s6 + $0x50] sm:$0xff]
      %v1754 = vld [vmem:[%s6 + $0x58] sm:$0xff]
      %v1755 = vld [vmem:[%s6 + $0x60] sm:$0xff]
      %v1756 = vld [vmem:[%s6 + $0x68] sm:$0xff]
      %v1757 = vld [vmem:[%s6 + $0x70] sm:$0xff]
      %v1758 = vld [vmem:[%s6 + $0x78] sm:$0xff]
      %v1759 = vld [vmem:[%s6 + $0x80] sm:$0xff]
      %v1760 = vld [vmem:[%s6 + $0x88] sm:$0xff]
      %v1761 = vld [vmem:[%s6 + $0x90] sm:$0xff]
      %v1762 = vld [vmem:[%s6 + $0x98] sm:$0xff]
      %v1763 = vld [vmem:[%s6 + $0xa0] sm:$0xff]
      %v1764 = vld [vmem:[%s6 + $0xa8] sm:$0xff]
      %v1765 = vld [vmem:[%s6 + $0xb0] sm:$0xff]
      %v1766 = vld [vmem:[%s6 + $0xb8] sm:$0xff]
      %v1767 = vld [vmem:[%s6 + $0xc0] sm:$0xff]
      %v1768 = vld [vmem:[%s6 + $0xc8] sm:$0xff]
      %v1769 = vld [vmem:[%s6 + $0xd0] sm:$0xff]
      %v1770 = vld [vmem:[%s6 + $0xd8] sm:$0xff]
      %v1771 = vld [vmem:[%s6 + $0xe0] sm:$0xff]
      %v1772 = vld [vmem:[%s6 + $0xe8] sm:$0xff]
      %v1773 = vld [vmem:[%s6 + $0xf0] sm:$0xff]
      %v1774 = vld [vmem:[%s6 + $0xf8] sm:$0xff]
      %v1775 = vld [vmem:[%s6 + $0x100] sm:$0xff]
      %v1776 = vld [vmem:[%s6 + $0x108] sm:$0xff]
      %v1777 = vld [vmem:[%s6 + $0x110] sm:$0xff]
      %v1778 = vld [vmem:[%s6 + $0x118] sm:$0xff]
      %v1779 = vld [vmem:[%s6 + $0x120] sm:$0xf]
      %v1780 = vld [vmem:[%s6 + $0x128] sm:$0xf]
      %v1781 = vld [vmem:[%s6 + $0x130] sm:$0xf]
      %v1782 = vld [vmem:[%s713] sm:$0xff]
      %v1783 = vld [vmem:[%s713 + $0x8] sm:$0xff]
      %v1784 = vld [vmem:[%s713 + $0x10] sm:$0xff]
      %v1785 = vld [vmem:[%s713 + $0x18] sm:$0xff]
      %v1786 = vld [vmem:[%s713 + $0x20] sm:$0xff]
      %v1787 = vld [vmem:[%s713 + $0x28] sm:$0xff]
      %vm1788 = vcmask 818176
      %v1790 = vsel %vm1788, %v1741, 0
      %v1793 = vsel %vm1788, %v1742, 0
      %vm1795 = vcmask 1043456
      %v1797 = vsel %vm1795, %v1779, 0
      %v1800 = vsel %vm1795, %v1780, 0
      %v1803 = vsel %vm1795, %v1781, 0
      %1805 = vmatprep.subr.mxu0 %v1744
      %1806 = vmatpush1.msra.mxu0 %v1743
      %1807 = vmatprep.subr.mxu0 %v1747
      %1808 = vmatpush1.msra.mxu0 %v1746
      %1809 = vmatprep.subr.mxu0 %v1750
      %1810 = vmatpush1.msra.mxu0 %v1749
      %1811 = vmatprep.subr.mxu0 %v1753
      %1812 = vmatpush1.msra.mxu0 %v1752
      %1813 = vmatprep.subr.mxu0 %v1756
      %1814 = vmatpush1.msra.mxu0 %v1755
      %1815 = vmatprep.subr.mxu0 %v1759
      %1816 = vmatpush1.msra.mxu0 %v1758
      %1817 = vmatprep.subr.mxu0 %v1762
      %1818 = vmatpush1.msra.mxu0 %v1761
      %1819 = vmatprep.subr.mxu0 %v1765
      %1820 = vmatpush1.msra.mxu0 %v1764
      %1821 = vmatprep.subr.mxu0 %v1768
      %1822 = vmatpush1.msra.mxu0 %v1767
      %1823 = vmatprep.subr.mxu0 %v1771
      %1824 = vmatpush1.msra.mxu0 %v1770
      %1825 = vmatprep.subr.mxu0 %v1774
      %1826 = vmatpush1.msra.mxu0 %v1773
      %1827 = vmatprep.subr.mxu0 %v1777
      %1828 = vmatpush1.msra.mxu0 %v1776
      %1829 = vmatprep.subr.mxu0 %v1800
      %1830 = vmatpush1.msra.mxu0 %v1797
      %1831 = vmatprep.subr.mxu0 0.0
      %1832 = vmatpush1.msra.mxu0 0.0
      %1833 = vmatprep.subr.mxu0 0.0
      %1834 = vmatpush1.msra.mxu0 0.0
      %1835 = vmatprep.subr.mxu0 0.0
      %1836 = vmatpush1.msra.mxu0 0.0
      %1837 = vmatprep.subr.mxu0 0.0
      %1838 = vmatpush1.msra.mxu0 0.0
      %1839 = vmatprep.subr.mxu0 0.0
      %1840 = vmatpush1.msra.mxu0 0.0
      %1841 = vmatprep.subr.mxu0 0.0
      %1842 = vmatpush1.msra.mxu0 0.0
      %1843 = vmatprep.subr.mxu0 0.0
      %1844 = vmatpush1.msra.mxu0 0.0
      %1845 = vmatprep.subr.mxu0 0.0
      %1846 = vmatpush1.msra.mxu0 0.0
      %1847 = vmatprep.subr.mxu0 0.0
      %1848 = vmatpush1.msra.mxu0 0.0
      %1849 = vmatprep.subr.mxu0 0.0
      %1850 = vmatpush1.msra.mxu0 0.0
      %1851 = vmatprep.subr.mxu0 0.0
      %1852 = vmatpush1.msra.mxu0 0.0
      %1853 = vmatprep.subr.mxu0 0.0
      %1854 = vmatpush1.msra.mxu0 0.0
      %1855 = vmatprep.subr.mxu0 0.0
      %1856 = vmatpush1.msra.mxu0 0.0
      %1857 = vmatprep.subr.mxu0 0.0
      %1858 = vmatpush1.msra.mxu0 0.0
      %1859 = vmatprep.subr.mxu0 0.0
      %1860 = vmatpush1.msra.mxu0 0.0
      %1861 = vmatprep.subr.mxu0 0.0
      %1862 = vmatpush1.msra.mxu0 0.0
      %1863 = vmatprep.subr.mxu0 0.0
      %1864 = vmatpush1.msra.mxu0 0.0
      %1865 = vmatprep.subr.mxu0 0.0
      %1866 = vmatpush1.msra.mxu0 0.0
      %1867 = vmatprep.subr.mxu0 0.0
      %1868 = vmatpush1.msra.mxu0 0.0
      %1869 = vmatprep.mubr.f32.mxu0 0.0
      %1870 = vmatmul.mubr.f32.gmra.mrb[0].mxu0 %v1790
      %v1871 = vpop.f32.mrb[0].mxu0
      %v1872 = vadd.f32 %v1782, %v1871
      %v1873 = vpop.f32.mrb[0].mxu0
      %v1874 = vadd.f32 %v1783, %v1873
      %1875 = vmatprep.mubr.f32.mxu0 0.0
      %1876 = vmatmul.mubr.f32.gmra.mrb[0].mxu0 %v1793
      %v1877 = vpop.f32.mrb[0].mxu0
      %v1878 = vadd.f32 %v1785, %v1877
      %v1879 = vpop.f32.mrb[0].mxu0
      %v1880 = vadd.f32 %v1786, %v1879
      %1881 = vdwg.mxu0
      %1882 = vmatprep.subr.mxu0 0.0
      %1883 = vmatpush1.msra.mxu0 %v1745
      %1884 = vmatprep.subr.mxu0 0.0
      %1885 = vmatpush1.msra.mxu0 %v1748
      %1886 = vmatprep.subr.mxu0 0.0
      %1887 = vmatpush1.msra.mxu0 %v1751
      %1888 = vmatprep.subr.mxu0 0.0
      %1889 = vmatpush1.msra.mxu0 %v1754
      %1890 = vmatprep.subr.mxu0 0.0
      %1891 = vmatpush1.msra.mxu0 %v1757
      %1892 = vmatprep.subr.mxu0 0.0
      %1893 = vmatpush1.msra.mxu0 %v1760
      %1894 = vmatprep.subr.mxu0 0.0
      %1895 = vmatpush1.msra.mxu0 %v1763
      %1896 = vmatprep.subr.mxu0 0.0
      %1897 = vmatpush1.msra.mxu0 %v1766
      %1898 = vmatprep.subr.mxu0 0.0
      %1899 = vmatpush1.msra.mxu0 %v1769
      %1900 = vmatprep.subr.mxu0 0.0
      %1901 = vmatpush1.msra.mxu0 %v1772
      %1902 = vmatprep.subr.mxu0 0.0
      %1903 = vmatpush1.msra.mxu0 %v1775
      %1904 = vmatprep.subr.mxu0 0.0
      %1905 = vmatpush1.msra.mxu0 %v1778
      %1906 = vmatprep.subr.mxu0 0.0
      %1907 = vmatpush1.msra.mxu0 %v1803
      %1908 = vmatprep.subr.mxu0 0.0
      %1909 = vmatpush1.msra.mxu0 0.0
      %1910 = vmatprep.subr.mxu0 0.0
      %1911 = vmatpush1.msra.mxu0 0.0
      %1912 = vmatprep.subr.mxu0 0.0
      %1913 = vmatpush1.msra.mxu0 0.0
      %1914 = vmatprep.subr.mxu0 0.0
      %1915 = vmatpush1.msra.mxu0 0.0
      %1916 = vmatprep.subr.mxu0 0.0
      %1917 = vmatpush1.msra.mxu0 0.0
      %1918 = vmatprep.subr.mxu0 0.0
      %1919 = vmatpush1.msra.mxu0 0.0
      %1920 = vmatprep.subr.mxu0 0.0
      %1921 = vmatpush1.msra.mxu0 0.0
      %1922 = vmatprep.subr.mxu0 0.0
      %1923 = vmatpush1.msra.mxu0 0.0
      %1924 = vmatprep.subr.mxu0 0.0
      %1925 = vmatpush1.msra.mxu0 0.0
      %1926 = vmatprep.subr.mxu0 0.0
      %1927 = vmatpush1.msra.mxu0 0.0
      %1928 = vmatprep.subr.mxu0 0.0
      %1929 = vmatpush1.msra.mxu0 0.0
      %1930 = vmatprep.subr.mxu0 0.0
      %1931 = vmatpush1.msra.mxu0 0.0
      %1932 = vmatprep.subr.mxu0 0.0
      %1933 = vmatpush1.msra.mxu0 0.0
      %1934 = vmatprep.subr.mxu0 0.0
      %1935 = vmatpush1.msra.mxu0 0.0
      %1936 = vmatprep.subr.mxu0 0.0
      %1937 = vmatpush1.msra.mxu0 0.0
      %1938 = vmatprep.subr.mxu0 0.0
      %1939 = vmatpush1.msra.mxu0 0.0
      %1940 = vmatprep.subr.mxu0 0.0
      %1941 = vmatpush1.msra.mxu0 0.0
      %1942 = vmatprep.subr.mxu0 0.0
      %1943 = vmatpush1.msra.mxu0 0.0
      %1944 = vmatprep.subr.mxu0 0.0
      %1945 = vmatpush1.msra.mxu0 0.0
      %1946 = vmatprep.mubr.f32.mxu0 0.0
      %1947 = vmatmul.mubr.f32.gmra.mrb[0].mxu0 %v1790
      %v1948 = vpop.f32.mrb[0].mxu0
      %v1949 = vadd.f32 %v1784, %v1948
      %v1950 = vpop.f32.mrb[0].mxu0
      %1951 = vmatprep.mubr.f32.mxu0 0.0
      %1952 = vmatmul.mubr.f32.gmra.mrb[0].mxu0 %v1793
      %v1953 = vpop.f32.mrb[0].mxu0
      %v1954 = vadd.f32 %v1787, %v1953
      %v1955 = vpop.f32.mrb[0].mxu0
      %1956 = vdwg.mxu0
      %v1957 = vld [vmem:[%s14] sm:$0xff]
      %v1958 = vld [vmem:[%s14 + $0x8] sm:$0xff]
      %v1959 = vld [vmem:[%s14 + $0x10] sm:$0xff]
      %v1960 = vld [vmem:[%s14 + $0x18] sm:$0xff]
      %v1961 = vld [vmem:[%s15] sm:$0xff]
      %v1962 = vld [vmem:[%s15 + $0x8] sm:$0xff]
      %1969 = vrot.lane.b32.xlu0 %v1872, 19
      %v1970 = vpop.permute.xlu0 %1969
      %1971 = vrot.lane.b32.xlu0 %v1874, 19
      %v1972 = vpop.permute.xlu0 %1971
      %1973 = vrot.lane.b32.xlu0 %v1949, 19
      %v1974 = vpop.permute.xlu0 %1973
      %1975 = vrot.lane.b32.xlu0 %v1878, 19
      %v1976 = vpop.permute.xlu0 %1975
      %1977 = vrot.lane.b32.xlu0 %v1880, 19
      %v1978 = vpop.permute.xlu0 %1977
      %1979 = vrot.lane.b32.xlu0 %v1954, 19
      %v1980 = vpop.permute.xlu0 %1979
      %vm1981 = vcmask 154624
      %v1982 = vsel %vm1981, %v1970, %v1972
      %v1983 = vsel %vm1981, %v1972, %v1974
      %v1984 = vsel %vm1981, %v1976, %v1978
      %v1985 = vsel %vm1981, %v1978, %v1980
      %v1992 = vsel %vm1981, 0.0, %v1970
      %v1993 = vsel %vm1981, 0.0, %v1976
      %vm1994 = vcmask 711680
      %v1995 = vsel %vm1994, %v1983, 0.0
      %v1996 = vsel %vm1994, %v1985, 0.0
      %2001 = vrot.lane.b32.xlu0 %v1992, 127
      %v2002 = vpop.permute.xlu0 %2001
      %2003 = vrot.lane.b32.xlu0 %v1982, 127
      %v2004 = vpop.permute.xlu0 %2003
      %2005 = vrot.lane.b32.xlu0 %v1995, 127
      %v2006 = vpop.permute.xlu0 %2005
      %2007 = vrot.lane.b32.xlu0 %v1993, 127
      %v2008 = vpop.permute.xlu0 %2007
      %2009 = vrot.lane.b32.xlu0 %v1984, 127
      %v2010 = vpop.permute.xlu0 %2009
      %2011 = vrot.lane.b32.xlu0 %v1996, 127
      %v2012 = vpop.permute.xlu0 %2011
      %vm2013 = vcmask 1039360
      %v2014 = vsel %vm2013, %v2002, %v2004
      %v2015 = vsel %vm2013, %v2004, %v2006
      %v2016 = vsel %vm2013, %v2008, %v2010
      %v2017 = vsel %vm2013, %v2010, %v2012
      %2024 = vrot.lane.b32.xlu0 %v1992, 126
      %v2025 = vpop.permute.xlu0 %2024
      %2026 = vrot.lane.b32.xlu0 %v1982, 126
      %v2027 = vpop.permute.xlu0 %2026
      %2028 = vrot.lane.b32.xlu0 %v1995, 126
      %v2029 = vpop.permute.xlu0 %2028
      %2030 = vrot.lane.b32.xlu0 %v1993, 126
      %v2031 = vpop.permute.xlu0 %2030
      %2032 = vrot.lane.b32.xlu0 %v1984, 126
      %v2033 = vpop.permute.xlu0 %2032
      %2034 = vrot.lane.b32.xlu0 %v1996, 126
      %v2035 = vpop.permute.xlu0 %2034
      %vm2036 = vcmask 1031168
      %v2037 = vsel %vm2036, %v2025, %v2027
      %v2038 = vsel %vm2036, %v2027, %v2029
      %v2039 = vsel %vm2036, %v2031, %v2033
      %v2040 = vsel %vm2036, %v2033, %v2035
      %2047 = vrot.lane.b32.xlu0 %v1992, 110
      %v2048 = vpop.permute.xlu0 %2047
      %2049 = vrot.lane.b32.xlu0 %v1982, 110
      %v2050 = vpop.permute.xlu0 %2049
      %2051 = vrot.lane.b32.xlu0 %v1995, 110
      %v2052 = vpop.permute.xlu0 %2051
      %2053 = vrot.lane.b32.xlu0 %v1993, 110
      %v2054 = vpop.permute.xlu0 %2053
      %2055 = vrot.lane.b32.xlu0 %v1984, 110
      %v2056 = vpop.permute.xlu0 %2055
      %2057 = vrot.lane.b32.xlu0 %v1996, 110
      %v2058 = vpop.permute.xlu0 %2057
      %vm2059 = vcmask 900096
      %v2060 = vsel %vm2059, %v2048, %v2050
      %v2061 = vsel %vm2059, %v2050, %v2052
      %v2062 = vsel %vm2059, %v2054, %v2056
      %v2063 = vsel %vm2059, %v2056, %v2058
      %2070 = vrot.lane.b32.xlu0 %v1992, 109
      %v2071 = vpop.permute.xlu0 %2070
      %2072 = vrot.lane.b32.xlu0 %v1982, 109
      %v2073 = vpop.permute.xlu0 %2072
      %2074 = vrot.lane.b32.xlu0 %v1995, 109
      %v2075 = vpop.permute.xlu0 %2074
      %2076 = vrot.lane.b32.xlu0 %v1993, 109
      %v2077 = vpop.permute.xlu0 %2076
      %2078 = vrot.lane.b32.xlu0 %v1984, 109
      %v2079 = vpop.permute.xlu0 %2078
      %2080 = vrot.lane.b32.xlu0 %v1996, 109
      %v2081 = vpop.permute.xlu0 %2080
      %vm2082 = vcmask 891904
      %v2083 = vsel %vm2082, %v2071, %v2073
      %v2084 = vsel %vm2082, %v2073, %v2075
      %v2085 = vsel %vm2082, %v2077, %v2079
      %v2086 = vsel %vm2082, %v2079, %v2081
      %2093 = vrot.lane.b32.xlu0 %v1992, 108
      %v2094 = vpop.permute.xlu0 %2093
      %2095 = vrot.lane.b32.xlu0 %v1982, 108
      %v2096 = vpop.permute.xlu0 %2095
      %2097 = vrot.lane.b32.xlu0 %v1995, 108
      %v2098 = vpop.permute.xlu0 %2097
      %2099 = vrot.lane.b32.xlu0 %v1993, 108
      %v2100 = vpop.permute.xlu0 %2099
      %2101 = vrot.lane.b32.xlu0 %v1984, 108
      %v2102 = vpop.permute.xlu0 %2101
      %2103 = vrot.lane.b32.xlu0 %v1996, 108
      %v2104 = vpop.permute.xlu0 %2103
      %vm2105 = vcmask 883712
      %v2106 = vsel %vm2105, %v2094, %v2096
      %v2107 = vsel %vm2105, %v2096, %v2098
      %v2108 = vsel %vm2105, %v2100, %v2102
      %v2109 = vsel %vm2105, %v2102, %v2104
      %2116 = vrot.lane.b32.xlu0 %v1992, 92
      %v2117 = vpop.permute.xlu0 %2116
      %2118 = vrot.lane.b32.xlu0 %v1982, 92
      %v2119 = vpop.permute.xlu0 %2118
      %2120 = vrot.lane.b32.xlu0 %v1995, 92
      %v2121 = vpop.permute.xlu0 %2120
      %2122 = vrot.lane.b32.xlu0 %v1993, 92
      %v2123 = vpop.permute.xlu0 %2122
      %2124 = vrot.lane.b32.xlu0 %v1984, 92
      %v2125 = vpop.permute.xlu0 %2124
      %2126 = vrot.lane.b32.xlu0 %v1996, 92
      %v2127 = vpop.permute.xlu0 %2126
      %vm2128 = vcmask 752640
      %v2129 = vsel %vm2128, %v2117, %v2119
      %v2130 = vsel %vm2128, %v2119, %v2121
      %v2131 = vsel %vm2128, %v2123, %v2125
      %v2132 = vsel %vm2128, %v2125, %v2127
      %2139 = vrot.lane.b32.xlu0 %v1992, 91
      %v2140 = vpop.permute.xlu0 %2139
      %2141 = vrot.lane.b32.xlu0 %v1982, 91
      %v2142 = vpop.permute.xlu0 %2141
      %2143 = vrot.lane.b32.xlu0 %v1995, 91
      %v2144 = vpop.permute.xlu0 %2143
      %2145 = vrot.lane.b32.xlu0 %v1993, 91
      %v2146 = vpop.permute.xlu0 %2145
      %2147 = vrot.lane.b32.xlu0 %v1984, 91
      %v2148 = vpop.permute.xlu0 %2147
      %2149 = vrot.lane.b32.xlu0 %v1996, 91
      %v2150 = vpop.permute.xlu0 %2149
      %vm2151 = vcmask 744448
      %v2152 = vsel %vm2151, %v2140, %v2142
      %v2153 = vsel %vm2151, %v2142, %v2144
      %v2154 = vsel %vm2151, %v2146, %v2148
      %v2155 = vsel %vm2151, %v2148, %v2150
      %2162 = vrot.lane.b32.xlu0 %v1992, 90
      %v2163 = vpop.permute.xlu0 %2162
      %2164 = vrot.lane.b32.xlu0 %v1982, 90
      %v2165 = vpop.permute.xlu0 %2164
      %2166 = vrot.lane.b32.xlu0 %v1995, 90
      %v2167 = vpop.permute.xlu0 %2166
      %2168 = vrot.lane.b32.xlu0 %v1993, 90
      %v2169 = vpop.permute.xlu0 %2168
      %2170 = vrot.lane.b32.xlu0 %v1984, 90
      %v2171 = vpop.permute.xlu0 %2170
      %2172 = vrot.lane.b32.xlu0 %v1996, 90
      %v2173 = vpop.permute.xlu0 %2172
      %vm2174 = vcmask 736256
      %v2175 = vsel %vm2174, %v2163, %v2165
      %v2176 = vsel %vm2174, %v2165, %v2167
      %v2177 = vsel %vm2174, %v2169, %v2171
      %v2178 = vsel %vm2174, %v2171, %v2173
      %2186 = vset.pattern.permute.xlu0 0
      %2187 = vperm.xlu0 %2186, %v1961
      %v2188 = vpop.permute.xlu0 %2187
      %2191 = vset.pattern.permute.xlu0 0
      %2192 = vperm.xlu0 %2191, %v1962
      %v2193 = vpop.permute.xlu0 %2192
      %vm2195 = vcmask 130048
      %v2197 = vsel %vm2195, %v1958, 0
      %v2200 = vsel %vm2195, %v1960, 0
      %2202 = vmatprep.subr.mxu0 %v1982
      %2203 = vmatpush1.msra.mxu0 %v1992
      %2204 = vmatprep.subr.mxu0 %v1984
      %2205 = vmatpush1.msra.mxu0 %v1993
      %2206 = vmatprep.subr.mxu0 %v2015
      %2207 = vmatpush1.msra.mxu0 %v2014
      %2208 = vmatprep.subr.mxu0 %v2017
      %2209 = vmatpush1.msra.mxu0 %v2016
      %2210 = vmatprep.subr.mxu0 %v2038
      %2211 = vmatpush1.msra.mxu0 %v2037
      %2212 = vmatprep.subr.mxu0 %v2040
      %2213 = vmatpush1.msra.mxu0 %v2039
      %2214 = vmatprep.subr.mxu0 %v2061
      %2215 = vmatpush1.msra.mxu0 %v2060
      %2216 = vmatprep.subr.mxu0 %v2063
      %2217 = vmatpush1.msra.mxu0 %v2062
      %2218 = vmatprep.subr.mxu0 %v2084
      %2219 = vmatpush1.msra.mxu0 %v2083
      %2220 = vmatprep.subr.mxu0 %v2086
      %2221 = vmatpush1.msra.mxu0 %v2085
      %2222 = vmatprep.subr.mxu0 %v2107
      %2223 = vmatpush1.msra.mxu0 %v2106
      %2224 = vmatprep.subr.mxu0 %v2109
      %2225 = vmatpush1.msra.mxu0 %v2108
      %2226 = vmatprep.subr.mxu0 %v2130
      %2227 = vmatpush1.msra.mxu0 %v2129
      %2228 = vmatprep.subr.mxu0 %v2132
      %2229 = vmatpush1.msra.mxu0 %v2131
      %2230 = vmatprep.subr.mxu0 %v2153
      %2231 = vmatpush1.msra.mxu0 %v2152
      %2232 = vmatprep.subr.mxu0 %v2155
      %2233 = vmatpush1.msra.mxu0 %v2154
      %2234 = vmatprep.subr.mxu0 %v2176
      %2235 = vmatpush1.msra.mxu0 %v2175
      %2236 = vmatprep.subr.mxu0 %v2178
      %2237 = vmatpush1.msra.mxu0 %v2177
      %2238 = vmatprep.subr.mxu0 0.0
      %2239 = vmatpush1.msra.mxu0 0.0
      %2240 = vmatprep.subr.mxu0 0.0
      %2241 = vmatpush1.msra.mxu0 0.0
      %2242 = vmatprep.subr.mxu0 0.0
      %2243 = vmatpush1.msra.mxu0 0.0
      %2244 = vmatprep.subr.mxu0 0.0
      %2245 = vmatpush1.msra.mxu0 0.0
      %2246 = vmatprep.subr.mxu0 0.0
      %2247 = vmatpush1.msra.mxu0 0.0
      %2248 = vmatprep.subr.mxu0 0.0
      %2249 = vmatpush1.msra.mxu0 0.0
      %2250 = vmatprep.subr.mxu0 0.0
      %2251 = vmatpush1.msra.mxu0 0.0
      %2252 = vmatprep.subr.mxu0 0.0
      %2253 = vmatpush1.msra.mxu0 0.0
      %2254 = vmatprep.subr.mxu0 0.0
      %2255 = vmatpush1.msra.mxu0 0.0
      %2256 = vmatprep.subr.mxu0 0.0
      %2257 = vmatpush1.msra.mxu0 0.0
      %2258 = vmatprep.subr.mxu0 0.0
      %2259 = vmatpush1.msra.mxu0 0.0
      %2260 = vmatprep.subr.mxu0 0.0
      %2261 = vmatpush1.msra.mxu0 0.0
      %2262 = vmatprep.subr.mxu0 0.0
      %2263 = vmatpush1.msra.mxu0 0.0
      %2264 = vmatprep.subr.mxu0 0.0
      %2265 = vmatpush1.msra.mxu0 0.0
      %2266 = vmatprep.mubr.f32.mxu0 %v2197
      %2267 = vmatmul.mubr.f32.gmra.mrb[0].mxu0 %v1957
      %v2268 = vpop.f32.mrb[0].mxu0
      %v2269 = vadd.f32 %v2188, %v2268
      %v2270 = vpop.f32.mrb[0].mxu0
      %v2271 = vadd.f32 %v2188, %v2270
      %2272 = vmatprep.mubr.f32.mxu0 %v2200
      %2273 = vmatmul.mubr.f32.gmra.mrb[0].mxu0 %v1959
      %v2274 = vpop.f32.mrb[0].mxu0
      %v2275 = vadd.f32 %v2193, %v2274
      %v2276 = vpop.f32.mrb[0].mxu0
      %v2277 = vadd.f32 %v2193, %v2276
      %2278 = vdwg.mxu0
      %2279 = vmatprep.subr.mxu0 0.0
      %2280 = vmatpush1.msra.mxu0 %v1995
      %2281 = vmatprep.subr.mxu0 0.0
      %2282 = vmatpush1.msra.mxu0 %v1996
      %2283 = vmatprep.subr.mxu0 0.0
      %2284 = vmatpush1.msra.mxu0 %v2006
      %2285 = vmatprep.subr.mxu0 0.0
      %2286 = vmatpush1.msra.mxu0 %v2012
      %2287 = vmatprep.subr.mxu0 0.0
      %2288 = vmatpush1.msra.mxu0 %v2029
      %2289 = vmatprep.subr.mxu0 0.0
      %2290 = vmatpush1.msra.mxu0 %v2035
      %2291 = vmatprep.subr.mxu0 0.0
      %2292 = vmatpush1.msra.mxu0 %v2052
      %2293 = vmatprep.subr.mxu0 0.0
      %2294 = vmatpush1.msra.mxu0 %v2058
      %2295 = vmatprep.subr.mxu0 0.0
      %2296 = vmatpush1.msra.mxu0 %v2075
      %2297 = vmatprep.subr.mxu0 0.0
      %2298 = vmatpush1.msra.mxu0 %v2081
      %2299 = vmatprep.subr.mxu0 0.0
      %2300 = vmatpush1.msra.mxu0 %v2098
      %2301 = vmatprep.subr.mxu0 0.0
      %2302 = vmatpush1.msra.mxu0 %v2104
      %2303 = vmatprep.subr.mxu0 0.0
      %2304 = vmatpush1.msra.mxu0 %v2121
      %2305 = vmatprep.subr.mxu0 0.0
      %2306 = vmatpush1.msra.mxu0 %v2127
      %2307 = vmatprep.subr.mxu0 0.0
      %2308 = vmatpush1.msra.mxu0 %v2144
      %2309 = vmatprep.subr.mxu0 0.0
      %2310 = vmatpush1.msra.mxu0 %v2150
      %2311 = vmatprep.subr.mxu0 0.0
      %2312 = vmatpush1.msra.mxu0 %v2167
      %2313 = vmatprep.subr.mxu0 0.0
      %2314 = vmatpush1.msra.mxu0 %v2173
      %2315 = vmatprep.subr.mxu0 0.0
      %2316 = vmatpush1.msra.mxu0 0.0
      %2317 = vmatprep.subr.mxu0 0.0
      %2318 = vmatpush1.msra.mxu0 0.0
      %2319 = vmatprep.subr.mxu0 0.0
      %2320 = vmatpush1.msra.mxu0 0.0
      %2321 = vmatprep.subr.mxu0 0.0
      %2322 = vmatpush1.msra.mxu0 0.0
      %2323 = vmatprep.subr.mxu0 0.0
      %2324 = vmatpush1.msra.mxu0 0.0
      %2325 = vmatprep.subr.mxu0 0.0
      %2326 = vmatpush1.msra.mxu0 0.0
      %2327 = vmatprep.subr.mxu0 0.0
      %2328 = vmatpush1.msra.mxu0 0.0
      %2329 = vmatprep.subr.mxu0 0.0
      %2330 = vmatpush1.msra.mxu0 0.0
      %2331 = vmatprep.subr.mxu0 0.0
      %2332 = vmatpush1.msra.mxu0 0.0
      %2333 = vmatprep.subr.mxu0 0.0
      %2334 = vmatpush1.msra.mxu0 0.0
      %2335 = vmatprep.subr.mxu0 0.0
      %2336 = vmatpush1.msra.mxu0 0.0
      %2337 = vmatprep.subr.mxu0 0.0
      %2338 = vmatpush1.msra.mxu0 0.0
      %2339 = vmatprep.subr.mxu0 0.0
      %2340 = vmatpush1.msra.mxu0 0.0
      %2341 = vmatprep.subr.mxu0 0.0
      %2342 = vmatpush1.msra.mxu0 0.0
      %2343 = vmatprep.mubr.f32.mxu0 %v2197
      %2344 = vmatmul.mubr.f32.gmra.mrb[0].mxu0 %v1957
      %v2345 = vpop.f32.mrb[0].mxu0
      %v2346 = vadd.f32 %v2188, %v2345
      %v2347 = vpop.f32.mrb[0].mxu0
      %2348 = vmatprep.mubr.f32.mxu0 %v2200
      %2349 = vmatmul.mubr.f32.gmra.mrb[0].mxu0 %v1959
      %v2350 = vpop.f32.mrb[0].mxu0
      %v2351 = vadd.f32 %v2193, %v2350
      %v2352 = vpop.f32.mrb[0].mxu0
      %2353 = vdwg.mxu0
      %v2354 = vmax.f32 %v2269, 0.0
      %v2355 = vmax.f32 %v2271, 0.0
      %v2356 = vmax.f32 %v2346, 0.0
      %v2357 = vmax.f32 %v2275, 0.0
      %v2358 = vmax.f32 %v2277, 0.0
      %v2359 = vmax.f32 %v2351, 0.0
      %v2361 = vlaneseq
      %v2362 = vshrl.u32 %v2361, 7
      %v2363 = vsub.s32 0, %v2362
      %v2364 = vrot.slane %v725, %v2363
      %v2365 = vlaneseq
      %v2366 = vshrl.u32 %v2365, 7
      %v2367 = vsub.s32 1, %v2366
      %v2368 = vrot.slane %v725, %v2367
      %v2369 = vlaneseq
      %v2370 = vshrl.u32 %v2369, 7
      %v2371 = vsub.s32 2, %v2370
      %v2372 = vrot.slane %v725, %v2371
      %v2376 = vmul.f32 %v2354, %v2364
      %v2377 = vmul.f32 %v2355, %v2368
      %v2378 = vmul.f32 %v2356, %v2372
      %v2379 = vmul.f32 %v2357, %v2364
      %v2380 = vmul.f32 %v2358, %v2368
      %v2381 = vmul.f32 %v2359, %v2372
      %v2382 = vld [vmem:[%s16] sm:$0xff]
      %v2383 = vld [vmem:[%s16 + $0x8] sm:$0xff]
      %v2384 = vld [vmem:[%s17] sm:$0xff]
      %2391 = vrot.lane.b32.xlu0 %v2376, 19
      %v2392 = vpop.permute.xlu0 %2391
      %2393 = vrot.lane.b32.xlu0 %v2377, 19
      %v2394 = vpop.permute.xlu0 %2393
      %2395 = vrot.lane.b32.xlu0 %v2378, 19
      %v2396 = vpop.permute.xlu0 %2395
      %2397 = vrot.lane.b32.xlu0 %v2379, 19
      %v2398 = vpop.permute.xlu0 %2397
      %2399 = vrot.lane.b32.xlu0 %v2380, 19
      %v2400 = vpop.permute.xlu0 %2399
      %2401 = vrot.lane.b32.xlu0 %v2381, 19
      %v2402 = vpop.permute.xlu0 %2401
      %v2403 = vsel %vm1981, %v2392, %v2394
      %v2404 = vsel %vm1981, %v2394, %v2396
      %v2405 = vsel %vm1981, %v2398, %v2400
      %v2406 = vsel %vm1981, %v2400, %v2402
      %v2413 = vsel %vm1981, 0.0, %v2392
      %v2414 = vsel %vm1981, 0.0, %v2398
      %v2415 = vsel %vm1994, %v2404, 0.0
      %v2416 = vsel %vm1994, %v2406, 0.0
      %2421 = vrot.lane.b32.xlu0 %v2413, 127
      %v2422 = vpop.permute.xlu0 %2421
      %2423 = vrot.lane.b32.xlu0 %v2403, 127
      %v2424 = vpop.permute.xlu0 %2423
      %2425 = vrot.lane.b32.xlu0 %v2415, 127
      %v2426 = vpop.permute.xlu0 %2425
      %2427 = vrot.lane.b32.xlu0 %v2414, 127
      %v2428 = vpop.permute.xlu0 %2427
      %2429 = vrot.lane.b32.xlu0 %v2405, 127
      %v2430 = vpop.permute.xlu0 %2429
      %2431 = vrot.lane.b32.xlu0 %v2416, 127
      %v2432 = vpop.permute.xlu0 %2431
      %v2433 = vsel %vm2013, %v2422, %v2424
      %v2434 = vsel %vm2013, %v2424, %v2426
      %v2435 = vsel %vm2013, %v2428, %v2430
      %v2436 = vsel %vm2013, %v2430, %v2432
      %2443 = vrot.lane.b32.xlu0 %v2413, 126
      %v2444 = vpop.permute.xlu0 %2443
      %2445 = vrot.lane.b32.xlu0 %v2403, 126
      %v2446 = vpop.permute.xlu0 %2445
      %2447 = vrot.lane.b32.xlu0 %v2415, 126
      %v2448 = vpop.permute.xlu0 %2447
      %2449 = vrot.lane.b32.xlu0 %v2414, 126
      %v2450 = vpop.permute.xlu0 %2449
      %2451 = vrot.lane.b32.xlu0 %v2405, 126
      %v2452 = vpop.permute.xlu0 %2451
      %2453 = vrot.lane.b32.xlu0 %v2416, 126
      %v2454 = vpop.permute.xlu0 %2453
      %v2455 = vsel %vm2036, %v2444, %v2446
      %v2456 = vsel %vm2036, %v2446, %v2448
      %v2457 = vsel %vm2036, %v2450, %v2452
      %v2458 = vsel %vm2036, %v2452, %v2454
      %2465 = vrot.lane.b32.xlu0 %v2413, 110
      %v2466 = vpop.permute.xlu0 %2465
      %2467 = vrot.lane.b32.xlu0 %v2403, 110
      %v2468 = vpop.permute.xlu0 %2467
      %2469 = vrot.lane.b32.xlu0 %v2415, 110
      %v2470 = vpop.permute.xlu0 %2469
      %2471 = vrot.lane.b32.xlu0 %v2414, 110
      %v2472 = vpop.permute.xlu0 %2471
      %2473 = vrot.lane.b32.xlu0 %v2405, 110
      %v2474 = vpop.permute.xlu0 %2473
      %2475 = vrot.lane.b32.xlu0 %v2416, 110
      %v2476 = vpop.permute.xlu0 %2475
      %v2477 = vsel %vm2059, %v2466, %v2468
      %v2478 = vsel %vm2059, %v2468, %v2470
      %v2479 = vsel %vm2059, %v2472, %v2474
      %v2480 = vsel %vm2059, %v2474, %v2476
      %2487 = vrot.lane.b32.xlu0 %v2413, 109
      %v2488 = vpop.permute.xlu0 %2487
      %2489 = vrot.lane.b32.xlu0 %v2403, 109
      %v2490 = vpop.permute.xlu0 %2489
      %2491 = vrot.lane.b32.xlu0 %v2415, 109
      %v2492 = vpop.permute.xlu0 %2491
      %2493 = vrot.lane.b32.xlu0 %v2414, 109
      %v2494 = vpop.permute.xlu0 %2493
      %2495 = vrot.lane.b32.xlu0 %v2405, 109
      %v2496 = vpop.permute.xlu0 %2495
      %2497 = vrot.lane.b32.xlu0 %v2416, 109
      %v2498 = vpop.permute.xlu0 %2497
      %v2499 = vsel %vm2082, %v2488, %v2490
      %v2500 = vsel %vm2082, %v2490, %v2492
      %v2501 = vsel %vm2082, %v2494, %v2496
      %v2502 = vsel %vm2082, %v2496, %v2498
      %2509 = vrot.lane.b32.xlu0 %v2413, 108
      %v2510 = vpop.permute.xlu0 %2509
      %2511 = vrot.lane.b32.xlu0 %v2403, 108
      %v2512 = vpop.permute.xlu0 %2511
      %2513 = vrot.lane.b32.xlu0 %v2415, 108
      %v2514 = vpop.permute.xlu0 %2513
      %2515 = vrot.lane.b32.xlu0 %v2414, 108
      %v2516 = vpop.permute.xlu0 %2515
      %2517 = vrot.lane.b32.xlu0 %v2405, 108
      %v2518 = vpop.permute.xlu0 %2517
      %2519 = vrot.lane.b32.xlu0 %v2416, 108
      %v2520 = vpop.permute.xlu0 %2519
      %v2521 = vsel %vm2105, %v2510, %v2512
      %v2522 = vsel %vm2105, %v2512, %v2514
      %v2523 = vsel %vm2105, %v2516, %v2518
      %v2524 = vsel %vm2105, %v2518, %v2520
      %2531 = vrot.lane.b32.xlu0 %v2413, 92
      %v2532 = vpop.permute.xlu0 %2531
      %2533 = vrot.lane.b32.xlu0 %v2403, 92
      %v2534 = vpop.permute.xlu0 %2533
      %2535 = vrot.lane.b32.xlu0 %v2415, 92
      %v2536 = vpop.permute.xlu0 %2535
      %2537 = vrot.lane.b32.xlu0 %v2414, 92
      %v2538 = vpop.permute.xlu0 %2537
      %2539 = vrot.lane.b32.xlu0 %v2405, 92
      %v2540 = vpop.permute.xlu0 %2539
      %2541 = vrot.lane.b32.xlu0 %v2416, 92
      %v2542 = vpop.permute.xlu0 %2541
      %v2543 = vsel %vm2128, %v2532, %v2534
      %v2544 = vsel %vm2128, %v2534, %v2536
      %v2545 = vsel %vm2128, %v2538, %v2540
      %v2546 = vsel %vm2128, %v2540, %v2542
      %2553 = vrot.lane.b32.xlu0 %v2413, 91
      %v2554 = vpop.permute.xlu0 %2553
      %2555 = vrot.lane.b32.xlu0 %v2403, 91
      %v2556 = vpop.permute.xlu0 %2555
      %2557 = vrot.lane.b32.xlu0 %v2415, 91
      %v2558 = vpop.permute.xlu0 %2557
      %2559 = vrot.lane.b32.xlu0 %v2414, 91
      %v2560 = vpop.permute.xlu0 %2559
      %2561 = vrot.lane.b32.xlu0 %v2405, 91
      %v2562 = vpop.permute.xlu0 %2561
      %2563 = vrot.lane.b32.xlu0 %v2416, 91
      %v2564 = vpop.permute.xlu0 %2563
      %v2565 = vsel %vm2151, %v2554, %v2556
      %v2566 = vsel %vm2151, %v2556, %v2558
      %v2567 = vsel %vm2151, %v2560, %v2562
      %v2568 = vsel %vm2151, %v2562, %v2564
      %2575 = vrot.lane.b32.xlu0 %v2413, 90
      %v2576 = vpop.permute.xlu0 %2575
      %2577 = vrot.lane.b32.xlu0 %v2403, 90
      %v2578 = vpop.permute.xlu0 %2577
      %2579 = vrot.lane.b32.xlu0 %v2415, 90
      %v2580 = vpop.permute.xlu0 %2579
      %2581 = vrot.lane.b32.xlu0 %v2414, 90
      %v2582 = vpop.permute.xlu0 %2581
      %2583 = vrot.lane.b32.xlu0 %v2405, 90
      %v2584 = vpop.permute.xlu0 %2583
      %2585 = vrot.lane.b32.xlu0 %v2416, 90
      %v2586 = vpop.permute.xlu0 %2585
      %v2587 = vsel %vm2174, %v2576, %v2578
      %v2588 = vsel %vm2174, %v2578, %v2580
      %v2589 = vsel %vm2174, %v2582, %v2584
      %v2590 = vsel %vm2174, %v2584, %v2586
      %2598 = vset.pattern.permute.xlu0 0
      %2599 = vperm.xlu0 %2598, %v2384
      %v2600 = vpop.permute.xlu0 %2599
      %v2603 = vsel %vm2195, %v2383, 0
      %2605 = vmatprep.subr.mxu0 %v2403
      %2606 = vmatpush1.msra.mxu0 %v2413
      %2607 = vmatprep.subr.mxu0 %v2405
      %2608 = vmatpush1.msra.mxu0 %v2414
      %2609 = vmatprep.subr.mxu0 %v2434
      %2610 = vmatpush1.msra.mxu0 %v2433
      %2611 = vmatprep.subr.mxu0 %v2436
      %2612 = vmatpush1.msra.mxu0 %v2435
      %2613 = vmatprep.subr.mxu0 %v2456
      %2614 = vmatpush1.msra.mxu0 %v2455
      %2615 = vmatprep.subr.mxu0 %v2458
      %2616 = vmatpush1.msra.mxu0 %v2457
      %2617 = vmatprep.subr.mxu0 %v2478
      %2618 = vmatpush1.msra.mxu0 %v2477
      %2619 = vmatprep.subr.mxu0 %v2480
      %2620 = vmatpush1.msra.mxu0 %v2479
      %2621 = vmatprep.subr.mxu0 %v2500
      %2622 = vmatpush1.msra.mxu0 %v2499
      %2623 = vmatprep.subr.mxu0 %v2502
      %2624 = vmatpush1.msra.mxu0 %v2501
      %2625 = vmatprep.subr.mxu0 %v2522
      %2626 = vmatpush1.msra.mxu0 %v2521
      %2627 = vmatprep.subr.mxu0 %v2524
      %2628 = vmatpush1.msra.mxu0 %v2523
      %2629 = vmatprep.subr.mxu0 %v2544
      %2630 = vmatpush1.msra.mxu0 %v2543
      %2631 = vmatprep.subr.mxu0 %v2546
      %2632 = vmatpush1.msra.mxu0 %v2545
      %2633 = vmatprep.subr.mxu0 %v2566
      %2634 = vmatpush1.msra.mxu0 %v2565
      %2635 = vmatprep.subr.mxu0 %v2568
      %2636 = vmatpush1.msra.mxu0 %v2567
      %2637 = vmatprep.subr.mxu0 %v2588
      %2638 = vmatpush1.msra.mxu0 %v2587
      %2639 = vmatprep.subr.mxu0 %v2590
      %2640 = vmatpush1.msra.mxu0 %v2589
      %2641 = vmatprep.subr.mxu0 0.0
      %2642 = vmatpush1.msra.mxu0 0.0
      %2643 = vmatprep.subr.mxu0 0.0
      %2644 = vmatpush1.msra.mxu0 0.0
      %2645 = vmatprep.subr.mxu0 0.0
      %2646 = vmatpush1.msra.mxu0 0.0
      %2647 = vmatprep.subr.mxu0 0.0
      %2648 = vmatpush1.msra.mxu0 0.0
      %2649 = vmatprep.subr.mxu0 0.0
      %2650 = vmatpush1.msra.mxu0 0.0
      %2651 = vmatprep.subr.mxu0 0.0
      %2652 = vmatpush1.msra.mxu0 0.0
      %2653 = vmatprep.subr.mxu0 0.0
      %2654 = vmatpush1.msra.mxu0 0.0
      %2655 = vmatprep.subr.mxu0 0.0
      %2656 = vmatpush1.msra.mxu0 0.0
      %2657 = vmatprep.subr.mxu0 0.0
      %2658 = vmatpush1.msra.mxu0 0.0
      %2659 = vmatprep.subr.mxu0 0.0
      %2660 = vmatpush1.msra.mxu0 0.0
      %2661 = vmatprep.subr.mxu0 0.0
      %2662 = vmatpush1.msra.mxu0 0.0
      %2663 = vmatprep.subr.mxu0 0.0
      %2664 = vmatpush1.msra.mxu0 0.0
      %2665 = vmatprep.subr.mxu0 0.0
      %2666 = vmatpush1.msra.mxu0 0.0
      %2667 = vmatprep.subr.mxu0 0.0
      %2668 = vmatpush1.msra.mxu0 0.0
      %2669 = vmatprep.mubr.f32.mxu0 %v2603
      %2670 = vmatmul.mubr.f32.gmra.mrb[0].mxu0 %v2382
      %v2671 = vpop.f32.mrb[0].mxu0
      %v2672 = vadd.f32 %v2600, %v2671
      %v2673 = vpop.f32.mrb[0].mxu0
      %v2674 = vadd.f32 %v2600, %v2673
      %2675 = vdwg.mxu0
      %2676 = vmatprep.subr.mxu0 0.0
      %2677 = vmatpush1.msra.mxu0 %v2415
      %2678 = vmatprep.subr.mxu0 0.0
      %2679 = vmatpush1.msra.mxu0 %v2416
      %2680 = vmatprep.subr.mxu0 0.0
      %2681 = vmatpush1.msra.mxu0 %v2426
      %2682 = vmatprep.subr.mxu0 0.0
      %2683 = vmatpush1.msra.mxu0 %v2432
      %2684 = vmatprep.subr.mxu0 0.0
      %2685 = vmatpush1.msra.mxu0 %v2448
      %2686 = vmatprep.subr.mxu0 0.0
      %2687 = vmatpush1.msra.mxu0 %v2454
      %2688 = vmatprep.subr.mxu0 0.0
      %2689 = vmatpush1.msra.mxu0 %v2470
      %2690 = vmatprep.subr.mxu0 0.0
      %2691 = vmatpush1.msra.mxu0 %v2476
      %2692 = vmatprep.subr.mxu0 0.0
      %2693 = vmatpush1.msra.mxu0 %v2492
      %2694 = vmatprep.subr.mxu0 0.0
      %2695 = vmatpush1.msra.mxu0 %v2498
      %2696 = vmatprep.subr.mxu0 0.0
      %2697 = vmatpush1.msra.mxu0 %v2514
      %2698 = vmatprep.subr.mxu0 0.0
      %2699 = vmatpush1.msra.mxu0 %v2520
      %2700 = vmatprep.subr.mxu0 0.0
      %2701 = vmatpush1.msra.mxu0 %v2536
      %2702 = vmatprep.subr.mxu0 0.0
      %2703 = vmatpush1.msra.mxu0 %v2542
      %2704 = vmatprep.subr.mxu0 0.0
      %2705 = vmatpush1.msra.mxu0 %v2558
      %2706 = vmatprep.subr.mxu0 0.0
      %2707 = vmatpush1.msra.mxu0 %v2564
      %2708 = vmatprep.subr.mxu0 0.0
      %2709 = vmatpush1.msra.mxu0 %v2580
      %2710 = vmatprep.subr.mxu0 0.0
      %2711 = vmatpush1.msra.mxu0 %v2586
      %2712 = vmatprep.subr.mxu0 0.0
      %2713 = vmatpush1.msra.mxu0 0.0
      %2714 = vmatprep.subr.mxu0 0.0
      %2715 = vmatpush1.msra.mxu0 0.0
      %2716 = vmatprep.subr.mxu0 0.0
      %2717 = vmatpush1.msra.mxu0 0.0
      %2718 = vmatprep.subr.mxu0 0.0
      %2719 = vmatpush1.msra.mxu0 0.0
      %2720 = vmatprep.subr.mxu0 0.0
      %2721 = vmatpush1.msra.mxu0 0.0
      %2722 = vmatprep.subr.mxu0 0.0
      %2723 = vmatpush1.msra.mxu0 0.0
      %2724 = vmatprep.subr.mxu0 0.0
      %2725 = vmatpush1.msra.mxu0 0.0
      %2726 = vmatprep.subr.mxu0 0.0
      %2727 = vmatpush1.msra.mxu0 0.0
      %2728 = vmatprep.subr.mxu0 0.0
      %2729 = vmatpush1.msra.mxu0 0.0
      %2730 = vmatprep.subr.mxu0 0.0
      %2731 = vmatpush1.msra.mxu0 0.0
      %2732 = vmatprep.subr.mxu0 0.0
      %2733 = vmatpush1.msra.mxu0 0.0
      %2734 = vmatprep.subr.mxu0 0.0
      %2735 = vmatpush1.msra.mxu0 0.0
      %2736 = vmatprep.subr.mxu0 0.0
      %2737 = vmatpush1.msra.mxu0 0.0
      %2738 = vmatprep.subr.mxu0 0.0
      %2739 = vmatpush1.msra.mxu0 0.0
      %2740 = vmatprep.mubr.f32.mxu0 %v2603
      %2741 = vmatmul.mubr.f32.gmra.mrb[0].mxu0 %v2382
      %v2742 = vpop.f32.mrb[0].mxu0
      %v2743 = vadd.f32 %v2600, %v2742
      %v2744 = vpop.f32.mrb[0].mxu0
      %2745 = vdwg.mxu0
      %v2746 = vmax.f32 %v2672, 0.0
      %v2747 = vmax.f32 %v2674, 0.0
      %v2748 = vmax.f32 %v2743, 0.0
      %v2749 = vmul.f32 %v2746, %v2364
      %v2750 = vmul.f32 %v2747, %v2368
      %v2751 = vmul.f32 %v2748, %v2372
      %v2752 = vld [vmem:[%s7] sm:$0xff]
      %v2753 = vld [vmem:[%s7 + $0x8] sm:$0xff]
      %v2754 = vld [vmem:[%s7 + $0x10] sm:$0xff]
      %v2755 = vld [vmem:[%s7 + $0x18] sm:$0xff]
      %v2756 = vld [vmem:[%s7 + $0x20] sm:$0xff]
      %v2757 = vld [vmem:[%s7 + $0x28] sm:$0xff]
      %v2758 = vld [vmem:[%s7 + $0x30] sm:$0xff]
      %v2759 = vld [vmem:[%s7 + $0x38] sm:$0xff]
      %v2760 = vld [vmem:[%s7 + $0x40] sm:$0xff]
      %v2761 = vld [vmem:[%s7 + $0x48] sm:$0xff]
      %v2762 = vld [vmem:[%s7 + $0x50] sm:$0xff]
      %v2763 = vld [vmem:[%s7 + $0x58] sm:$0xff]
      %v2764 = vld [vmem:[%s7 + $0x60] sm:$0xff]
      %v2765 = vld [vmem:[%s7 + $0x68] sm:$0xff]
      %v2766 = vld [vmem:[%s7 + $0x70] sm:$0xff]
      %v2767 = vld [vmem:[%s7 + $0x78] sm:$0xff]
      %v2768 = vld [vmem:[%s7 + $0x80] sm:$0xff]
      %v2769 = vld [vmem:[%s7 + $0x88] sm:$0xff]
      %v2770 = vld [vmem:[%s7 + $0x90] sm:$0xff]
      %v2771 = vld [vmem:[%s7 + $0x98] sm:$0xff]
      %v2772 = vld [vmem:[%s7 + $0xa0] sm:$0xff]
      %v2773 = vld [vmem:[%s7 + $0xa8] sm:$0xff]
      %v2774 = vld [vmem:[%s7 + $0xb0] sm:$0xff]
      %v2775 = vld [vmem:[%s7 + $0xb8] sm:$0xff]
      %v2776 = vld [vmem:[%s7 + $0xc0] sm:$0xff]
      %v2777 = vld [vmem:[%s7 + $0xc8] sm:$0xff]
      %v2778 = vld [vmem:[%s7 + $0xd0] sm:$0xff]
      %v2779 = vld [vmem:[%s7 + $0xd8] sm:$0xff]
      %v2780 = vld [vmem:[%s7 + $0xe0] sm:$0xff]
      %v2781 = vld [vmem:[%s7 + $0xe8] sm:$0xff]
      %v2782 = vld [vmem:[%s7 + $0xf0] sm:$0xff]
      %v2783 = vld [vmem:[%s7 + $0xf8] sm:$0xff]
      %v2784 = vld [vmem:[%s7 + $0x100] sm:$0xff]
      %v2785 = vld [vmem:[%s7 + $0x108] sm:$0xff]
      %v2786 = vld [vmem:[%s7 + $0x110] sm:$0xff]
      %v2787 = vld [vmem:[%s7 + $0x118] sm:$0xff]
      %v2788 = vld [vmem:[%s7 + $0x120] sm:$0xff]
      %v2789 = vld [vmem:[%s7 + $0x128] sm:$0xff]
      %v2790 = vld [vmem:[%s7 + $0x130] sm:$0xff]
      %v2791 = vld [vmem:[%s7 + $0x138] sm:$0xff]
      %v2792 = vld [vmem:[%s7 + $0x140] sm:$0xff]
      %v2793 = vld [vmem:[%s7 + $0x148] sm:$0xff]
      %v2794 = vld [vmem:[%s7 + $0x150] sm:$0xff]
      %v2795 = vld [vmem:[%s7 + $0x158] sm:$0xff]
      %v2796 = vld [vmem:[%s7 + $0x160] sm:$0xff]
      %v2797 = vld [vmem:[%s7 + $0x168] sm:$0xff]
      %v2798 = vld [vmem:[%s7 + $0x170] sm:$0xff]
      %v2799 = vld [vmem:[%s7 + $0x178] sm:$0xff]
      %v2800 = vld [vmem:[%s7 + $0x180] sm:$0xff]
      %v2801 = vld [vmem:[%s7 + $0x188] sm:$0xff]
      %v2802 = vld [vmem:[%s7 + $0x190] sm:$0xff]
      %v2803 = vld [vmem:[%s7 + $0x198] sm:$0xff]
      %v2804 = vld [vmem:[%s7 + $0x1a0] sm:$0xff]
      %v2805 = vld [vmem:[%s7 + $0x1a8] sm:$0xff]
      %v2806 = vld [vmem:[%s7 + $0x1b0] sm:$0xff]
      %v2807 = vld [vmem:[%s7 + $0x1b8] sm:$0xff]
      %v2808 = vld [vmem:[%s7 + $0x1c0] sm:$0xff]
      %v2809 = vld [vmem:[%s7 + $0x1c8] sm:$0xff]
      %v2810 = vld [vmem:[%s7 + $0x1d0] sm:$0xff]
      %v2811 = vld [vmem:[%s7 + $0x1d8] sm:$0xff]
      %v2812 = vld [vmem:[%s7 + $0x1e0] sm:$0xff]
      %v2813 = vld [vmem:[%s7 + $0x1e8] sm:$0xff]
      %v2814 = vld [vmem:[%s7 + $0x1f0] sm:$0xff]
      %v2815 = vld [vmem:[%s7 + $0x1f8] sm:$0xff]
      %v2816 = vld [vmem:[%s7 + $0x200] sm:$0xff]
      %v2817 = vld [vmem:[%s7 + $0x208] sm:$0xff]
      %v2818 = vld [vmem:[%s7 + $0x210] sm:$0xff]
      %v2819 = vld [vmem:[%s7 + $0x218] sm:$0xff]
      %v2820 = vld [vmem:[%s7 + $0x220] sm:$0xff]
      %v2821 = vld [vmem:[%s7 + $0x228] sm:$0xff]
      %v2822 = vld [vmem:[%s7 + $0x230] sm:$0xff]
      %v2823 = vld [vmem:[%s7 + $0x238] sm:$0xff]
      %v2824 = vld [vmem:[%s7 + $0x240] sm:$0xff]
      %v2825 = vld [vmem:[%s7 + $0x248] sm:$0xff]
      %v2826 = vld [vmem:[%s7 + $0x250] sm:$0xff]
      %v2827 = vld [vmem:[%s7 + $0x258] sm:$0xff]
      %v2828 = vld [vmem:[%s7 + $0x260] sm:$0xff]
      %v2829 = vld [vmem:[%s7 + $0x268] sm:$0xff]
      %v2830 = vld [vmem:[%s7 + $0x270] sm:$0xff]
      %v2831 = vld [vmem:[%s7 + $0x278] sm:$0xff]
      %v2832 = vld [vmem:[%s7 + $0x280] sm:$0xff]
      %v2833 = vld [vmem:[%s7 + $0x288] sm:$0xff]
      %v2834 = vld [vmem:[%s7 + $0x290] sm:$0xff]
      %v2835 = vld [vmem:[%s7 + $0x298] sm:$0xff]
      %v2836 = vld [vmem:[%s7 + $0x2a0] sm:$0xff]
      %v2837 = vld [vmem:[%s7 + $0x2a8] sm:$0xff]
      %v2838 = vld [vmem:[%s7 + $0x2b0] sm:$0xff]
      %v2839 = vld [vmem:[%s7 + $0x2b8] sm:$0xff]
      %v2840 = vld [vmem:[%s7 + $0x2c0] sm:$0xff]
      %v2841 = vld [vmem:[%s7 + $0x2c8] sm:$0xff]
      %v2842 = vld [vmem:[%s7 + $0x2d0] sm:$0xff]
      %v2843 = vld [vmem:[%s7 + $0x2d8] sm:$0xff]
      %v2844 = vld [vmem:[%s7 + $0x2e0] sm:$0xff]
      %v2845 = vld [vmem:[%s7 + $0x2e8] sm:$0xff]
      %v2846 = vld [vmem:[%s7 + $0x2f0] sm:$0xff]
      %v2847 = vld [vmem:[%s7 + $0x2f8] sm:$0xff]
      %v2848 = vld [vmem:[%s7 + $0x300] sm:$0xff]
      %v2849 = vld [vmem:[%s7 + $0x308] sm:$0xff]
      %v2850 = vld [vmem:[%s7 + $0x310] sm:$0xff]
      %v2851 = vld [vmem:[%s7 + $0x318] sm:$0xff]
      %v2852 = vld [vmem:[%s7 + $0x320] sm:$0xff]
      %v2853 = vld [vmem:[%s7 + $0x328] sm:$0xff]
      %v2854 = vld [vmem:[%s7 + $0x330] sm:$0xff]
      %v2855 = vld [vmem:[%s7 + $0x338] sm:$0xff]
      %v2856 = vld [vmem:[%s7 + $0x340] sm:$0xff]
      %v2857 = vld [vmem:[%s7 + $0x348] sm:$0xff]
      %v2858 = vld [vmem:[%s7 + $0x350] sm:$0xff]
      %v2859 = vld [vmem:[%s7 + $0x358] sm:$0xff]
      %v2860 = vld [vmem:[%s7 + $0x360] sm:$0xff]
      %v2861 = vld [vmem:[%s7 + $0x368] sm:$0xff]
      %v2862 = vld [vmem:[%s7 + $0x370] sm:$0xff]
      %v2863 = vld [vmem:[%s7 + $0x378] sm:$0xff]
      %v2864 = vld [vmem:[%s7 + $0x380] sm:$0xff]
      %v2865 = vld [vmem:[%s7 + $0x388] sm:$0xff]
      %v2866 = vld [vmem:[%s7 + $0x390] sm:$0xff]
      %v2867 = vld [vmem:[%s7 + $0x398] sm:$0xff]
      %v2868 = vld [vmem:[%s7 + $0x3a0] sm:$0xff]
      %v2869 = vld [vmem:[%s7 + $0x3a8] sm:$0xff]
      %v2870 = vld [vmem:[%s7 + $0x3b0] sm:$0xff]
      %v2871 = vld [vmem:[%s7 + $0x3b8] sm:$0xff]
      %v2872 = vld [vmem:[%s7 + $0x3c0] sm:$0xff]
      %v2873 = vld [vmem:[%s7 + $0x3c8] sm:$0xff]
      %v2874 = vld [vmem:[%s7 + $0x3d0] sm:$0xff]
      %v2875 = vld [vmem:[%s7 + $0x3d8] sm:$0xff]
      %v2876 = vld [vmem:[%s7 + $0x3e0] sm:$0xff]
      %v2877 = vld [vmem:[%s7 + $0x3e8] sm:$0xff]
      %v2878 = vld [vmem:[%s7 + $0x3f0] sm:$0xff]
      %v2879 = vld [vmem:[%s7 + $0x3f8] sm:$0xff]
      %v2880 = vld [vmem:[%s7 + $0x400] sm:$0xff]
      %v2881 = vld [vmem:[%s7 + $0x408] sm:$0xff]
      %v2882 = vld [vmem:[%s7 + $0x410] sm:$0xff]
      %v2883 = vld [vmem:[%s7 + $0x418] sm:$0xff]
      %v2884 = vld [vmem:[%s7 + $0x420] sm:$0xff]
      %v2885 = vld [vmem:[%s7 + $0x428] sm:$0xff]
      %v2886 = vld [vmem:[%s7 + $0x430] sm:$0xff]
      %v2887 = vld [vmem:[%s7 + $0x438] sm:$0xff]
      %v2888 = vld [vmem:[%s7 + $0x440] sm:$0xff]
      %v2889 = vld [vmem:[%s7 + $0x448] sm:$0xff]
      %v2890 = vld [vmem:[%s7 + $0x450] sm:$0xff]
      %v2891 = vld [vmem:[%s7 + $0x458] sm:$0xff]
      %v2892 = vld [vmem:[%s7 + $0x460] sm:$0xff]
      %v2893 = vld [vmem:[%s7 + $0x468] sm:$0xff]
      %v2894 = vld [vmem:[%s7 + $0x470] sm:$0xff]
      %v2895 = vld [vmem:[%s7 + $0x478] sm:$0xff]
      %v2896 = vld [vmem:[%s7 + $0x480] sm:$0xff]
      %v2897 = vld [vmem:[%s7 + $0x488] sm:$0xff]
      %v2898 = vld [vmem:[%s7 + $0x490] sm:$0xff]
      %v2899 = vld [vmem:[%s7 + $0x498] sm:$0xff]
      %v2900 = vld [vmem:[%s7 + $0x4a0] sm:$0xff]
      %v2901 = vld [vmem:[%s7 + $0x4a8] sm:$0xff]
      %v2902 = vld [vmem:[%s7 + $0x4b0] sm:$0xff]
      %v2903 = vld [vmem:[%s7 + $0x4b8] sm:$0xff]
      %v2904 = vld [vmem:[%s7 + $0x4c0] sm:$0xff]
      %v2905 = vld [vmem:[%s7 + $0x4c8] sm:$0xff]
      %v2906 = vld [vmem:[%s7 + $0x4d0] sm:$0xff]
      %v2907 = vld [vmem:[%s7 + $0x4d8] sm:$0xff]
      %v2908 = vld [vmem:[%s7 + $0x4e0] sm:$0xff]
      %v2909 = vld [vmem:[%s7 + $0x4e8] sm:$0xff]
      %v2910 = vld [vmem:[%s7 + $0x4f0] sm:$0xff]
      %v2911 = vld [vmem:[%s7 + $0x4f8] sm:$0xff]
      %v2912 = vld [vmem:[%s7 + $0x500] sm:$0xff]
      %v2913 = vld [vmem:[%s7 + $0x508] sm:$0xff]
      %v2914 = vld [vmem:[%s7 + $0x510] sm:$0xff]
      %v2915 = vld [vmem:[%s7 + $0x518] sm:$0xff]
      %v2916 = vld [vmem:[%s7 + $0x520] sm:$0xff]
      %v2917 = vld [vmem:[%s7 + $0x528] sm:$0xff]
      %v2918 = vld [vmem:[%s7 + $0x530] sm:$0xff]
      %v2919 = vld [vmem:[%s7 + $0x538] sm:$0xff]
      %v2920 = vld [vmem:[%s7 + $0x540] sm:$0xff]
      %v2921 = vld [vmem:[%s7 + $0x548] sm:$0xff]
      %v2922 = vld [vmem:[%s7 + $0x550] sm:$0xff]
      %v2923 = vld [vmem:[%s7 + $0x558] sm:$0xff]
      %v2924 = vld [vmem:[%s7 + $0x560] sm:$0xff]
      %v2925 = vld [vmem:[%s7 + $0x568] sm:$0xff]
      %v2926 = vld [vmem:[%s7 + $0x570] sm:$0xff]
      %v2927 = vld [vmem:[%s7 + $0x578] sm:$0xff]
      %v2928 = vld [vmem:[%s7 + $0x580] sm:$0xff]
      %v2929 = vld [vmem:[%s7 + $0x588] sm:$0xff]
      %v2930 = vld [vmem:[%s7 + $0x590] sm:$0xff]
      %v2931 = vld [vmem:[%s7 + $0x598] sm:$0xff]
      %v2932 = vld [vmem:[%s7 + $0x5a0] sm:$0xff]
      %v2933 = vld [vmem:[%s7 + $0x5a8] sm:$0xff]
      %v2934 = vld [vmem:[%s7 + $0x5b0] sm:$0xff]
      %v2935 = vld [vmem:[%s7 + $0x5b8] sm:$0xff]
      %v2936 = vld [vmem:[%s7 + $0x5c0] sm:$0xff]
      %v2937 = vld [vmem:[%s7 + $0x5c8] sm:$0xff]
      %v2938 = vld [vmem:[%s7 + $0x5d0] sm:$0xff]
      %v2939 = vld [vmem:[%s7 + $0x5d8] sm:$0xff]
      %v2940 = vld [vmem:[%s7 + $0x5e0] sm:$0xff]
      %v2941 = vld [vmem:[%s7 + $0x5e8] sm:$0xff]
      %v2942 = vld [vmem:[%s7 + $0x5f0] sm:$0xff]
      %v2943 = vld [vmem:[%s7 + $0x5f8] sm:$0xff]
      %v2944 = vld [vmem:[%s7 + $0x600] sm:$0xff]
      %v2945 = vld [vmem:[%s7 + $0x608] sm:$0xff]
      %v2946 = vld [vmem:[%s7 + $0x610] sm:$0xff]
      %v2947 = vld [vmem:[%s7 + $0x618] sm:$0xff]
      %v2948 = vld [vmem:[%s7 + $0x620] sm:$0xff]
      %v2949 = vld [vmem:[%s7 + $0x628] sm:$0xff]
      %v2950 = vld [vmem:[%s7 + $0x630] sm:$0xff]
      %v2951 = vld [vmem:[%s7 + $0x638] sm:$0xff]
      %v2952 = vld [vmem:[%s7 + $0x640] sm:$0xff]
      %v2953 = vld [vmem:[%s7 + $0x648] sm:$0xff]
      %v2954 = vld [vmem:[%s7 + $0x650] sm:$0xff]
      %v2955 = vld [vmem:[%s7 + $0x658] sm:$0xff]
      %v2956 = vld [vmem:[%s7 + $0x660] sm:$0xff]
      %v2957 = vld [vmem:[%s7 + $0x668] sm:$0xff]
      %v2958 = vld [vmem:[%s7 + $0x670] sm:$0xff]
      %v2959 = vld [vmem:[%s7 + $0x678] sm:$0xff]
      %v2960 = vld [vmem:[%s7 + $0x680] sm:$0xff]
      %v2961 = vld [vmem:[%s7 + $0x688] sm:$0xff]
      %v2962 = vld [vmem:[%s7 + $0x690] sm:$0xff]
      %v2963 = vld [vmem:[%s7 + $0x698] sm:$0xff]
      %v2964 = vld [vmem:[%s7 + $0x6a0] sm:$0xff]
      %v2965 = vld [vmem:[%s7 + $0x6a8] sm:$0xff]
      %v2966 = vld [vmem:[%s7 + $0x6b0] sm:$0xff]
      %v2967 = vld [vmem:[%s7 + $0x6b8] sm:$0xff]
      %v2968 = vld [vmem:[%s7 + $0x6c0] sm:$0xff]
      %v2969 = vld [vmem:[%s7 + $0x6c8] sm:$0xff]
      %v2970 = vld [vmem:[%s7 + $0x6d0] sm:$0xff]
      %v2971 = vld [vmem:[%s7 + $0x6d8] sm:$0xff]
      %v2972 = vld [vmem:[%s7 + $0x6e0] sm:$0xff]
      %v2973 = vld [vmem:[%s7 + $0x6e8] sm:$0xff]
      %v2974 = vld [vmem:[%s7 + $0x6f0] sm:$0xff]
      %v2975 = vld [vmem:[%s7 + $0x6f8] sm:$0xff]
      %v2976 = vld [vmem:[%s7 + $0x700] sm:$0xff]
      %v2977 = vld [vmem:[%s7 + $0x708] sm:$0xff]
      %v2978 = vld [vmem:[%s7 + $0x710] sm:$0xff]
      %v2979 = vld [vmem:[%s7 + $0x718] sm:$0xff]
      %v2980 = vld [vmem:[%s7 + $0x720] sm:$0xff]
      %v2981 = vld [vmem:[%s7 + $0x728] sm:$0xff]
      %v2982 = vld [vmem:[%s7 + $0x730] sm:$0xff]
      %v2983 = vld [vmem:[%s7 + $0x738] sm:$0xff]
      %v2984 = vld [vmem:[%s7 + $0x740] sm:$0xff]
      %v2985 = vld [vmem:[%s7 + $0x748] sm:$0xff]
      %v2986 = vld [vmem:[%s7 + $0x750] sm:$0xff]
      %v2987 = vld [vmem:[%s7 + $0x758] sm:$0xff]
      %v2988 = vld [vmem:[%s7 + $0x760] sm:$0xff]
      %v2989 = vld [vmem:[%s7 + $0x768] sm:$0xff]
      %v2990 = vld [vmem:[%s7 + $0x770] sm:$0xff]
      %v2991 = vld [vmem:[%s7 + $0x778] sm:$0xff]
      %v2992 = vld [vmem:[%s7 + $0x780] sm:$0xff]
      %v2993 = vld [vmem:[%s7 + $0x788] sm:$0xff]
      %v2994 = vld [vmem:[%s7 + $0x790] sm:$0xff]
      %v2995 = vld [vmem:[%s7 + $0x798] sm:$0xff]
      %v2996 = vld [vmem:[%s7 + $0x7a0] sm:$0xff]
      %v2997 = vld [vmem:[%s7 + $0x7a8] sm:$0xff]
      %v2998 = vld [vmem:[%s7 + $0x7b0] sm:$0xff]
      %v2999 = vld [vmem:[%s7 + $0x7b8] sm:$0xff]
      %v3000 = vld [vmem:[%s7 + $0x7c0] sm:$0xff]
      %v3001 = vld [vmem:[%s7 + $0x7c8] sm:$0xff]
      %v3002 = vld [vmem:[%s7 + $0x7d0] sm:$0xff]
      %v3003 = vld [vmem:[%s7 + $0x7d8] sm:$0xff]
      %v3004 = vld [vmem:[%s7 + $0x7e0] sm:$0xff]
      %v3005 = vld [vmem:[%s7 + $0x7e8] sm:$0xff]
      %v3006 = vld [vmem:[%s7 + $0x7f0] sm:$0xff]
      %v3007 = vld [vmem:[%s7 + $0x7f8] sm:$0xff]
      %v3008 = vld [vmem:[%s7 + $0x800] sm:$0xff]
      %v3009 = vld [vmem:[%s7 + $0x808] sm:$0xff]
      %v3010 = vld [vmem:[%s7 + $0x810] sm:$0xff]
      %v3011 = vld [vmem:[%s7 + $0x818] sm:$0xff]
      %v3012 = vld [vmem:[%s7 + $0x820] sm:$0xff]
      %v3013 = vld [vmem:[%s7 + $0x828] sm:$0xff]
      %v3014 = vld [vmem:[%s7 + $0x830] sm:$0xff]
      %v3015 = vld [vmem:[%s7 + $0x838] sm:$0xff]
      %v3016 = vld [vmem:[%s7 + $0x840] sm:$0xff]
      %v3017 = vld [vmem:[%s7 + $0x848] sm:$0xff]
      %v3018 = vld [vmem:[%s7 + $0x850] sm:$0xff]
      %v3019 = vld [vmem:[%s7 + $0x858] sm:$0xff]
      %v3020 = vld [vmem:[%s7 + $0x860] sm:$0xff]
      %v3021 = vld [vmem:[%s7 + $0x868] sm:$0xff]
      %v3022 = vld [vmem:[%s7 + $0x870] sm:$0xff]
      %v3023 = vld [vmem:[%s7 + $0x878] sm:$0xff]
      %v3024 = vld [vmem:[%s7 + $0x880] sm:$0xff]
      %v3025 = vld [vmem:[%s7 + $0x888] sm:$0xff]
      %v3026 = vld [vmem:[%s7 + $0x890] sm:$0xff]
      %v3027 = vld [vmem:[%s7 + $0x898] sm:$0xff]
      %v3028 = vld [vmem:[%s7 + $0x8a0] sm:$0xff]
      %v3029 = vld [vmem:[%s7 + $0x8a8] sm:$0xff]
      %v3030 = vld [vmem:[%s7 + $0x8b0] sm:$0xff]
      %v3031 = vld [vmem:[%s7 + $0x8b8] sm:$0xff]
      %v3032 = vld [vmem:[%s7 + $0x8c0] sm:$0xff]
      %v3033 = vld [vmem:[%s7 + $0x8c8] sm:$0xff]
      %v3034 = vld [vmem:[%s7 + $0x8d0] sm:$0xff]
      %v3035 = vld [vmem:[%s7 + $0x8d8] sm:$0xff]
      %v3036 = vld [vmem:[%s7 + $0x8e0] sm:$0xff]
      %v3037 = vld [vmem:[%s7 + $0x8e8] sm:$0xff]
      %v3038 = vld [vmem:[%s7 + $0x8f0] sm:$0xff]
      %v3039 = vld [vmem:[%s7 + $0x8f8] sm:$0xff]
      %v3040 = vld [vmem:[%s7 + $0x900] sm:$0xff]
      %v3041 = vld [vmem:[%s7 + $0x908] sm:$0xff]
      %v3042 = vld [vmem:[%s7 + $0x910] sm:$0xff]
      %v3043 = vld [vmem:[%s7 + $0x918] sm:$0xff]
      %v3044 = vld [vmem:[%s7 + $0x920] sm:$0xff]
      %v3045 = vld [vmem:[%s7 + $0x928] sm:$0xff]
      %v3046 = vld [vmem:[%s7 + $0x930] sm:$0xff]
      %v3047 = vld [vmem:[%s7 + $0x938] sm:$0xff]
      %v3048 = vld [vmem:[%s7 + $0x940] sm:$0xff]
      %v3049 = vld [vmem:[%s7 + $0x948] sm:$0xff]
      %v3050 = vld [vmem:[%s7 + $0x950] sm:$0xff]
      %v3051 = vld [vmem:[%s7 + $0x958] sm:$0xff]
      %v3052 = vld [vmem:[%s7 + $0x960] sm:$0xff]
      %v3053 = vld [vmem:[%s7 + $0x968] sm:$0xff]
      %v3054 = vld [vmem:[%s7 + $0x970] sm:$0xff]
      %v3055 = vld [vmem:[%s7 + $0x978] sm:$0xff]
      %v3056 = vld [vmem:[%s7 + $0x980] sm:$0xff]
      %v3057 = vld [vmem:[%s7 + $0x988] sm:$0xff]
      %v3058 = vld [vmem:[%s7 + $0x990] sm:$0xff]
      %v3059 = vld [vmem:[%s7 + $0x998] sm:$0xff]
      %v3060 = vld [vmem:[%s7 + $0x9a0] sm:$0xff]
      %v3061 = vld [vmem:[%s7 + $0x9a8] sm:$0xff]
      %v3062 = vld [vmem:[%s7 + $0x9b0] sm:$0xff]
      %v3063 = vld [vmem:[%s7 + $0x9b8] sm:$0xff]
      %v3064 = vld [vmem:[%s7 + $0x9c0] sm:$0xff]
      %v3065 = vld [vmem:[%s7 + $0x9c8] sm:$0xff]
      %v3066 = vld [vmem:[%s7 + $0x9d0] sm:$0xff]
      %v3067 = vld [vmem:[%s7 + $0x9d8] sm:$0xff]
      %v3068 = vld [vmem:[%s7 + $0x9e0] sm:$0xff]
      %v3069 = vld [vmem:[%s7 + $0x9e8] sm:$0xff]
      %v3070 = vld [vmem:[%s7 + $0x9f0] sm:$0xff]
      %v3071 = vld [vmem:[%s7 + $0x9f8] sm:$0xff]
      %v3072 = vld [vmem:[%s7 + $0xa00] sm:$0xff]
      %v3073 = vld [vmem:[%s7 + $0xa08] sm:$0xff]
      %v3074 = vld [vmem:[%s7 + $0xa10] sm:$0xff]
      %v3075 = vld [vmem:[%s7 + $0xa18] sm:$0xff]
      %v3076 = vld [vmem:[%s7 + $0xa20] sm:$0xff]
      %v3077 = vld [vmem:[%s7 + $0xa28] sm:$0xff]
      %v3078 = vld [vmem:[%s7 + $0xa30] sm:$0xff]
      %v3079 = vld [vmem:[%s7 + $0xa38] sm:$0xff]
      %v3080 = vld [vmem:[%s7 + $0xa40] sm:$0xff]
      %v3081 = vld [vmem:[%s7 + $0xa48] sm:$0xff]
      %v3082 = vld [vmem:[%s7 + $0xa50] sm:$0xff]
      %v3083 = vld [vmem:[%s7 + $0xa58] sm:$0xff]
      %v3084 = vld [vmem:[%s7 + $0xa60] sm:$0xff]
      %v3085 = vld [vmem:[%s7 + $0xa68] sm:$0xff]
      %v3086 = vld [vmem:[%s7 + $0xa70] sm:$0xff]
      %v3087 = vld [vmem:[%s7 + $0xa78] sm:$0xff]
      %v3088 = vld [vmem:[%s7 + $0xa80] sm:$0xff]
      %v3089 = vld [vmem:[%s7 + $0xa88] sm:$0xff]
      %v3090 = vld [vmem:[%s7 + $0xa90] sm:$0xff]
      %v3091 = vld [vmem:[%s7 + $0xa98] sm:$0xff]
      %v3092 = vld [vmem:[%s7 + $0xaa0] sm:$0xff]
      %v3093 = vld [vmem:[%s7 + $0xaa8] sm:$0xff]
      %v3094 = vld [vmem:[%s7 + $0xab0] sm:$0xff]
      %v3095 = vld [vmem:[%s7 + $0xab8] sm:$0xff]
      %v3096 = vld [vmem:[%s7 + $0xac0] sm:$0xff]
      %v3097 = vld [vmem:[%s7 + $0xac8] sm:$0xff]
      %v3098 = vld [vmem:[%s7 + $0xad0] sm:$0xff]
      %v3099 = vld [vmem:[%s7 + $0xad8] sm:$0xff]
      %v3100 = vld [vmem:[%s7 + $0xae0] sm:$0xff]
      %v3101 = vld [vmem:[%s7 + $0xae8] sm:$0xff]
      %v3102 = vld [vmem:[%s7 + $0xaf0] sm:$0xff]
      %v3103 = vld [vmem:[%s7 + $0xaf8] sm:$0xff]
      %v3104 = vld [vmem:[%s7 + $0xb00] sm:$0xff]
      %v3105 = vld [vmem:[%s7 + $0xb08] sm:$0xff]
      %v3106 = vld [vmem:[%s7 + $0xb10] sm:$0xff]
      %v3107 = vld [vmem:[%s7 + $0xb18] sm:$0xff]
      %v3108 = vld [vmem:[%s7 + $0xb20] sm:$0xff]
      %v3109 = vld [vmem:[%s7 + $0xb28] sm:$0xff]
      %v3110 = vld [vmem:[%s7 + $0xb30] sm:$0xff]
      %v3111 = vld [vmem:[%s7 + $0xb38] sm:$0xff]
      %v3112 = vld [vmem:[%s7 + $0xb40] sm:$0xff]
      %v3113 = vld [vmem:[%s7 + $0xb48] sm:$0xff]
      %v3114 = vld [vmem:[%s7 + $0xb50] sm:$0xff]
      %v3115 = vld [vmem:[%s7 + $0xb58] sm:$0xff]
      %v3116 = vld [vmem:[%s7 + $0xb60] sm:$0xff]
      %v3117 = vld [vmem:[%s7 + $0xb68] sm:$0xff]
      %v3118 = vld [vmem:[%s7 + $0xb70] sm:$0xff]
      %v3119 = vld [vmem:[%s7 + $0xb78] sm:$0xff]
      %v3120 = vld [vmem:[%s7 + $0xb80] sm:$0xff]
      %v3121 = vld [vmem:[%s7 + $0xb88] sm:$0xff]
      %v3122 = vld [vmem:[%s7 + $0xb90] sm:$0xff]
      %v3123 = vld [vmem:[%s7 + $0xb98] sm:$0xff]
      %v3124 = vld [vmem:[%s7 + $0xba0] sm:$0xff]
      %v3125 = vld [vmem:[%s7 + $0xba8] sm:$0xff]
      %v3126 = vld [vmem:[%s7 + $0xbb0] sm:$0xff]
      %v3127 = vld [vmem:[%s7 + $0xbb8] sm:$0xff]
      %v3128 = vld [vmem:[%s7 + $0xbc0] sm:$0xff]
      %v3129 = vld [vmem:[%s7 + $0xbc8] sm:$0xff]
      %v3130 = vld [vmem:[%s7 + $0xbd0] sm:$0xff]
      %v3131 = vld [vmem:[%s7 + $0xbd8] sm:$0xff]
      %v3132 = vld [vmem:[%s7 + $0xbe0] sm:$0xff]
      %v3133 = vld [vmem:[%s7 + $0xbe8] sm:$0xff]
      %v3134 = vld [vmem:[%s7 + $0xbf0] sm:$0xff]
      %v3135 = vld [vmem:[%s7 + $0xbf8] sm:$0xff]
      %v3136 = vld [vmem:[%s7 + $0xc00] sm:$0xff]
      %v3137 = vld [vmem:[%s7 + $0xc08] sm:$0xff]
      %v3138 = vld [vmem:[%s7 + $0xc10] sm:$0xff]
      %v3139 = vld [vmem:[%s7 + $0xc18] sm:$0xff]
      %v3140 = vld [vmem:[%s7 + $0xc20] sm:$0xff]
      %v3141 = vld [vmem:[%s7 + $0xc28] sm:$0xff]
      %v3142 = vld [vmem:[%s7 + $0xc30] sm:$0xff]
      %v3143 = vld [vmem:[%s7 + $0xc38] sm:$0xff]
      %v3144 = vld [vmem:[%s7 + $0xc40] sm:$0xff]
      %v3145 = vld [vmem:[%s7 + $0xc48] sm:$0xff]
      %v3146 = vld [vmem:[%s7 + $0xc50] sm:$0xff]
      %v3147 = vld [vmem:[%s7 + $0xc58] sm:$0xff]
      %v3148 = vld [vmem:[%s7 + $0xc60] sm:$0xff]
      %v3149 = vld [vmem:[%s7 + $0xc68] sm:$0xff]
      %v3150 = vld [vmem:[%s7 + $0xc70] sm:$0xff]
      %v3151 = vld [vmem:[%s7 + $0xc78] sm:$0xff]
      %v3152 = vld [vmem:[%s7 + $0xc80] sm:$0xf]
      %v3153 = vld [vmem:[%s7 + $0xc88] sm:$0xf]
      %v3154 = vld [vmem:[%s7 + $0xc90] sm:$0xf]
      %v3155 = vld [vmem:[%s7 + $0xc98] sm:$0xf]
      %v3156 = vld [vmem:[%s7 + $0xca0] sm:$0xf]
      %v3157 = vld [vmem:[%s7 + $0xca8] sm:$0xf]
      %v3158 = vld [vmem:[%s7 + $0xcb0] sm:$0xf]
      %v3159 = vld [vmem:[%s7 + $0xcb8] sm:$0xf]
      %v3160 = vld [vmem:[%s7 + $0xcc0] sm:$0xf]
      %v3161 = vld [vmem:[%s7 + $0xcc8] sm:$0xf]
      %v3162 = vld [vmem:[%s718] sm:$0xff]
      %v3163 = vld [vmem:[%s718 + $0x8] sm:$0xff]
      %v3164 = vld [vmem:[%s718 + $0x10] sm:$0xff]
      %v3165 = vld [vmem:[%s718 + $0x18] sm:$0xff]
      %v3166 = vld [vmem:[%s718 + $0x20] sm:$0xff]
      %v3167 = vld [vmem:[%s718 + $0x28] sm:$0xff]
      %v3168 = vld [vmem:[%s718 + $0x30] sm:$0xff]
      %v3169 = vld [vmem:[%s718 + $0x38] sm:$0xff]
      %v3170 = vld [vmem:[%s718 + $0x40] sm:$0xff]
      %v3171 = vld [vmem:[%s718 + $0x48] sm:$0xff]
      %vm3172 = vcmask 556032
      %v3174 = vsel %vm3172, %v2751, 0
      %v3177 = vsel %vm1795, %v3152, 0
      %v3180 = vsel %vm1795, %v3153, 0
      %v3183 = vsel %vm1795, %v3154, 0
      %v3186 = vsel %vm1795, %v3155, 0
      %v3189 = vsel %vm1795, %v3156, 0
      %v3192 = vsel %vm1795, %v3157, 0
      %v3195 = vsel %vm1795, %v3158, 0
      %v3198 = vsel %vm1795, %v3159, 0
      %v3201 = vsel %vm1795, %v3160, 0
      %v3204 = vsel %vm1795, %v3161, 0
      %3206 = vmatprep.subr.mxu0 %v2753
      %3207 = vmatpush1.msra.mxu0 %v2752
      %3208 = vmatprep.subr.mxu0 %v2763
      %3209 = vmatpush1.msra.mxu0 %v2762
      %3210 = vmatprep.subr.mxu0 %v2773
      %3211 = vmatpush1.msra.mxu0 %v2772
      %3212 = vmatprep.subr.mxu0 %v2783
      %3213 = vmatpush1.msra.mxu0 %v2782
      %3214 = vmatprep.subr.mxu0 %v2793
      %3215 = vmatpush1.msra.mxu0 %v2792
      %3216 = vmatprep.subr.mxu0 %v2803
      %3217 = vmatpush1.msra.mxu0 %v2802
      %3218 = vmatprep.subr.mxu0 %v2813
      %3219 = vmatpush1.msra.mxu0 %v2812
      %3220 = vmatprep.subr.mxu0 %v2823
      %3221 = vmatpush1.msra.mxu0 %v2822
      %3222 = vmatprep.subr.mxu0 %v2833
      %3223 = vmatpush1.msra.mxu0 %v2832
      %3224 = vmatprep.subr.mxu0 %v2843
      %3225 = vmatpush1.msra.mxu0 %v2842
      %3226 = vmatprep.subr.mxu0 %v2853
      %3227 = vmatpush1.msra.mxu0 %v2852
      %3228 = vmatprep.subr.mxu0 %v2863
      %3229 = vmatpush1.msra.mxu0 %v2862
      %3230 = vmatprep.subr.mxu0 %v2873
      %3231 = vmatpush1.msra.mxu0 %v2872
      %3232 = vmatprep.subr.mxu0 %v2883
      %3233 = vmatpush1.msra.mxu0 %v2882
      %3234 = vmatprep.subr.mxu0 %v2893
      %3235 = vmatpush1.msra.mxu0 %v2892
      %3236 = vmatprep.subr.mxu0 %v2903
      %3237 = vmatpush1.msra.mxu0 %v2902
      %3238 = vmatprep.subr.mxu0 %v2913
      %3239 = vmatpush1.msra.mxu0 %v2912
      %3240 = vmatprep.subr.mxu0 %v2923
      %3241 = vmatpush1.msra.mxu0 %v2922
      %3242 = vmatprep.subr.mxu0 %v2933
      %3243 = vmatpush1.msra.mxu0 %v2932
      %3244 = vmatprep.subr.mxu0 %v2943
      %3245 = vmatpush1.msra.mxu0 %v2942
      %3246 = vmatprep.subr.mxu0 %v2953
      %3247 = vmatpush1.msra.mxu0 %v2952
      %3248 = vmatprep.subr.mxu0 %v2963
      %3249 = vmatpush1.msra.mxu0 %v2962
      %3250 = vmatprep.subr.mxu0 %v2973
      %3251 = vmatpush1.msra.mxu0 %v2972
      %3252 = vmatprep.subr.mxu0 %v2983
      %3253 = vmatpush1.msra.mxu0 %v2982
      %3254 = vmatprep.subr.mxu0 %v2993
      %3255 = vmatpush1.msra.mxu0 %v2992
      %3256 = vmatprep.subr.mxu0 %v3003
      %3257 = vmatpush1.msra.mxu0 %v3002
      %3258 = vmatprep.subr.mxu0 %v3013
      %3259 = vmatpush1.msra.mxu0 %v3012
      %3260 = vmatprep.subr.mxu0 %v3023
      %3261 = vmatpush1.msra.mxu0 %v3022
      %3262 = vmatprep.subr.mxu0 %v3033
      %3263 = vmatpush1.msra.mxu0 %v3032
      %3264 = vmatprep.subr.mxu0 %v3043
      %3265 = vmatpush1.msra.mxu0 %v3042
      %3266 = vmatprep.subr.mxu0 %v3053
      %3267 = vmatpush1.msra.mxu0 %v3052
      %3268 = vmatprep.subr.mxu0 %v3063
      %3269 = vmatpush1.msra.mxu0 %v3062
      %3270 = vmatprep.mubr.f32.mxu0 %v2750
      %3271 = vmatmul.mubr.f32.gmra.mrb[0].mxu0 %v2749
      %v3272 = vpop.f32.mrb[0].mxu0
      %v3273 = vadd.f32 %v3162, %v3272
      %v3274 = vpop.f32.mrb[0].mxu0
      %v3275 = vadd.f32 %v3163, %v3274
      %3276 = vdwg.mxu0
      %3277 = vmatprep.subr.mxu0 %v3073
      %3278 = vmatpush1.msra.mxu0 %v3072
      %3279 = vmatprep.subr.mxu0 %v3083
      %3280 = vmatpush1.msra.mxu0 %v3082
      %3281 = vmatprep.subr.mxu0 %v3093
      %3282 = vmatpush1.msra.mxu0 %v3092
      %3283 = vmatprep.subr.mxu0 %v3103
      %3284 = vmatpush1.msra.mxu0 %v3102
      %3285 = vmatprep.subr.mxu0 %v3113
      %3286 = vmatpush1.msra.mxu0 %v3112
      %3287 = vmatprep.subr.mxu0 %v3123
      %3288 = vmatpush1.msra.mxu0 %v3122
      %3289 = vmatprep.subr.mxu0 %v3133
      %3290 = vmatpush1.msra.mxu0 %v3132
      %3291 = vmatprep.subr.mxu0 %v3143
      %3292 = vmatpush1.msra.mxu0 %v3142
      %3293 = vmatprep.subr.mxu0 %v3180
      %3294 = vmatpush1.msra.mxu0 %v3177
      %3295 = vmatprep.subr.mxu0 0.0
      %3296 = vmatpush1.msra.mxu0 0.0
      %3297 = vmatprep.subr.mxu0 0.0
      %3298 = vmatpush1.msra.mxu0 0.0
      %3299 = vmatprep.subr.mxu0 0.0
      %3300 = vmatpush1.msra.mxu0 0.0
      %3301 = vmatprep.subr.mxu0 0.0
      %3302 = vmatpush1.msra.mxu0 0.0
      %3303 = vmatprep.subr.mxu0 0.0
      %3304 = vmatpush1.msra.mxu0 0.0
      %3305 = vmatprep.subr.mxu0 0.0
      %3306 = vmatpush1.msra.mxu0 0.0
      %3307 = vmatprep.subr.mxu0 0.0
      %3308 = vmatpush1.msra.mxu0 0.0
      %3309 = vmatprep.subr.mxu0 0.0
      %3310 = vmatpush1.msra.mxu0 0.0
      %3311 = vmatprep.subr.mxu0 0.0
      %3312 = vmatpush1.msra.mxu0 0.0
      %3313 = vmatprep.subr.mxu0 0.0
      %3314 = vmatpush1.msra.mxu0 0.0
      %3315 = vmatprep.subr.mxu0 0.0
      %3316 = vmatpush1.msra.mxu0 0.0
      %3317 = vmatprep.subr.mxu0 0.0
      %3318 = vmatpush1.msra.mxu0 0.0
      %3319 = vmatprep.subr.mxu0 0.0
      %3320 = vmatpush1.msra.mxu0 0.0
      %3321 = vmatprep.subr.mxu0 0.0
      %3322 = vmatpush1.msra.mxu0 0.0
      %3323 = vmatprep.subr.mxu0 0.0
      %3324 = vmatpush1.msra.mxu0 0.0
      %3325 = vmatprep.subr.mxu0 0.0
      %3326 = vmatpush1.msra.mxu0 0.0
      %3327 = vmatprep.subr.mxu0 0.0
      %3328 = vmatpush1.msra.mxu0 0.0
      %3329 = vmatprep.subr.mxu0 0.0
      %3330 = vmatpush1.msra.mxu0 0.0
      %3331 = vmatprep.subr.mxu0 0.0
      %3332 = vmatpush1.msra.mxu0 0.0
      %3333 = vmatprep.subr.mxu0 0.0
      %3334 = vmatpush1.msra.mxu0 0.0
      %3335 = vmatprep.subr.mxu0 0.0
      %3336 = vmatpush1.msra.mxu0 0.0
      %3337 = vmatprep.subr.mxu0 0.0
      %3338 = vmatpush1.msra.mxu0 0.0
      %3339 = vmatprep.subr.mxu0 0.0
      %3340 = vmatpush1.msra.mxu0 0.0
      %3341 = vmatprep.mubr.f32.mxu0 0.0
      %3342 = vmatmul.mubr.f32.gmra.mrb[0].mxu0 %v3174
      %v3343 = vpop.f32.mrb[0].mxu0
      %v3344 = vadd.f32 %v3273, %v3343
      %v3345 = vpop.f32.mrb[0].mxu0
      %v3346 = vadd.f32 %v3275, %v3345
      %3347 = vdwg.mxu0
      %3348 = vmatprep.subr.mxu0 %v2755
      %3349 = vmatpush1.msra.mxu0 %v2754
      %3350 = vmatprep.subr.mxu0 %v2765
      %3351 = vmatpush1.msra.mxu0 %v2764
      %3352 = vmatprep.subr.mxu0 %v2775
      %3353 = vmatpush1.msra.mxu0 %v2774
      %3354 = vmatprep.subr.mxu0 %v2785
      %3355 = vmatpush1.msra.mxu0 %v2784
      %3356 = vmatprep.subr.mxu0 %v2795
      %3357 = vmatpush1.msra.mxu0 %v2794
      %3358 = vmatprep.subr.mxu0 %v2805
      %3359 = vmatpush1.msra.mxu0 %v2804
      %3360 = vmatprep.subr.mxu0 %v2815
      %3361 = vmatpush1.msra.mxu0 %v2814
      %3362 = vmatprep.subr.mxu0 %v2825
      %3363 = vmatpush1.msra.mxu0 %v2824
      %3364 = vmatprep.subr.mxu0 %v2835
      %3365 = vmatpush1.msra.mxu0 %v2834
      %3366 = vmatprep.subr.mxu0 %v2845
      %3367 = vmatpush1.msra.mxu0 %v2844
      %3368 = vmatprep.subr.mxu0 %v2855
      %3369 = vmatpush1.msra.mxu0 %v2854
      %3370 = vmatprep.subr.mxu0 %v2865
      %3371 = vmatpush1.msra.mxu0 %v2864
      %3372 = vmatprep.subr.mxu0 %v2875
      %3373 = vmatpush1.msra.mxu0 %v2874
      %3374 = vmatprep.subr.mxu0 %v2885
      %3375 = vmatpush1.msra.mxu0 %v2884
      %3376 = vmatprep.subr.mxu0 %v2895
      %3377 = vmatpush1.msra.mxu0 %v2894
      %3378 = vmatprep.subr.mxu0 %v2905
      %3379 = vmatpush1.msra.mxu0 %v2904
      %3380 = vmatprep.subr.mxu0 %v2915
      %3381 = vmatpush1.msra.mxu0 %v2914
      %3382 = vmatprep.subr.mxu0 %v2925
      %3383 = vmatpush1.msra.mxu0 %v2924
      %3384 = vmatprep.subr.mxu0 %v2935
      %3385 = vmatpush1.msra.mxu0 %v2934
      %3386 = vmatprep.subr.mxu0 %v2945
      %3387 = vmatpush1.msra.mxu0 %v2944
      %3388 = vmatprep.subr.mxu0 %v2955
      %3389 = vmatpush1.msra.mxu0 %v2954
      %3390 = vmatprep.subr.mxu0 %v2965
      %3391 = vmatpush1.msra.mxu0 %v2964
      %3392 = vmatprep.subr.mxu0 %v2975
      %3393 = vmatpush1.msra.mxu0 %v2974
      %3394 = vmatprep.subr.mxu0 %v2985
      %3395 = vmatpush1.msra.mxu0 %v2984
      %3396 = vmatprep.subr.mxu0 %v2995
      %3397 = vmatpush1.msra.mxu0 %v2994
      %3398 = vmatprep.subr.mxu0 %v3005
      %3399 = vmatpush1.msra.mxu0 %v3004
      %3400 = vmatprep.subr.mxu0 %v3015
      %3401 = vmatpush1.msra.mxu0 %v3014
      %3402 = vmatprep.subr.mxu0 %v3025
      %3403 = vmatpush1.msra.mxu0 %v3024
      %3404 = vmatprep.subr.mxu0 %v3035
      %3405 = vmatpush1.msra.mxu0 %v3034
      %3406 = vmatprep.subr.mxu0 %v3045
      %3407 = vmatpush1.msra.mxu0 %v3044
      %3408 = vmatprep.subr.mxu0 %v3055
      %3409 = vmatpush1.msra.mxu0 %v3054
      %3410 = vmatprep.subr.mxu0 %v3065
      %3411 = vmatpush1.msra.mxu0 %v3064
      %3412 = vmatprep.mubr.f32.mxu0 %v2750
      %3413 = vmatmul.mubr.f32.gmra.mrb[0].mxu0 %v2749
      %v3414 = vpop.f32.mrb[0].mxu0
      %v3415 = vadd.f32 %v3164, %v3414
      %v3416 = vpop.f32.mrb[0].mxu0
      %v3417 = vadd.f32 %v3165, %v3416
      %3418 = vdwg.mxu0
      %3419 = vmatprep.subr.mxu0 %v3075
      %3420 = vmatpush1.msra.mxu0 %v3074
      %3421 = vmatprep.subr.mxu0 %v3085
      %3422 = vmatpush1.msra.mxu0 %v3084
      %3423 = vmatprep.subr.mxu0 %v3095
      %3424 = vmatpush1.msra.mxu0 %v3094
      %3425 = vmatprep.subr.mxu0 %v3105
      %3426 = vmatpush1.msra.mxu0 %v3104
      %3427 = vmatprep.subr.mxu0 %v3115
      %3428 = vmatpush1.msra.mxu0 %v3114
      %3429 = vmatprep.subr.mxu0 %v3125
      %3430 = vmatpush1.msra.mxu0 %v3124
      %3431 = vmatprep.subr.mxu0 %v3135
      %3432 = vmatpush1.msra.mxu0 %v3134
      %3433 = vmatprep.subr.mxu0 %v3145
      %3434 = vmatpush1.msra.mxu0 %v3144
      %3435 = vmatprep.subr.mxu0 %v3186
      %3436 = vmatpush1.msra.mxu0 %v3183
      %3437 = vmatprep.subr.mxu0 0.0
      %3438 = vmatpush1.msra.mxu0 0.0
      %3439 = vmatprep.subr.mxu0 0.0
      %3440 = vmatpush1.msra.mxu0 0.0
      %3441 = vmatprep.subr.mxu0 0.0
      %3442 = vmatpush1.msra.mxu0 0.0
      %3443 = vmatprep.subr.mxu0 0.0
      %3444 = vmatpush1.msra.mxu0 0.0
      %3445 = vmatprep.subr.mxu0 0.0
      %3446 = vmatpush1.msra.mxu0 0.0
      %3447 = vmatprep.subr.mxu0 0.0
      %3448 = vmatpush1.msra.mxu0 0.0
      %3449 = vmatprep.subr.mxu0 0.0
      %3450 = vmatpush1.msra.mxu0 0.0
      %3451 = vmatprep.subr.mxu0 0.0
      %3452 = vmatpush1.msra.mxu0 0.0
      %3453 = vmatprep.subr.mxu0 0.0
      %3454 = vmatpush1.msra.mxu0 0.0
      %3455 = vmatprep.subr.mxu0 0.0
      %3456 = vmatpush1.msra.mxu0 0.0
      %3457 = vmatprep.subr.mxu0 0.0
      %3458 = vmatpush1.msra.mxu0 0.0
      %3459 = vmatprep.subr.mxu0 0.0
      %3460 = vmatpush1.msra.mxu0 0.0
      %3461 = vmatprep.subr.mxu0 0.0
      %3462 = vmatpush1.msra.mxu0 0.0
      %3463 = vmatprep.subr.mxu0 0.0
      %3464 = vmatpush1.msra.mxu0 0.0
      %3465 = vmatprep.subr.mxu0 0.0
      %3466 = vmatpush1.msra.mxu0 0.0
      %3467 = vmatprep.subr.mxu0 0.0
      %3468 = vmatpush1.msra.mxu0 0.0
      %3469 = vmatprep.subr.mxu0 0.0
      %3470 = vmatpush1.msra.mxu0 0.0
      %3471 = vmatprep.subr.mxu0 0.0
      %3472 = vmatpush1.msra.mxu0 0.0
      %3473 = vmatprep.subr.mxu0 0.0
      %3474 = vmatpush1.msra.mxu0 0.0
      %3475 = vmatprep.subr.mxu0 0.0
      %3476 = vmatpush1.msra.mxu0 0.0
      %3477 = vmatprep.subr.mxu0 0.0
      %3478 = vmatpush1.msra.mxu0 0.0
      %3479 = vmatprep.subr.mxu0 0.0
      %3480 = vmatpush1.msra.mxu0 0.0
      %3481 = vmatprep.subr.mxu0 0.0
      %3482 = vmatpush1.msra.mxu0 0.0
      %3483 = vmatprep.mubr.f32.mxu0 0.0
      %3484 = vmatmul.mubr.f32.gmra.mrb[0].mxu0 %v3174
      %v3485 = vpop.f32.mrb[0].mxu0
      %v3486 = vadd.f32 %v3415, %v3485
      %v3487 = vpop.f32.mrb[0].mxu0
      %v3488 = vadd.f32 %v3417, %v3487
      %3489 = vdwg.mxu0
      %3490 = vmatprep.subr.mxu0 %v2757
      %3491 = vmatpush1.msra.mxu0 %v2756
      %3492 = vmatprep.subr.mxu0 %v2767
      %3493 = vmatpush1.msra.mxu0 %v2766
      %3494 = vmatprep.subr.mxu0 %v2777
      %3495 = vmatpush1.msra.mxu0 %v2776
      %3496 = vmatprep.subr.mxu0 %v2787
      %3497 = vmatpush1.msra.mxu0 %v2786
      %3498 = vmatprep.subr.mxu0 %v2797
      %3499 = vmatpush1.msra.mxu0 %v2796
      %3500 = vmatprep.subr.mxu0 %v2807
      %3501 = vmatpush1.msra.mxu0 %v2806
      %3502 = vmatprep.subr.mxu0 %v2817
      %3503 = vmatpush1.msra.mxu0 %v2816
      %3504 = vmatprep.subr.mxu0 %v2827
      %3505 = vmatpush1.msra.mxu0 %v2826
      %3506 = vmatprep.subr.mxu0 %v2837
      %3507 = vmatpush1.msra.mxu0 %v2836
      %3508 = vmatprep.subr.mxu0 %v2847
      %3509 = vmatpush1.msra.mxu0 %v2846
      %3510 = vmatprep.subr.mxu0 %v2857
      %3511 = vmatpush1.msra.mxu0 %v2856
      %3512 = vmatprep.subr.mxu0 %v2867
      %3513 = vmatpush1.msra.mxu0 %v2866
      %3514 = vmatprep.subr.mxu0 %v2877
      %3515 = vmatpush1.msra.mxu0 %v2876
      %3516 = vmatprep.subr.mxu0 %v2887
      %3517 = vmatpush1.msra.mxu0 %v2886
      %3518 = vmatprep.subr.mxu0 %v2897
      %3519 = vmatpush1.msra.mxu0 %v2896
      %3520 = vmatprep.subr.mxu0 %v2907
      %3521 = vmatpush1.msra.mxu0 %v2906
      %3522 = vmatprep.subr.mxu0 %v2917
      %3523 = vmatpush1.msra.mxu0 %v2916
      %3524 = vmatprep.subr.mxu0 %v2927
      %3525 = vmatpush1.msra.mxu0 %v2926
      %3526 = vmatprep.subr.mxu0 %v2937
      %3527 = vmatpush1.msra.mxu0 %v2936
      %3528 = vmatprep.subr.mxu0 %v2947
      %3529 = vmatpush1.msra.mxu0 %v2946
      %3530 = vmatprep.subr.mxu0 %v2957
      %3531 = vmatpush1.msra.mxu0 %v2956
      %3532 = vmatprep.subr.mxu0 %v2967
      %3533 = vmatpush1.msra.mxu0 %v2966
      %3534 = vmatprep.subr.mxu0 %v2977
      %3535 = vmatpush1.msra.mxu0 %v2976
      %3536 = vmatprep.subr.mxu0 %v2987
      %3537 = vmatpush1.msra.mxu0 %v2986
      %3538 = vmatprep.subr.mxu0 %v2997
      %3539 = vmatpush1.msra.mxu0 %v2996
      %3540 = vmatprep.subr.mxu0 %v3007
      %3541 = vmatpush1.msra.mxu0 %v3006
      %3542 = vmatprep.subr.mxu0 %v3017
      %3543 = vmatpush1.msra.mxu0 %v3016
      %3544 = vmatprep.subr.mxu0 %v3027
      %3545 = vmatpush1.msra.mxu0 %v3026
      %3546 = vmatprep.subr.mxu0 %v3037
      %3547 = vmatpush1.msra.mxu0 %v3036
      %3548 = vmatprep.subr.mxu0 %v3047
      %3549 = vmatpush1.msra.mxu0 %v3046
      %3550 = vmatprep.subr.mxu0 %v3057
      %3551 = vmatpush1.msra.mxu0 %v3056
      %3552 = vmatprep.subr.mxu0 %v3067
      %3553 = vmatpush1.msra.mxu0 %v3066
      %3554 = vmatprep.mubr.f32.mxu0 %v2750
      %3555 = vmatmul.mubr.f32.gmra.mrb[0].mxu0 %v2749
      %v3556 = vpop.f32.mrb[0].mxu0
      %v3557 = vadd.f32 %v3166, %v3556
      %v3558 = vpop.f32.mrb[0].mxu0
      %v3559 = vadd.f32 %v3167, %v3558
      %3560 = vdwg.mxu0
      %3561 = vmatprep.subr.mxu0 %v3077
      %3562 = vmatpush1.msra.mxu0 %v3076
      %3563 = vmatprep.subr.mxu0 %v3087
      %3564 = vmatpush1.msra.mxu0 %v3086
      %3565 = vmatprep.subr.mxu0 %v3097
      %3566 = vmatpush1.msra.mxu0 %v3096
      %3567 = vmatprep.subr.mxu0 %v3107
      %3568 = vmatpush1.msra.mxu0 %v3106
      %3569 = vmatprep.subr.mxu0 %v3117
      %3570 = vmatpush1.msra.mxu0 %v3116
      %3571 = vmatprep.subr.mxu0 %v3127
      %3572 = vmatpush1.msra.mxu0 %v3126
      %3573 = vmatprep.subr.mxu0 %v3137
      %3574 = vmatpush1.msra.mxu0 %v3136
      %3575 = vmatprep.subr.mxu0 %v3147
      %3576 = vmatpush1.msra.mxu0 %v3146
      %3577 = vmatprep.subr.mxu0 %v3192
      %3578 = vmatpush1.msra.mxu0 %v3189
      %3579 = vmatprep.subr.mxu0 0.0
      %3580 = vmatpush1.msra.mxu0 0.0
      %3581 = vmatprep.subr.mxu0 0.0
      %3582 = vmatpush1.msra.mxu0 0.0
      %3583 = vmatprep.subr.mxu0 0.0
      %3584 = vmatpush1.msra.mxu0 0.0
      %3585 = vmatprep.subr.mxu0 0.0
      %3586 = vmatpush1.msra.mxu0 0.0
      %3587 = vmatprep.subr.mxu0 0.0
      %3588 = vmatpush1.msra.mxu0 0.0
      %3589 = vmatprep.subr.mxu0 0.0
      %3590 = vmatpush1.msra.mxu0 0.0
      %3591 = vmatprep.subr.mxu0 0.0
      %3592 = vmatpush1.msra.mxu0 0.0
      %3593 = vmatprep.subr.mxu0 0.0
      %3594 = vmatpush1.msra.mxu0 0.0
      %3595 = vmatprep.subr.mxu0 0.0
      %3596 = vmatpush1.msra.mxu0 0.0
      %3597 = vmatprep.subr.mxu0 0.0
      %3598 = vmatpush1.msra.mxu0 0.0
      %3599 = vmatprep.subr.mxu0 0.0
      %3600 = vmatpush1.msra.mxu0 0.0
      %3601 = vmatprep.subr.mxu0 0.0
      %3602 = vmatpush1.msra.mxu0 0.0
      %3603 = vmatprep.subr.mxu0 0.0
      %3604 = vmatpush1.msra.mxu0 0.0
      %3605 = vmatprep.subr.mxu0 0.0
      %3606 = vmatpush1.msra.mxu0 0.0
      %3607 = vmatprep.subr.mxu0 0.0
      %3608 = vmatpush1.msra.mxu0 0.0
      %3609 = vmatprep.subr.mxu0 0.0
      %3610 = vmatpush1.msra.mxu0 0.0
      %3611 = vmatprep.subr.mxu0 0.0
      %3612 = vmatpush1.msra.mxu0 0.0
      %3613 = vmatprep.subr.mxu0 0.0
      %3614 = vmatpush1.msra.mxu0 0.0
      %3615 = vmatprep.subr.mxu0 0.0
      %3616 = vmatpush1.msra.mxu0 0.0
      %3617 = vmatprep.subr.mxu0 0.0
      %3618 = vmatpush1.msra.mxu0 0.0
      %3619 = vmatprep.subr.mxu0 0.0
      %3620 = vmatpush1.msra.mxu0 0.0
      %3621 = vmatprep.subr.mxu0 0.0
      %3622 = vmatpush1.msra.mxu0 0.0
      %3623 = vmatprep.subr.mxu0 0.0
      %3624 = vmatpush1.msra.mxu0 0.0
      %3625 = vmatprep.mubr.f32.mxu0 0.0
      %3626 = vmatmul.mubr.f32.gmra.mrb[0].mxu0 %v3174
      %v3627 = vpop.f32.mrb[0].mxu0
      %v3628 = vadd.f32 %v3557, %v3627
      %v3629 = vpop.f32.mrb[0].mxu0
      %v3630 = vadd.f32 %v3559, %v3629
      %3631 = vdwg.mxu0
      %3632 = vmatprep.subr.mxu0 %v2759
      %3633 = vmatpush1.msra.mxu0 %v2758
      %3634 = vmatprep.subr.mxu0 %v2769
      %3635 = vmatpush1.msra.mxu0 %v2768
      %3636 = vmatprep.subr.mxu0 %v2779
      %3637 = vmatpush1.msra.mxu0 %v2778
      %3638 = vmatprep.subr.mxu0 %v2789
      %3639 = vmatpush1.msra.mxu0 %v2788
      %3640 = vmatprep.subr.mxu0 %v2799
      %3641 = vmatpush1.msra.mxu0 %v2798
      %3642 = vmatprep.subr.mxu0 %v2809
      %3643 = vmatpush1.msra.mxu0 %v2808
      %3644 = vmatprep.subr.mxu0 %v2819
      %3645 = vmatpush1.msra.mxu0 %v2818
      %3646 = vmatprep.subr.mxu0 %v2829
      %3647 = vmatpush1.msra.mxu0 %v2828
      %3648 = vmatprep.subr.mxu0 %v2839
      %3649 = vmatpush1.msra.mxu0 %v2838
      %3650 = vmatprep.subr.mxu0 %v2849
      %3651 = vmatpush1.msra.mxu0 %v2848
      %3652 = vmatprep.subr.mxu0 %v2859
      %3653 = vmatpush1.msra.mxu0 %v2858
      %3654 = vmatprep.subr.mxu0 %v2869
      %3655 = vmatpush1.msra.mxu0 %v2868
      %3656 = vmatprep.subr.mxu0 %v2879
      %3657 = vmatpush1.msra.mxu0 %v2878
      %3658 = vmatprep.subr.mxu0 %v2889
      %3659 = vmatpush1.msra.mxu0 %v2888
      %3660 = vmatprep.subr.mxu0 %v2899
      %3661 = vmatpush1.msra.mxu0 %v2898
      %3662 = vmatprep.subr.mxu0 %v2909
      %3663 = vmatpush1.msra.mxu0 %v2908
      %3664 = vmatprep.subr.mxu0 %v2919
      %3665 = vmatpush1.msra.mxu0 %v2918
      %3666 = vmatprep.subr.mxu0 %v2929
      %3667 = vmatpush1.msra.mxu0 %v2928
      %3668 = vmatprep.subr.mxu0 %v2939
      %3669 = vmatpush1.msra.mxu0 %v2938
      %3670 = vmatprep.subr.mxu0 %v2949
      %3671 = vmatpush1.msra.mxu0 %v2948
      %3672 = vmatprep.subr.mxu0 %v2959
      %3673 = vmatpush1.msra.mxu0 %v2958
      %3674 = vmatprep.subr.mxu0 %v2969
      %3675 = vmatpush1.msra.mxu0 %v2968
      %3676 = vmatprep.subr.mxu0 %v2979
      %3677 = vmatpush1.msra.mxu0 %v2978
      %3678 = vmatprep.subr.mxu0 %v2989
      %3679 = vmatpush1.msra.mxu0 %v2988
      %3680 = vmatprep.subr.mxu0 %v2999
      %3681 = vmatpush1.msra.mxu0 %v2998
      %3682 = vmatprep.subr.mxu0 %v3009
      %3683 = vmatpush1.msra.mxu0 %v3008
      %3684 = vmatprep.subr.mxu0 %v3019
      %3685 = vmatpush1.msra.mxu0 %v3018
      %3686 = vmatprep.subr.mxu0 %v3029
      %3687 = vmatpush1.msra.mxu0 %v3028
      %3688 = vmatprep.subr.mxu0 %v3039
      %3689 = vmatpush1.msra.mxu0 %v3038
      %3690 = vmatprep.subr.mxu0 %v3049
      %3691 = vmatpush1.msra.mxu0 %v3048
      %3692 = vmatprep.subr.mxu0 %v3059
      %3693 = vmatpush1.msra.mxu0 %v3058
      %3694 = vmatprep.subr.mxu0 %v3069
      %3695 = vmatpush1.msra.mxu0 %v3068
      %3696 = vmatprep.mubr.f32.mxu0 %v2750
      %3697 = vmatmul.mubr.f32.gmra.mrb[0].mxu0 %v2749
      %v3698 = vpop.f32.mrb[0].mxu0
      %v3699 = vadd.f32 %v3168, %v3698
      %v3700 = vpop.f32.mrb[0].mxu0
      %v3701 = vadd.f32 %v3169, %v3700
      %3702 = vdwg.mxu0
      %3703 = vmatprep.subr.mxu0 %v3079
      %3704 = vmatpush1.msra.mxu0 %v3078
      %3705 = vmatprep.subr.mxu0 %v3089
      %3706 = vmatpush1.msra.mxu0 %v3088
      %3707 = vmatprep.subr.mxu0 %v3099
      %3708 = vmatpush1.msra.mxu0 %v3098
      %3709 = vmatprep.subr.mxu0 %v3109
      %3710 = vmatpush1.msra.mxu0 %v3108
      %3711 = vmatprep.subr.mxu0 %v3119
      %3712 = vmatpush1.msra.mxu0 %v3118
      %3713 = vmatprep.subr.mxu0 %v3129
      %3714 = vmatpush1.msra.mxu0 %v3128
      %3715 = vmatprep.subr.mxu0 %v3139
      %3716 = vmatpush1.msra.mxu0 %v3138
      %3717 = vmatprep.subr.mxu0 %v3149
      %3718 = vmatpush1.msra.mxu0 %v3148
      %3719 = vmatprep.subr.mxu0 %v3198
      %3720 = vmatpush1.msra.mxu0 %v3195
      %3721 = vmatprep.subr.mxu0 0.0
      %3722 = vmatpush1.msra.mxu0 0.0
      %3723 = vmatprep.subr.mxu0 0.0
      %3724 = vmatpush1.msra.mxu0 0.0
      %3725 = vmatprep.subr.mxu0 0.0
      %3726 = vmatpush1.msra.mxu0 0.0
      %3727 = vmatprep.subr.mxu0 0.0
      %3728 = vmatpush1.msra.mxu0 0.0
      %3729 = vmatprep.subr.mxu0 0.0
      %3730 = vmatpush1.msra.mxu0 0.0
      %3731 = vmatprep.subr.mxu0 0.0
      %3732 = vmatpush1.msra.mxu0 0.0
      %3733 = vmatprep.subr.mxu0 0.0
      %3734 = vmatpush1.msra.mxu0 0.0
      %3735 = vmatprep.subr.mxu0 0.0
      %3736 = vmatpush1.msra.mxu0 0.0
      %3737 = vmatprep.subr.mxu0 0.0
      %3738 = vmatpush1.msra.mxu0 0.0
      %3739 = vmatprep.subr.mxu0 0.0
      %3740 = vmatpush1.msra.mxu0 0.0
      %3741 = vmatprep.subr.mxu0 0.0
      %3742 = vmatpush1.msra.mxu0 0.0
      %3743 = vmatprep.subr.mxu0 0.0
      %3744 = vmatpush1.msra.mxu0 0.0
      %3745 = vmatprep.subr.mxu0 0.0
      %3746 = vmatpush1.msra.mxu0 0.0
      %3747 = vmatprep.subr.mxu0 0.0
      %3748 = vmatpush1.msra.mxu0 0.0
      %3749 = vmatprep.subr.mxu0 0.0
      %3750 = vmatpush1.msra.mxu0 0.0
      %3751 = vmatprep.subr.mxu0 0.0
      %3752 = vmatpush1.msra.mxu0 0.0
      %3753 = vmatprep.subr.mxu0 0.0
      %3754 = vmatpush1.msra.mxu0 0.0
      %3755 = vmatprep.subr.mxu0 0.0
      %3756 = vmatpush1.msra.mxu0 0.0
      %3757 = vmatprep.subr.mxu0 0.0
      %3758 = vmatpush1.msra.mxu0 0.0
      %3759 = vmatprep.subr.mxu0 0.0
      %3760 = vmatpush1.msra.mxu0 0.0
      %3761 = vmatprep.subr.mxu0 0.0
      %3762 = vmatpush1.msra.mxu0 0.0
      %3763 = vmatprep.subr.mxu0 0.0
      %3764 = vmatpush1.msra.mxu0 0.0
      %3765 = vmatprep.subr.mxu0 0.0
      %3766 = vmatpush1.msra.mxu0 0.0
      %3767 = vmatprep.mubr.f32.mxu0 0.0
      %3768 = vmatmul.mubr.f32.gmra.mrb[0].mxu0 %v3174
      %v3769 = vpop.f32.mrb[0].mxu0
      %v3770 = vadd.f32 %v3699, %v3769
      %v3771 = vpop.f32.mrb[0].mxu0
      %v3772 = vadd.f32 %v3701, %v3771
      %3773 = vdwg.mxu0
      %3774 = vmatprep.subr.mxu0 %v2761
      %3775 = vmatpush1.msra.mxu0 %v2760
      %3776 = vmatprep.subr.mxu0 %v2771
      %3777 = vmatpush1.msra.mxu0 %v2770
      %3778 = vmatprep.subr.mxu0 %v2781
      %3779 = vmatpush1.msra.mxu0 %v2780
      %3780 = vmatprep.subr.mxu0 %v2791
      %3781 = vmatpush1.msra.mxu0 %v2790
      %3782 = vmatprep.subr.mxu0 %v2801
      %3783 = vmatpush1.msra.mxu0 %v2800
      %3784 = vmatprep.subr.mxu0 %v2811
      %3785 = vmatpush1.msra.mxu0 %v2810
      %3786 = vmatprep.subr.mxu0 %v2821
      %3787 = vmatpush1.msra.mxu0 %v2820
      %3788 = vmatprep.subr.mxu0 %v2831
      %3789 = vmatpush1.msra.mxu0 %v2830
      %3790 = vmatprep.subr.mxu0 %v2841
      %3791 = vmatpush1.msra.mxu0 %v2840
      %3792 = vmatprep.subr.mxu0 %v2851
      %3793 = vmatpush1.msra.mxu0 %v2850
      %3794 = vmatprep.subr.mxu0 %v2861
      %3795 = vmatpush1.msra.mxu0 %v2860
      %3796 = vmatprep.subr.mxu0 %v2871
      %3797 = vmatpush1.msra.mxu0 %v2870
      %3798 = vmatprep.subr.mxu0 %v2881
      %3799 = vmatpush1.msra.mxu0 %v2880
      %3800 = vmatprep.subr.mxu0 %v2891
      %3801 = vmatpush1.msra.mxu0 %v2890
      %3802 = vmatprep.subr.mxu0 %v2901
      %3803 = vmatpush1.msra.mxu0 %v2900
      %3804 = vmatprep.subr.mxu0 %v2911
      %3805 = vmatpush1.msra.mxu0 %v2910
      %3806 = vmatprep.subr.mxu0 %v2921
      %3807 = vmatpush1.msra.mxu0 %v2920
      %3808 = vmatprep.subr.mxu0 %v2931
      %3809 = vmatpush1.msra.mxu0 %v2930
      %3810 = vmatprep.subr.mxu0 %v2941
      %3811 = vmatpush1.msra.mxu0 %v2940
      %3812 = vmatprep.subr.mxu0 %v2951
      %3813 = vmatpush1.msra.mxu0 %v2950
      %3814 = vmatprep.subr.mxu0 %v2961
      %3815 = vmatpush1.msra.mxu0 %v2960
      %3816 = vmatprep.subr.mxu0 %v2971
      %3817 = vmatpush1.msra.mxu0 %v2970
      %3818 = vmatprep.subr.mxu0 %v2981
      %3819 = vmatpush1.msra.mxu0 %v2980
      %3820 = vmatprep.subr.mxu0 %v2991
      %3821 = vmatpush1.msra.mxu0 %v2990
      %3822 = vmatprep.subr.mxu0 %v3001
      %3823 = vmatpush1.msra.mxu0 %v3000
      %3824 = vmatprep.subr.mxu0 %v3011
      %3825 = vmatpush1.msra.mxu0 %v3010
      %3826 = vmatprep.subr.mxu0 %v3021
      %3827 = vmatpush1.msra.mxu0 %v3020
      %3828 = vmatprep.subr.mxu0 %v3031
      %3829 = vmatpush1.msra.mxu0 %v3030
      %3830 = vmatprep.subr.mxu0 %v3041
      %3831 = vmatpush1.msra.mxu0 %v3040
      %3832 = vmatprep.subr.mxu0 %v3051
      %3833 = vmatpush1.msra.mxu0 %v3050
      %3834 = vmatprep.subr.mxu0 %v3061
      %3835 = vmatpush1.msra.mxu0 %v3060
      %3836 = vmatprep.subr.mxu0 %v3071
      %3837 = vmatpush1.msra.mxu0 %v3070
      %3838 = vmatprep.mubr.f32.mxu0 %v2750
      %3839 = vmatmul.mubr.f32.gmra.mrb[0].mxu0 %v2749
      %v3840 = vpop.f32.mrb[0].mxu0
      %v3841 = vadd.f32 %v3170, %v3840
      %v3842 = vpop.f32.mrb[0].mxu0
      %v3843 = vadd.f32 %v3171, %v3842
      %3844 = vdwg.mxu0
      %3845 = vmatprep.subr.mxu0 %v3081
      %3846 = vmatpush1.msra.mxu0 %v3080
      %3847 = vmatprep.subr.mxu0 %v3091
      %3848 = vmatpush1.msra.mxu0 %v3090
      %3849 = vmatprep.subr.mxu0 %v3101
      %3850 = vmatpush1.msra.mxu0 %v3100
      %3851 = vmatprep.subr.mxu0 %v3111
      %3852 = vmatpush1.msra.mxu0 %v3110
      %3853 = vmatprep.subr.mxu0 %v3121
      %3854 = vmatpush1.msra.mxu0 %v3120
      %3855 = vmatprep.subr.mxu0 %v3131
      %3856 = vmatpush1.msra.mxu0 %v3130
      %3857 = vmatprep.subr.mxu0 %v3141
      %3858 = vmatpush1.msra.mxu0 %v3140
      %3859 = vmatprep.subr.mxu0 %v3151
      %3860 = vmatpush1.msra.mxu0 %v3150
      %3861 = vmatprep.subr.mxu0 %v3204
      %3862 = vmatpush1.msra.mxu0 %v3201
      %3863 = vmatprep.subr.mxu0 0.0
      %3864 = vmatpush1.msra.mxu0 0.0
      %3865 = vmatprep.subr.mxu0 0.0
      %3866 = vmatpush1.msra.mxu0 0.0
      %3867 = vmatprep.subr.mxu0 0.0
      %3868 = vmatpush1.msra.mxu0 0.0
      %3869 = vmatprep.subr.mxu0 0.0
      %3870 = vmatpush1.msra.mxu0 0.0
      %3871 = vmatprep.subr.mxu0 0.0
      %3872 = vmatpush1.msra.mxu0 0.0
      %3873 = vmatprep.subr.mxu0 0.0
      %3874 = vmatpush1.msra.mxu0 0.0
      %3875 = vmatprep.subr.mxu0 0.0
      %3876 = vmatpush1.msra.mxu0 0.0
      %3877 = vmatprep.subr.mxu0 0.0
      %3878 = vmatpush1.msra.mxu0 0.0
      %3879 = vmatprep.subr.mxu0 0.0
      %3880 = vmatpush1.msra.mxu0 0.0
      %3881 = vmatprep.subr.mxu0 0.0
      %3882 = vmatpush1.msra.mxu0 0.0
      %3883 = vmatprep.subr.mxu0 0.0
      %3884 = vmatpush1.msra.mxu0 0.0
      %3885 = vmatprep.subr.mxu0 0.0
      %3886 = vmatpush1.msra.mxu0 0.0
      %3887 = vmatprep.subr.mxu0 0.0
      %3888 = vmatpush1.msra.mxu0 0.0
      %3889 = vmatprep.subr.mxu0 0.0
      %3890 = vmatpush1.msra.mxu0 0.0
      %3891 = vmatprep.subr.mxu0 0.0
      %3892 = vmatpush1.msra.mxu0 0.0
      %3893 = vmatprep.subr.mxu0 0.0
      %3894 = vmatpush1.msra.mxu0 0.0
      %3895 = vmatprep.subr.mxu0 0.0
      %3896 = vmatpush1.msra.mxu0 0.0
      %3897 = vmatprep.subr.mxu0 0.0
      %3898 = vmatpush1.msra.mxu0 0.0
      %3899 = vmatprep.subr.mxu0 0.0
      %3900 = vmatpush1.msra.mxu0 0.0
      %3901 = vmatprep.subr.mxu0 0.0
      %3902 = vmatpush1.msra.mxu0 0.0
      %3903 = vmatprep.subr.mxu0 0.0
      %3904 = vmatpush1.msra.mxu0 0.0
      %3905 = vmatprep.subr.mxu0 0.0
      %3906 = vmatpush1.msra.mxu0 0.0
      %3907 = vmatprep.subr.mxu0 0.0
      %3908 = vmatpush1.msra.mxu0 0.0
      %3909 = vmatprep.mubr.f32.mxu0 0.0
      %3910 = vmatmul.mubr.f32.gmra.mrb[0].mxu0 %v3174
      %v3911 = vpop.f32.mrb[0].mxu0
      %v3912 = vadd.f32 %v3841, %v3911
      %v3913 = vpop.f32.mrb[0].mxu0
      %v3914 = vadd.f32 %v3843, %v3913
      %3915 = vdwg.mxu0
      %v3916 = vld [vmem:[%s18] sm:$0xff]
      %v3917 = vld [vmem:[%s19] sm:$0xff]
      %3928 = vrot.lane.b32.xlu0 %v3344, 35
      %v3929 = vpop.permute.xlu0 %3928
      %3930 = vrot.lane.b32.xlu0 %v3346, 35
      %v3931 = vpop.permute.xlu0 %3930
      %3932 = vrot.lane.b32.xlu0 %v3486, 35
      %v3933 = vpop.permute.xlu0 %3932
      %3934 = vrot.lane.b32.xlu0 %v3488, 35
      %v3935 = vpop.permute.xlu0 %3934
      %3936 = vrot.lane.b32.xlu0 %v3628, 35
      %v3937 = vpop.permute.xlu0 %3936
      %3938 = vrot.lane.b32.xlu0 %v3630, 35
      %v3939 = vpop.permute.xlu0 %3938
      %3940 = vrot.lane.b32.xlu0 %v3770, 35
      %v3941 = vpop.permute.xlu0 %3940
      %3942 = vrot.lane.b32.xlu0 %v3772, 35
      %v3943 = vpop.permute.xlu0 %3942
      %3944 = vrot.lane.b32.xlu0 %v3912, 35
      %v3945 = vpop.permute.xlu0 %3944
      %3946 = vrot.lane.b32.xlu0 %v3914, 35
      %v3947 = vpop.permute.xlu0 %3946
      %vm3948 = vcmask 285696
      %v3949 = vsel %vm3948, %v3929, %v3931
      %v3950 = vsel %vm3948, %v3931, %v3933
      %v3951 = vsel %vm3948, %v3933, %v3935
      %v3952 = vsel %vm3948, %v3935, %v3937
      %v3953 = vsel %vm3948, %v3937, %v3939
      %v3954 = vsel %vm3948, %v3939, %v3941
      %v3955 = vsel %vm3948, %v3941, %v3943
      %v3956 = vsel %vm3948, %v3943, %v3945
      %v3957 = vsel %vm3948, %v3945, %v3947
      %v3968 = vsel %vm3948, 0.0, %v3929
      %vm3969 = vcmask 318464
      %v3970 = vsel %vm3969, %v3957, 0.0
      %3973 = vrot.lane.b32.xlu0 %v3968, 127
      %v3974 = vpop.permute.xlu0 %3973
      %3975 = vrot.lane.b32.xlu0 %v3949, 127
      %v3976 = vpop.permute.xlu0 %3975
      %3977 = vrot.lane.b32.xlu0 %v3950, 127
      %v3978 = vpop.permute.xlu0 %3977
      %3979 = vrot.lane.b32.xlu0 %v3951, 127
      %v3980 = vpop.permute.xlu0 %3979
      %3981 = vrot.lane.b32.xlu0 %v3952, 127
      %v3982 = vpop.permute.xlu0 %3981
      %3983 = vrot.lane.b32.xlu0 %v3953, 127
      %v3984 = vpop.permute.xlu0 %3983
      %3985 = vrot.lane.b32.xlu0 %v3954, 127
      %v3986 = vpop.permute.xlu0 %3985
      %3987 = vrot.lane.b32.xlu0 %v3955, 127
      %v3988 = vpop.permute.xlu0 %3987
      %3989 = vrot.lane.b32.xlu0 %v3956, 127
      %v3990 = vpop.permute.xlu0 %3989
      %3991 = vrot.lane.b32.xlu0 %v3970, 127
      %v3992 = vpop.permute.xlu0 %3991
      %v3993 = vsel %vm2013, %v3974, %v3976
      %v3994 = vsel %vm2013, %v3976, %v3978
      %v3995 = vsel %vm2013, %v3978, %v3980
      %v3996 = vsel %vm2013, %v3980, %v3982
      %v3997 = vsel %vm2013, %v3982, %v3984
      %v3998 = vsel %vm2013, %v3984, %v3986
      %v3999 = vsel %vm2013, %v3986, %v3988
      %v4000 = vsel %vm2013, %v3988, %v3990
      %v4001 = vsel %vm2013, %v3990, %v3992
      %4012 = vrot.lane.b32.xlu0 %v3968, 126
      %v4013 = vpop.permute.xlu0 %4012
      %4014 = vrot.lane.b32.xlu0 %v3949, 126
      %v4015 = vpop.permute.xlu0 %4014
      %4016 = vrot.lane.b32.xlu0 %v3950, 126
      %v4017 = vpop.permute.xlu0 %4016
      %4018 = vrot.lane.b32.xlu0 %v3951, 126
      %v4019 = vpop.permute.xlu0 %4018
      %4020 = vrot.lane.b32.xlu0 %v3952, 126
      %v4021 = vpop.permute.xlu0 %4020
      %4022 = vrot.lane.b32.xlu0 %v3953, 126
      %v4023 = vpop.permute.xlu0 %4022
      %4024 = vrot.lane.b32.xlu0 %v3954, 126
      %v4025 = vpop.permute.xlu0 %4024
      %4026 = vrot.lane.b32.xlu0 %v3955, 126
      %v4027 = vpop.permute.xlu0 %4026
      %4028 = vrot.lane.b32.xlu0 %v3956, 126
      %v4029 = vpop.permute.xlu0 %4028
      %4030 = vrot.lane.b32.xlu0 %v3970, 126
      %v4031 = vpop.permute.xlu0 %4030
      %v4032 = vsel %vm2036, %v4013, %v4015
      %v4033 = vsel %vm2036, %v4015, %v4017
      %v4034 = vsel %vm2036, %v4017, %v4019
      %v4035 = vsel %vm2036, %v4019, %v4021
      %v4036 = vsel %vm2036, %v4021, %v4023
      %v4037 = vsel %vm2036, %v4023, %v4025
      %v4038 = vsel %vm2036, %v4025, %v4027
      %v4039 = vsel %vm2036, %v4027, %v4029
      %v4040 = vsel %vm2036, %v4029, %v4031
      %4051 = vrot.lane.b32.xlu0 %v3968, 94
      %v4052 = vpop.permute.xlu0 %4051
      %4053 = vrot.lane.b32.xlu0 %v3949, 94
      %v4054 = vpop.permute.xlu0 %4053
      %4055 = vrot.lane.b32.xlu0 %v3950, 94
      %v4056 = vpop.permute.xlu0 %4055
      %4057 = vrot.lane.b32.xlu0 %v3951, 94
      %v4058 = vpop.permute.xlu0 %4057
      %4059 = vrot.lane.b32.xlu0 %v3952, 94
      %v4060 = vpop.permute.xlu0 %4059
      %4061 = vrot.lane.b32.xlu0 %v3953, 94
      %v4062 = vpop.permute.xlu0 %4061
      %4063 = vrot.lane.b32.xlu0 %v3954, 94
      %v4064 = vpop.permute.xlu0 %4063
      %4065 = vrot.lane.b32.xlu0 %v3955, 94
      %v4066 = vpop.permute.xlu0 %4065
      %4067 = vrot.lane.b32.xlu0 %v3956, 94
      %v4068 = vpop.permute.xlu0 %4067
      %4069 = vrot.lane.b32.xlu0 %v3970, 94
      %v4070 = vpop.permute.xlu0 %4069
      %vm4071 = vcmask 769024
      %v4072 = vsel %vm4071, %v4052, %v4054
      %v4073 = vsel %vm4071, %v4054, %v4056
      %v4074 = vsel %vm4071, %v4056, %v4058
      %v4075 = vsel %vm4071, %v4058, %v4060
      %v4076 = vsel %vm4071, %v4060, %v4062
      %v4077 = vsel %vm4071, %v4062, %v4064
      %v4078 = vsel %vm4071, %v4064, %v4066
      %v4079 = vsel %vm4071, %v4066, %v4068
      %v4080 = vsel %vm4071, %v4068, %v4070
      %4091 = vrot.lane.b32.xlu0 %v3968, 93
      %v4092 = vpop.permute.xlu0 %4091
      %4093 = vrot.lane.b32.xlu0 %v3949, 93
      %v4094 = vpop.permute.xlu0 %4093
      %4095 = vrot.lane.b32.xlu0 %v3950, 93
      %v4096 = vpop.permute.xlu0 %4095
      %4097 = vrot.lane.b32.xlu0 %v3951, 93
      %v4098 = vpop.permute.xlu0 %4097
      %4099 = vrot.lane.b32.xlu0 %v3952, 93
      %v4100 = vpop.permute.xlu0 %4099
      %4101 = vrot.lane.b32.xlu0 %v3953, 93
      %v4102 = vpop.permute.xlu0 %4101
      %4103 = vrot.lane.b32.xlu0 %v3954, 93
      %v4104 = vpop.permute.xlu0 %4103
      %4105 = vrot.lane.b32.xlu0 %v3955, 93
      %v4106 = vpop.permute.xlu0 %4105
      %4107 = vrot.lane.b32.xlu0 %v3956, 93
      %v4108 = vpop.permute.xlu0 %4107
      %4109 = vrot.lane.b32.xlu0 %v3970, 93
      %v4110 = vpop.permute.xlu0 %4109
      %vm4111 = vcmask 760832
      %v4112 = vsel %vm4111, %v4092, %v4094
      %v4113 = vsel %vm4111, %v4094, %v4096
      %v4114 = vsel %vm4111, %v4096, %v4098
      %v4115 = vsel %vm4111, %v4098, %v4100
      %v4116 = vsel %vm4111, %v4100, %v4102
      %v4117 = vsel %vm4111, %v4102, %v4104
      %v4118 = vsel %vm4111, %v4104, %v4106
      %v4119 = vsel %vm4111, %v4106, %v4108
      %v4120 = vsel %vm4111, %v4108, %v4110
      %4131 = vrot.lane.b32.xlu0 %v3968, 92
      %v4132 = vpop.permute.xlu0 %4131
      %4133 = vrot.lane.b32.xlu0 %v3949, 92
      %v4134 = vpop.permute.xlu0 %4133
      %4135 = vrot.lane.b32.xlu0 %v3950, 92
      %v4136 = vpop.permute.xlu0 %4135
      %4137 = vrot.lane.b32.xlu0 %v3951, 92
      %v4138 = vpop.permute.xlu0 %4137
      %4139 = vrot.lane.b32.xlu0 %v3952, 92
      %v4140 = vpop.permute.xlu0 %4139
      %4141 = vrot.lane.b32.xlu0 %v3953, 92
      %v4142 = vpop.permute.xlu0 %4141
      %4143 = vrot.lane.b32.xlu0 %v3954, 92
      %v4144 = vpop.permute.xlu0 %4143
      %4145 = vrot.lane.b32.xlu0 %v3955, 92
      %v4146 = vpop.permute.xlu0 %4145
      %4147 = vrot.lane.b32.xlu0 %v3956, 92
      %v4148 = vpop.permute.xlu0 %4147
      %4149 = vrot.lane.b32.xlu0 %v3970, 92
      %v4150 = vpop.permute.xlu0 %4149
      %v4151 = vsel %vm2128, %v4132, %v4134
      %v4152 = vsel %vm2128, %v4134, %v4136
      %v4153 = vsel %vm2128, %v4136, %v4138
      %v4154 = vsel %vm2128, %v4138, %v4140
      %v4155 = vsel %vm2128, %v4140, %v4142
      %v4156 = vsel %vm2128, %v4142, %v4144
      %v4157 = vsel %vm2128, %v4144, %v4146
      %v4158 = vsel %vm2128, %v4146, %v4148
      %v4159 = vsel %vm2128, %v4148, %v4150
      %4170 = vrot.lane.b32.xlu0 %v3968, 60
      %v4171 = vpop.permute.xlu0 %4170
      %4172 = vrot.lane.b32.xlu0 %v3949, 60
      %v4173 = vpop.permute.xlu0 %4172
      %4174 = vrot.lane.b32.xlu0 %v3950, 60
      %v4175 = vpop.permute.xlu0 %4174
      %4176 = vrot.lane.b32.xlu0 %v3951, 60
      %v4177 = vpop.permute.xlu0 %4176
      %4178 = vrot.lane.b32.xlu0 %v3952, 60
      %v4179 = vpop.permute.xlu0 %4178
      %4180 = vrot.lane.b32.xlu0 %v3953, 60
      %v4181 = vpop.permute.xlu0 %4180
      %4182 = vrot.lane.b32.xlu0 %v3954, 60
      %v4183 = vpop.permute.xlu0 %4182
      %4184 = vrot.lane.b32.xlu0 %v3955, 60
      %v4185 = vpop.permute.xlu0 %4184
      %4186 = vrot.lane.b32.xlu0 %v3956, 60
      %v4187 = vpop.permute.xlu0 %4186
      %4188 = vrot.lane.b32.xlu0 %v3970, 60
      %v4189 = vpop.permute.xlu0 %4188
      %vm4190 = vcmask 490496
      %v4191 = vsel %vm4190, %v4171, %v4173
      %v4192 = vsel %vm4190, %v4173, %v4175
      %v4193 = vsel %vm4190, %v4175, %v4177
      %v4194 = vsel %vm4190, %v4177, %v4179
      %v4195 = vsel %vm4190, %v4179, %v4181
      %v4196 = vsel %vm4190, %v4181, %v4183
      %v4197 = vsel %vm4190, %v4183, %v4185
      %v4198 = vsel %vm4190, %v4185, %v4187
      %v4199 = vsel %vm4190, %v4187, %v4189
      %4210 = vrot.lane.b32.xlu0 %v3968, 59
      %v4211 = vpop.permute.xlu0 %4210
      %4212 = vrot.lane.b32.xlu0 %v3949, 59
      %v4213 = vpop.permute.xlu0 %4212
      %4214 = vrot.lane.b32.xlu0 %v3950, 59
      %v4215 = vpop.permute.xlu0 %4214
      %4216 = vrot.lane.b32.xlu0 %v3951, 59
      %v4217 = vpop.permute.xlu0 %4216
      %4218 = vrot.lane.b32.xlu0 %v3952, 59
      %v4219 = vpop.permute.xlu0 %4218
      %4220 = vrot.lane.b32.xlu0 %v3953, 59
      %v4221 = vpop.permute.xlu0 %4220
      %4222 = vrot.lane.b32.xlu0 %v3954, 59
      %v4223 = vpop.permute.xlu0 %4222
      %4224 = vrot.lane.b32.xlu0 %v3955, 59
      %v4225 = vpop.permute.xlu0 %4224
      %4226 = vrot.lane.b32.xlu0 %v3956, 59
      %v4227 = vpop.permute.xlu0 %4226
      %4228 = vrot.lane.b32.xlu0 %v3970, 59
      %v4229 = vpop.permute.xlu0 %4228
      %vm4230 = vcmask 482304
      %v4231 = vsel %vm4230, %v4211, %v4213
      %v4232 = vsel %vm4230, %v4213, %v4215
      %v4233 = vsel %vm4230, %v4215, %v4217
      %v4234 = vsel %vm4230, %v4217, %v4219
      %v4235 = vsel %vm4230, %v4219, %v4221
      %v4236 = vsel %vm4230, %v4221, %v4223
      %v4237 = vsel %vm4230, %v4223, %v4225
      %v4238 = vsel %vm4230, %v4225, %v4227
      %v4239 = vsel %vm4230, %v4227, %v4229
      %4250 = vrot.lane.b32.xlu0 %v3968, 58
      %v4251 = vpop.permute.xlu0 %4250
      %4252 = vrot.lane.b32.xlu0 %v3949, 58
      %v4253 = vpop.permute.xlu0 %4252
      %4254 = vrot.lane.b32.xlu0 %v3950, 58
      %v4255 = vpop.permute.xlu0 %4254
      %4256 = vrot.lane.b32.xlu0 %v3951, 58
      %v4257 = vpop.permute.xlu0 %4256
      %4258 = vrot.lane.b32.xlu0 %v3952, 58
      %v4259 = vpop.permute.xlu0 %4258
      %4260 = vrot.lane.b32.xlu0 %v3953, 58
      %v4261 = vpop.permute.xlu0 %4260
      %4262 = vrot.lane.b32.xlu0 %v3954, 58
      %v4263 = vpop.permute.xlu0 %4262
      %4264 = vrot.lane.b32.xlu0 %v3955, 58
      %v4265 = vpop.permute.xlu0 %4264
      %4266 = vrot.lane.b32.xlu0 %v3956, 58
      %v4267 = vpop.permute.xlu0 %4266
      %4268 = vrot.lane.b32.xlu0 %v3970, 58
      %v4269 = vpop.permute.xlu0 %4268
      %vm4270 = vcmask 474112
      %v4271 = vsel %vm4270, %v4251, %v4253
      %v4272 = vsel %vm4270, %v4253, %v4255
      %v4273 = vsel %vm4270, %v4255, %v4257
      %v4274 = vsel %vm4270, %v4257, %v4259
      %v4275 = vsel %vm4270, %v4259, %v4261
      %v4276 = vsel %vm4270, %v4261, %v4263
      %v4277 = vsel %vm4270, %v4263, %v4265
      %v4278 = vsel %vm4270, %v4265, %v4267
      %v4279 = vsel %vm4270, %v4267, %v4269
      %4291 = vset.pattern.permute.xlu0 0
      %4292 = vperm.xlu0 %4291, %v3917
      %v4293 = vpop.permute.xlu0 %4292
      %vm4295 = vcmask 588800
      %v4297 = vsel %vm4295, %v3916, 0
      %4299 = vmatprep.subr.mxu0 %v3949
      %4300 = vmatpush1.msra.mxu0 %v3968
      %4301 = vmatprep.subr.mxu0 %v3994
      %4302 = vmatpush1.msra.mxu0 %v3993
      %4303 = vmatprep.subr.mxu0 %v4033
      %4304 = vmatpush1.msra.mxu0 %v4032
      %4305 = vmatprep.subr.mxu0 %v4073
      %4306 = vmatpush1.msra.mxu0 %v4072
      %4307 = vmatprep.subr.mxu0 %v4113
      %4308 = vmatpush1.msra.mxu0 %v4112
      %4309 = vmatprep.subr.mxu0 %v4152
      %4310 = vmatpush1.msra.mxu0 %v4151
      %4311 = vmatprep.subr.mxu0 %v4192
      %4312 = vmatpush1.msra.mxu0 %v4191
      %4313 = vmatprep.subr.mxu0 %v4232
      %4314 = vmatpush1.msra.mxu0 %v4231
      %4315 = vmatprep.subr.mxu0 %v4272
      %4316 = vmatpush1.msra.mxu0 %v4271
      %4317 = vmatprep.subr.mxu0 0.0
      %4318 = vmatpush1.msra.mxu0 0.0
      %4319 = vmatprep.subr.mxu0 0.0
      %4320 = vmatpush1.msra.mxu0 0.0
      %4321 = vmatprep.subr.mxu0 0.0
      %4322 = vmatpush1.msra.mxu0 0.0
      %4323 = vmatprep.subr.mxu0 0.0
      %4324 = vmatpush1.msra.mxu0 0.0
      %4325 = vmatprep.subr.mxu0 0.0
      %4326 = vmatpush1.msra.mxu0 0.0
      %4327 = vmatprep.subr.mxu0 0.0
      %4328 = vmatpush1.msra.mxu0 0.0
      %4329 = vmatprep.subr.mxu0 0.0
      %4330 = vmatpush1.msra.mxu0 0.0
      %4331 = vmatprep.subr.mxu0 0.0
      %4332 = vmatpush1.msra.mxu0 0.0
      %4333 = vmatprep.subr.mxu0 0.0
      %4334 = vmatpush1.msra.mxu0 0.0
      %4335 = vmatprep.subr.mxu0 0.0
      %4336 = vmatpush1.msra.mxu0 0.0
      %4337 = vmatprep.subr.mxu0 0.0
      %4338 = vmatpush1.msra.mxu0 0.0
      %4339 = vmatprep.subr.mxu0 0.0
      %4340 = vmatpush1.msra.mxu0 0.0
      %4341 = vmatprep.subr.mxu0 0.0
      %4342 = vmatpush1.msra.mxu0 0.0
      %4343 = vmatprep.subr.mxu0 0.0
      %4344 = vmatpush1.msra.mxu0 0.0
      %4345 = vmatprep.subr.mxu0 0.0
      %4346 = vmatpush1.msra.mxu0 0.0
      %4347 = vmatprep.subr.mxu0 0.0
      %4348 = vmatpush1.msra.mxu0 0.0
      %4349 = vmatprep.subr.mxu0 0.0
      %4350 = vmatpush1.msra.mxu0 0.0
      %4351 = vmatprep.subr.mxu0 0.0
      %4352 = vmatpush1.msra.mxu0 0.0
      %4353 = vmatprep.subr.mxu0 0.0
      %4354 = vmatpush1.msra.mxu0 0.0
      %4355 = vmatprep.subr.mxu0 0.0
      %4356 = vmatpush1.msra.mxu0 0.0
      %4357 = vmatprep.subr.mxu0 0.0
      %4358 = vmatpush1.msra.mxu0 0.0
      %4359 = vmatprep.subr.mxu0 0.0
      %4360 = vmatpush1.msra.mxu0 0.0
      %4361 = vmatprep.subr.mxu0 0.0
      %4362 = vmatpush1.msra.mxu0 0.0
      %4363 = vmatprep.mubr.f32.mxu0 0.0
      %4364 = vmatmul.mubr.f32.gmra.mrb[0].mxu0 %v4297
      %v4365 = vpop.f32.mrb[0].mxu0
      %v4366 = vadd.f32 %v4293, %v4365
      %v4367 = vpop.f32.mrb[0].mxu0
      %v4368 = vadd.f32 %v4293, %v4367
      %4369 = vdwg.mxu0
      %4370 = vmatprep.subr.mxu0 %v3951
      %4371 = vmatpush1.msra.mxu0 %v3950
      %4372 = vmatprep.subr.mxu0 %v3996
      %4373 = vmatpush1.msra.mxu0 %v3995
      %4374 = vmatprep.subr.mxu0 %v4035
      %4375 = vmatpush1.msra.mxu0 %v4034
      %4376 = vmatprep.subr.mxu0 %v4075
      %4377 = vmatpush1.msra.mxu0 %v4074
      %4378 = vmatprep.subr.mxu0 %v4115
      %4379 = vmatpush1.msra.mxu0 %v4114
      %4380 = vmatprep.subr.mxu0 %v4154
      %4381 = vmatpush1.msra.mxu0 %v4153
      %4382 = vmatprep.subr.mxu0 %v4194
      %4383 = vmatpush1.msra.mxu0 %v4193
      %4384 = vmatprep.subr.mxu0 %v4234
      %4385 = vmatpush1.msra.mxu0 %v4233
      %4386 = vmatprep.subr.mxu0 %v4274
      %4387 = vmatpush1.msra.mxu0 %v4273
      %4388 = vmatprep.subr.mxu0 0.0
      %4389 = vmatpush1.msra.mxu0 0.0
      %4390 = vmatprep.subr.mxu0 0.0
      %4391 = vmatpush1.msra.mxu0 0.0
      %4392 = vmatprep.subr.mxu0 0.0
      %4393 = vmatpush1.msra.mxu0 0.0
      %4394 = vmatprep.subr.mxu0 0.0
      %4395 = vmatpush1.msra.mxu0 0.0
      %4396 = vmatprep.subr.mxu0 0.0
      %4397 = vmatpush1.msra.mxu0 0.0
      %4398 = vmatprep.subr.mxu0 0.0
      %4399 = vmatpush1.msra.mxu0 0.0
      %4400 = vmatprep.subr.mxu0 0.0
      %4401 = vmatpush1.msra.mxu0 0.0
      %4402 = vmatprep.subr.mxu0 0.0
      %4403 = vmatpush1.msra.mxu0 0.0
      %4404 = vmatprep.subr.mxu0 0.0
      %4405 = vmatpush1.msra.mxu0 0.0
      %4406 = vmatprep.subr.mxu0 0.0
      %4407 = vmatpush1.msra.mxu0 0.0
      %4408 = vmatprep.subr.mxu0 0.0
      %4409 = vmatpush1.msra.mxu0 0.0
      %4410 = vmatprep.subr.mxu0 0.0
      %4411 = vmatpush1.msra.mxu0 0.0
      %4412 = vmatprep.subr.mxu0 0.0
      %4413 = vmatpush1.msra.mxu0 0.0
      %4414 = vmatprep.subr.mxu0 0.0
      %4415 = vmatpush1.msra.mxu0 0.0
      %4416 = vmatprep.subr.mxu0 0.0
      %4417 = vmatpush1.msra.mxu0 0.0
      %4418 = vmatprep.subr.mxu0 0.0
      %4419 = vmatpush1.msra.mxu0 0.0
      %4420 = vmatprep.subr.mxu0 0.0
      %4421 = vmatpush1.msra.mxu0 0.0
      %4422 = vmatprep.subr.mxu0 0.0
      %4423 = vmatpush1.msra.mxu0 0.0
      %4424 = vmatprep.subr.mxu0 0.0
      %4425 = vmatpush1.msra.mxu0 0.0
      %4426 = vmatprep.subr.mxu0 0.0
      %4427 = vmatpush1.msra.mxu0 0.0
      %4428 = vmatprep.subr.mxu0 0.0
      %4429 = vmatpush1.msra.mxu0 0.0
      %4430 = vmatprep.subr.mxu0 0.0
      %4431 = vmatpush1.msra.mxu0 0.0
      %4432 = vmatprep.subr.mxu0 0.0
      %4433 = vmatpush1.msra.mxu0 0.0
      %4434 = vmatprep.mubr.f32.mxu0 0.0
      %4435 = vmatmul.mubr.f32.gmra.mrb[0].mxu0 %v4297
      %v4436 = vpop.f32.mrb[0].mxu0
      %v4437 = vadd.f32 %v4293, %v4436
      %v4438 = vpop.f32.mrb[0].mxu0
      %v4439 = vadd.f32 %v4293, %v4438
      %4440 = vdwg.mxu0
      %4441 = vmatprep.subr.mxu0 %v3953
      %4442 = vmatpush1.msra.mxu0 %v3952
      %4443 = vmatprep.subr.mxu0 %v3998
      %4444 = vmatpush1.msra.mxu0 %v3997
      %4445 = vmatprep.subr.mxu0 %v4037
      %4446 = vmatpush1.msra.mxu0 %v4036
      %4447 = vmatprep.subr.mxu0 %v4077
      %4448 = vmatpush1.msra.mxu0 %v4076
      %4449 = vmatprep.subr.mxu0 %v4117
      %4450 = vmatpush1.msra.mxu0 %v4116
      %4451 = vmatprep.subr.mxu0 %v4156
      %4452 = vmatpush1.msra.mxu0 %v4155
      %4453 = vmatprep.subr.mxu0 %v4196
      %4454 = vmatpush1.msra.mxu0 %v4195
      %4455 = vmatprep.subr.mxu0 %v4236
      %4456 = vmatpush1.msra.mxu0 %v4235
      %4457 = vmatprep.subr.mxu0 %v4276
      %4458 = vmatpush1.msra.mxu0 %v4275
      %4459 = vmatprep.subr.mxu0 0.0
      %4460 = vmatpush1.msra.mxu0 0.0
      %4461 = vmatprep.subr.mxu0 0.0
      %4462 = vmatpush1.msra.mxu0 0.0
      %4463 = vmatprep.subr.mxu0 0.0
      %4464 = vmatpush1.msra.mxu0 0.0
      %4465 = vmatprep.subr.mxu0 0.0
      %4466 = vmatpush1.msra.mxu0 0.0
      %4467 = vmatprep.subr.mxu0 0.0
      %4468 = vmatpush1.msra.mxu0 0.0
      %4469 = vmatprep.subr.mxu0 0.0
      %4470 = vmatpush1.msra.mxu0 0.0
      %4471 = vmatprep.subr.mxu0 0.0
      %4472 = vmatpush1.msra.mxu0 0.0
      %4473 = vmatprep.subr.mxu0 0.0
      %4474 = vmatpush1.msra.mxu0 0.0
      %4475 = vmatprep.subr.mxu0 0.0
      %4476 = vmatpush1.msra.mxu0 0.0
      %4477 = vmatprep.subr.mxu0 0.0
      %4478 = vmatpush1.msra.mxu0 0.0
      %4479 = vmatprep.subr.mxu0 0.0
      %4480 = vmatpush1.msra.mxu0 0.0
      %4481 = vmatprep.subr.mxu0 0.0
      %4482 = vmatpush1.msra.mxu0 0.0
      %4483 = vmatprep.subr.mxu0 0.0
      %4484 = vmatpush1.msra.mxu0 0.0
      %4485 = vmatprep.subr.mxu0 0.0
      %4486 = vmatpush1.msra.mxu0 0.0
      %4487 = vmatprep.subr.mxu0 0.0
      %4488 = vmatpush1.msra.mxu0 0.0
      %4489 = vmatprep.subr.mxu0 0.0
      %4490 = vmatpush1.msra.mxu0 0.0
      %4491 = vmatprep.subr.mxu0 0.0
      %4492 = vmatpush1.msra.mxu0 0.0
      %4493 = vmatprep.subr.mxu0 0.0
      %4494 = vmatpush1.msra.mxu0 0.0
      %4495 = vmatprep.subr.mxu0 0.0
      %4496 = vmatpush1.msra.mxu0 0.0
      %4497 = vmatprep.subr.mxu0 0.0
      %4498 = vmatpush1.msra.mxu0 0.0
      %4499 = vmatprep.subr.mxu0 0.0
      %4500 = vmatpush1.msra.mxu0 0.0
      %4501 = vmatprep.subr.mxu0 0.0
      %4502 = vmatpush1.msra.mxu0 0.0
      %4503 = vmatprep.subr.mxu0 0.0
      %4504 = vmatpush1.msra.mxu0 0.0
      %4505 = vmatprep.mubr.f32.mxu0 0.0
      %4506 = vmatmul.mubr.f32.gmra.mrb[0].mxu0 %v4297
      %v4507 = vpop.f32.mrb[0].mxu0
      %v4508 = vadd.f32 %v4293, %v4507
      %v4509 = vpop.f32.mrb[0].mxu0
      %v4510 = vadd.f32 %v4293, %v4509
      %4511 = vdwg.mxu0
      %4512 = vmatprep.subr.mxu0 %v3955
      %4513 = vmatpush1.msra.mxu0 %v3954
      %4514 = vmatprep.subr.mxu0 %v4000
      %4515 = vmatpush1.msra.mxu0 %v3999
      %4516 = vmatprep.subr.mxu0 %v4039
      %4517 = vmatpush1.msra.mxu0 %v4038
      %4518 = vmatprep.subr.mxu0 %v4079
      %4519 = vmatpush1.msra.mxu0 %v4078
      %4520 = vmatprep.subr.mxu0 %v4119
      %4521 = vmatpush1.msra.mxu0 %v4118
      %4522 = vmatprep.subr.mxu0 %v4158
      %4523 = vmatpush1.msra.mxu0 %v4157
      %4524 = vmatprep.subr.mxu0 %v4198
      %4525 = vmatpush1.msra.mxu0 %v4197
      %4526 = vmatprep.subr.mxu0 %v4238
      %4527 = vmatpush1.msra.mxu0 %v4237
      %4528 = vmatprep.subr.mxu0 %v4278
      %4529 = vmatpush1.msra.mxu0 %v4277
      %4530 = vmatprep.subr.mxu0 0.0
      %4531 = vmatpush1.msra.mxu0 0.0
      %4532 = vmatprep.subr.mxu0 0.0
      %4533 = vmatpush1.msra.mxu0 0.0
      %4534 = vmatprep.subr.mxu0 0.0
      %4535 = vmatpush1.msra.mxu0 0.0
      %4536 = vmatprep.subr.mxu0 0.0
      %4537 = vmatpush1.msra.mxu0 0.0
      %4538 = vmatprep.subr.mxu0 0.0
      %4539 = vmatpush1.msra.mxu0 0.0
      %4540 = vmatprep.subr.mxu0 0.0
      %4541 = vmatpush1.msra.mxu0 0.0
      %4542 = vmatprep.subr.mxu0 0.0
      %4543 = vmatpush1.msra.mxu0 0.0
      %4544 = vmatprep.subr.mxu0 0.0
      %4545 = vmatpush1.msra.mxu0 0.0
      %4546 = vmatprep.subr.mxu0 0.0
      %4547 = vmatpush1.msra.mxu0 0.0
      %4548 = vmatprep.subr.mxu0 0.0
      %4549 = vmatpush1.msra.mxu0 0.0
      %4550 = vmatprep.subr.mxu0 0.0
      %4551 = vmatpush1.msra.mxu0 0.0
      %4552 = vmatprep.subr.mxu0 0.0
      %4553 = vmatpush1.msra.mxu0 0.0
      %4554 = vmatprep.subr.mxu0 0.0
      %4555 = vmatpush1.msra.mxu0 0.0
      %4556 = vmatprep.subr.mxu0 0.0
      %4557 = vmatpush1.msra.mxu0 0.0
      %4558 = vmatprep.subr.mxu0 0.0
      %4559 = vmatpush1.msra.mxu0 0.0
      %4560 = vmatprep.subr.mxu0 0.0
      %4561 = vmatpush1.msra.mxu0 0.0
      %4562 = vmatprep.subr.mxu0 0.0
      %4563 = vmatpush1.msra.mxu0 0.0
      %4564 = vmatprep.subr.mxu0 0.0
      %4565 = vmatpush1.msra.mxu0 0.0
      %4566 = vmatprep.subr.mxu0 0.0
      %4567 = vmatpush1.msra.mxu0 0.0
      %4568 = vmatprep.subr.mxu0 0.0
      %4569 = vmatpush1.msra.mxu0 0.0
      %4570 = vmatprep.subr.mxu0 0.0
      %4571 = vmatpush1.msra.mxu0 0.0
      %4572 = vmatprep.subr.mxu0 0.0
      %4573 = vmatpush1.msra.mxu0 0.0
      %4574 = vmatprep.subr.mxu0 0.0
      %4575 = vmatpush1.msra.mxu0 0.0
      %4576 = vmatprep.mubr.f32.mxu0 0.0
      %4577 = vmatmul.mubr.f32.gmra.mrb[0].mxu0 %v4297
      %v4578 = vpop.f32.mrb[0].mxu0
      %v4579 = vadd.f32 %v4293, %v4578
      %v4580 = vpop.f32.mrb[0].mxu0
      %v4581 = vadd.f32 %v4293, %v4580
      %4582 = vdwg.mxu0
      %4583 = vmatprep.subr.mxu0 %v3970
      %4584 = vmatpush1.msra.mxu0 %v3956
      %4585 = vmatprep.subr.mxu0 %v3992
      %4586 = vmatpush1.msra.mxu0 %v4001
      %4587 = vmatprep.subr.mxu0 %v4031
      %4588 = vmatpush1.msra.mxu0 %v4040
      %4589 = vmatprep.subr.mxu0 %v4070
      %4590 = vmatpush1.msra.mxu0 %v4080
      %4591 = vmatprep.subr.mxu0 %v4110
      %4592 = vmatpush1.msra.mxu0 %v4120
      %4593 = vmatprep.subr.mxu0 %v4150
      %4594 = vmatpush1.msra.mxu0 %v4159
      %4595 = vmatprep.subr.mxu0 %v4189
      %4596 = vmatpush1.msra.mxu0 %v4199
      %4597 = vmatprep.subr.mxu0 %v4229
      %4598 = vmatpush1.msra.mxu0 %v4239
      %4599 = vmatprep.subr.mxu0 %v4269
      %4600 = vmatpush1.msra.mxu0 %v4279
      %4601 = vmatprep.subr.mxu0 0.0
      %4602 = vmatpush1.msra.mxu0 0.0
      %4603 = vmatprep.subr.mxu0 0.0
      %4604 = vmatpush1.msra.mxu0 0.0
      %4605 = vmatprep.subr.mxu0 0.0
      %4606 = vmatpush1.msra.mxu0 0.0
      %4607 = vmatprep.subr.mxu0 0.0
      %4608 = vmatpush1.msra.mxu0 0.0
      %4609 = vmatprep.subr.mxu0 0.0
      %4610 = vmatpush1.msra.mxu0 0.0
      %4611 = vmatprep.subr.mxu0 0.0
      %4612 = vmatpush1.msra.mxu0 0.0
      %4613 = vmatprep.subr.mxu0 0.0
      %4614 = vmatpush1.msra.mxu0 0.0
      %4615 = vmatprep.subr.mxu0 0.0
      %4616 = vmatpush1.msra.mxu0 0.0
      %4617 = vmatprep.subr.mxu0 0.0
      %4618 = vmatpush1.msra.mxu0 0.0
      %4619 = vmatprep.subr.mxu0 0.0
      %4620 = vmatpush1.msra.mxu0 0.0
      %4621 = vmatprep.subr.mxu0 0.0
      %4622 = vmatpush1.msra.mxu0 0.0
      %4623 = vmatprep.subr.mxu0 0.0
      %4624 = vmatpush1.msra.mxu0 0.0
      %4625 = vmatprep.subr.mxu0 0.0
      %4626 = vmatpush1.msra.mxu0 0.0
      %4627 = vmatprep.subr.mxu0 0.0
      %4628 = vmatpush1.msra.mxu0 0.0
      %4629 = vmatprep.subr.mxu0 0.0
      %4630 = vmatpush1.msra.mxu0 0.0
      %4631 = vmatprep.subr.mxu0 0.0
      %4632 = vmatpush1.msra.mxu0 0.0
      %4633 = vmatprep.subr.mxu0 0.0
      %4634 = vmatpush1.msra.mxu0 0.0
      %4635 = vmatprep.subr.mxu0 0.0
      %4636 = vmatpush1.msra.mxu0 0.0
      %4637 = vmatprep.subr.mxu0 0.0
      %4638 = vmatpush1.msra.mxu0 0.0
      %4639 = vmatprep.subr.mxu0 0.0
      %4640 = vmatpush1.msra.mxu0 0.0
      %4641 = vmatprep.subr.mxu0 0.0
      %4642 = vmatpush1.msra.mxu0 0.0
      %4643 = vmatprep.subr.mxu0 0.0
      %4644 = vmatpush1.msra.mxu0 0.0
      %4645 = vmatprep.subr.mxu0 0.0
      %4646 = vmatpush1.msra.mxu0 0.0
      %4647 = vmatprep.mubr.f32.mxu0 0.0
      %4648 = vmatmul.mubr.f32.gmra.mrb[0].mxu0 %v4297
      %v4649 = vpop.f32.mrb[0].mxu0
      %v4650 = vadd.f32 %v4293, %v4649
      %v4651 = vpop.f32.mrb[0].mxu0
      %v4652 = vadd.f32 %v4293, %v4651
      %4653 = vdwg.mxu0
      %v4654 = vmax.f32 %v4366, 0.0
      %v4655 = vmax.f32 %v4368, 0.0
      %v4656 = vmax.f32 %v4437, 0.0
      %v4657 = vmax.f32 %v4439, 0.0
      %v4658 = vmax.f32 %v4508, 0.0
      %v4659 = vmax.f32 %v4510, 0.0
      %v4660 = vmax.f32 %v4579, 0.0
      %v4661 = vmax.f32 %v4581, 0.0
      %v4662 = vmax.f32 %v4650, 0.0
      %v4663 = vmax.f32 %v4652, 0.0
      %v4666 = vlaneseq
      %v4667 = vshrl.u32 %v4666, 7
      %v4668 = vsub.s32 0, %v4667
      %v4669 = vrot.slane %v726, %v4668
      %v4670 = vlaneseq
      %v4671 = vshrl.u32 %v4670, 7
      %v4672 = vsub.s32 1, %v4671
      %v4673 = vrot.slane %v726, %v4672
      %v4674 = vlaneseq
      %v4675 = vshrl.u32 %v4674, 7
      %v4676 = vsub.s32 2, %v4675
      %v4677 = vrot.slane %v726, %v4676
      %v4678 = vlaneseq
      %v4679 = vshrl.u32 %v4678, 7
      %v4680 = vsub.s32 3, %v4679
      %v4681 = vrot.slane %v726, %v4680
      %v4682 = vlaneseq
      %v4683 = vshrl.u32 %v4682, 7
      %v4684 = vsub.s32 4, %v4683
      %v4685 = vrot.slane %v726, %v4684
      %v4686 = vlaneseq
      %v4687 = vshrl.u32 %v4686, 7
      %v4688 = vsub.s32 5, %v4687
      %v4689 = vrot.slane %v726, %v4688
      %v4690 = vlaneseq
      %v4691 = vshrl.u32 %v4690, 7
      %v4692 = vsub.s32 6, %v4691
      %v4693 = vrot.slane %v726, %v4692
      %v4694 = vlaneseq
      %v4695 = vshrl.u32 %v4694, 7
      %v4696 = vsub.s32 7, %v4695
      %v4697 = vrot.slane %v726, %v4696
      %v4698 = vlaneseq
      %v4699 = vshrl.u32 %v4698, 7
      %v4700 = vsub.s32 0, %v4699
      %v4701 = vrot.slane %v727, %v4700
      %v4702 = vlaneseq
      %v4703 = vshrl.u32 %v4702, 7
      %v4704 = vsub.s32 1, %v4703
      %v4705 = vrot.slane %v727, %v4704
      %v4716 = vmul.f32 %v4654, %v4669
      %v4717 = vmul.f32 %v4655, %v4673
      %v4718 = vmul.f32 %v4656, %v4677
      %v4719 = vmul.f32 %v4657, %v4681
      %v4720 = vmul.f32 %v4658, %v4685
      %v4721 = vmul.f32 %v4659, %v4689
      %v4722 = vmul.f32 %v4660, %v4693
      %v4723 = vmul.f32 %v4661, %v4697
      %v4724 = vmul.f32 %v4662, %v4701
      %v4725 = vmul.f32 %v4663, %v4705
      %v4726 = vld [vmem:[%s20] sm:$0x7]
      %v4727 = vld [vmem:[%s21] sm:$0x7]
      %4738 = vrot.lane.b32.xlu0 %v4716, 35
      %v4739 = vpop.permute.xlu0 %4738
      %4740 = vrot.lane.b32.xlu0 %v4717, 35
      %v4741 = vpop.permute.xlu0 %4740
      %4742 = vrot.lane.b32.xlu0 %v4718, 35
      %v4743 = vpop.permute.xlu0 %4742
      %4744 = vrot.lane.b32.xlu0 %v4719, 35
      %v4745 = vpop.permute.xlu0 %4744
      %4746 = vrot.lane.b32.xlu0 %v4720, 35
      %v4747 = vpop.permute.xlu0 %4746
      %4748 = vrot.lane.b32.xlu0 %v4721, 35
      %v4749 = vpop.permute.xlu0 %4748
      %4750 = vrot.lane.b32.xlu0 %v4722, 35
      %v4751 = vpop.permute.xlu0 %4750
      %4752 = vrot.lane.b32.xlu0 %v4723, 35
      %v4753 = vpop.permute.xlu0 %4752
      %4754 = vrot.lane.b32.xlu0 %v4724, 35
      %v4755 = vpop.permute.xlu0 %4754
      %4756 = vrot.lane.b32.xlu0 %v4725, 35
      %v4757 = vpop.permute.xlu0 %4756
      %v4758 = vsel %vm3948, %v4739, %v4741
      %v4759 = vsel %vm3948, %v4741, %v4743
      %v4760 = vsel %vm3948, %v4743, %v4745
      %v4761 = vsel %vm3948, %v4745, %v4747
      %v4762 = vsel %vm3948, %v4747, %v4749
      %v4763 = vsel %vm3948, %v4749, %v4751
      %v4764 = vsel %vm3948, %v4751, %v4753
      %v4765 = vsel %vm3948, %v4753, %v4755
      %v4766 = vsel %vm3948, %v4755, %v4757
      %v4777 = vsel %vm3948, 0.0, %v4739
      %v4778 = vsel %vm3969, %v4766, 0.0
      %4781 = vrot.lane.b32.xlu0 %v4777, 127
      %v4782 = vpop.permute.xlu0 %4781
      %4783 = vrot.lane.b32.xlu0 %v4758, 127
      %v4784 = vpop.permute.xlu0 %4783
      %4785 = vrot.lane.b32.xlu0 %v4759, 127
      %v4786 = vpop.permute.xlu0 %4785
      %4787 = vrot.lane.b32.xlu0 %v4760, 127
      %v4788 = vpop.permute.xlu0 %4787
      %4789 = vrot.lane.b32.xlu0 %v4761, 127
      %v4790 = vpop.permute.xlu0 %4789
      %4791 = vrot.lane.b32.xlu0 %v4762, 127
      %v4792 = vpop.permute.xlu0 %4791
      %4793 = vrot.lane.b32.xlu0 %v4763, 127
      %v4794 = vpop.permute.xlu0 %4793
      %4795 = vrot.lane.b32.xlu0 %v4764, 127
      %v4796 = vpop.permute.xlu0 %4795
      %4797 = vrot.lane.b32.xlu0 %v4765, 127
      %v4798 = vpop.permute.xlu0 %4797
      %4799 = vrot.lane.b32.xlu0 %v4778, 127
      %v4800 = vpop.permute.xlu0 %4799
      %v4801 = vsel %vm2013, %v4782, %v4784
      %v4802 = vsel %vm2013, %v4784, %v4786
      %v4803 = vsel %vm2013, %v4786, %v4788
      %v4804 = vsel %vm2013, %v4788, %v4790
      %v4805 = vsel %vm2013, %v4790, %v4792
      %v4806 = vsel %vm2013, %v4792, %v4794
      %v4807 = vsel %vm2013, %v4794, %v4796
      %v4808 = vsel %vm2013, %v4796, %v4798
      %v4809 = vsel %vm2013, %v4798, %v4800
      %4820 = vrot.lane.b32.xlu0 %v4777, 126
      %v4821 = vpop.permute.xlu0 %4820
      %4822 = vrot.lane.b32.xlu0 %v4758, 126
      %v4823 = vpop.permute.xlu0 %4822
      %4824 = vrot.lane.b32.xlu0 %v4759, 126
      %v4825 = vpop.permute.xlu0 %4824
      %4826 = vrot.lane.b32.xlu0 %v4760, 126
      %v4827 = vpop.permute.xlu0 %4826
      %4828 = vrot.lane.b32.xlu0 %v4761, 126
      %v4829 = vpop.permute.xlu0 %4828
      %4830 = vrot.lane.b32.xlu0 %v4762, 126
      %v4831 = vpop.permute.xlu0 %4830
      %4832 = vrot.lane.b32.xlu0 %v4763, 126
      %v4833 = vpop.permute.xlu0 %4832
      %4834 = vrot.lane.b32.xlu0 %v4764, 126
      %v4835 = vpop.permute.xlu0 %4834
      %4836 = vrot.lane.b32.xlu0 %v4765, 126
      %v4837 = vpop.permute.xlu0 %4836
      %4838 = vrot.lane.b32.xlu0 %v4778, 126
      %v4839 = vpop.permute.xlu0 %4838
      %v4840 = vsel %vm2036, %v4821, %v4823
      %v4841 = vsel %vm2036, %v4823, %v4825
      %v4842 = vsel %vm2036, %v4825, %v4827
      %v4843 = vsel %vm2036, %v4827, %v4829
      %v4844 = vsel %vm2036, %v4829, %v4831
      %v4845 = vsel %vm2036, %v4831, %v4833
      %v4846 = vsel %vm2036, %v4833, %v4835
      %v4847 = vsel %vm2036, %v4835, %v4837
      %v4848 = vsel %vm2036, %v4837, %v4839
      %4859 = vrot.lane.b32.xlu0 %v4777, 94
      %v4860 = vpop.permute.xlu0 %4859
      %4861 = vrot.lane.b32.xlu0 %v4758, 94
      %v4862 = vpop.permute.xlu0 %4861
      %4863 = vrot.lane.b32.xlu0 %v4759, 94
      %v4864 = vpop.permute.xlu0 %4863
      %4865 = vrot.lane.b32.xlu0 %v4760, 94
      %v4866 = vpop.permute.xlu0 %4865
      %4867 = vrot.lane.b32.xlu0 %v4761, 94
      %v4868 = vpop.permute.xlu0 %4867
      %4869 = vrot.lane.b32.xlu0 %v4762, 94
      %v4870 = vpop.permute.xlu0 %4869
      %4871 = vrot.lane.b32.xlu0 %v4763, 94
      %v4872 = vpop.permute.xlu0 %4871
      %4873 = vrot.lane.b32.xlu0 %v4764, 94
      %v4874 = vpop.permute.xlu0 %4873
      %4875 = vrot.lane.b32.xlu0 %v4765, 94
      %v4876 = vpop.permute.xlu0 %4875
      %4877 = vrot.lane.b32.xlu0 %v4778, 94
      %v4878 = vpop.permute.xlu0 %4877
      %v4879 = vsel %vm4071, %v4860, %v4862
      %v4880 = vsel %vm4071, %v4862, %v4864
      %v4881 = vsel %vm4071, %v4864, %v4866
      %v4882 = vsel %vm4071, %v4866, %v4868
      %v4883 = vsel %vm4071, %v4868, %v4870
      %v4884 = vsel %vm4071, %v4870, %v4872
      %v4885 = vsel %vm4071, %v4872, %v4874
      %v4886 = vsel %vm4071, %v4874, %v4876
      %v4887 = vsel %vm4071, %v4876, %v4878
      %4898 = vrot.lane.b32.xlu0 %v4777, 93
      %v4899 = vpop.permute.xlu0 %4898
      %4900 = vrot.lane.b32.xlu0 %v4758, 93
      %v4901 = vpop.permute.xlu0 %4900
      %4902 = vrot.lane.b32.xlu0 %v4759, 93
      %v4903 = vpop.permute.xlu0 %4902
      %4904 = vrot.lane.b32.xlu0 %v4760, 93
      %v4905 = vpop.permute.xlu0 %4904
      %4906 = vrot.lane.b32.xlu0 %v4761, 93
      %v4907 = vpop.permute.xlu0 %4906
      %4908 = vrot.lane.b32.xlu0 %v4762, 93
      %v4909 = vpop.permute.xlu0 %4908
      %4910 = vrot.lane.b32.xlu0 %v4763, 93
      %v4911 = vpop.permute.xlu0 %4910
      %4912 = vrot.lane.b32.xlu0 %v4764, 93
      %v4913 = vpop.permute.xlu0 %4912
      %4914 = vrot.lane.b32.xlu0 %v4765, 93
      %v4915 = vpop.permute.xlu0 %4914
      %4916 = vrot.lane.b32.xlu0 %v4778, 93
      %v4917 = vpop.permute.xlu0 %4916
      %v4918 = vsel %vm4111, %v4899, %v4901
      %v4919 = vsel %vm4111, %v4901, %v4903
      %v4920 = vsel %vm4111, %v4903, %v4905
      %v4921 = vsel %vm4111, %v4905, %v4907
      %v4922 = vsel %vm4111, %v4907, %v4909
      %v4923 = vsel %vm4111, %v4909, %v4911
      %v4924 = vsel %vm4111, %v4911, %v4913
      %v4925 = vsel %vm4111, %v4913, %v4915
      %v4926 = vsel %vm4111, %v4915, %v4917
      %4937 = vrot.lane.b32.xlu0 %v4777, 92
      %v4938 = vpop.permute.xlu0 %4937
      %4939 = vrot.lane.b32.xlu0 %v4758, 92
      %v4940 = vpop.permute.xlu0 %4939
      %4941 = vrot.lane.b32.xlu0 %v4759, 92
      %v4942 = vpop.permute.xlu0 %4941
      %4943 = vrot.lane.b32.xlu0 %v4760, 92
      %v4944 = vpop.permute.xlu0 %4943
      %4945 = vrot.lane.b32.xlu0 %v4761, 92
      %v4946 = vpop.permute.xlu0 %4945
      %4947 = vrot.lane.b32.xlu0 %v4762, 92
      %v4948 = vpop.permute.xlu0 %4947
      %4949 = vrot.lane.b32.xlu0 %v4763, 92
      %v4950 = vpop.permute.xlu0 %4949
      %4951 = vrot.lane.b32.xlu0 %v4764, 92
      %v4952 = vpop.permute.xlu0 %4951
      %4953 = vrot.lane.b32.xlu0 %v4765, 92
      %v4954 = vpop.permute.xlu0 %4953
      %4955 = vrot.lane.b32.xlu0 %v4778, 92
      %v4956 = vpop.permute.xlu0 %4955
      %v4957 = vsel %vm2128, %v4938, %v4940
      %v4958 = vsel %vm2128, %v4940, %v4942
      %v4959 = vsel %vm2128, %v4942, %v4944
      %v4960 = vsel %vm2128, %v4944, %v4946
      %v4961 = vsel %vm2128, %v4946, %v4948
      %v4962 = vsel %vm2128, %v4948, %v4950
      %v4963 = vsel %vm2128, %v4950, %v4952
      %v4964 = vsel %vm2128, %v4952, %v4954
      %v4965 = vsel %vm2128, %v4954, %v4956
      %4976 = vrot.lane.b32.xlu0 %v4777, 60
      %v4977 = vpop.permute.xlu0 %4976
      %4978 = vrot.lane.b32.xlu0 %v4758, 60
      %v4979 = vpop.permute.xlu0 %4978
      %4980 = vrot.lane.b32.xlu0 %v4759, 60
      %v4981 = vpop.permute.xlu0 %4980
      %4982 = vrot.lane.b32.xlu0 %v4760, 60
      %v4983 = vpop.permute.xlu0 %4982
      %4984 = vrot.lane.b32.xlu0 %v4761, 60
      %v4985 = vpop.permute.xlu0 %4984
      %4986 = vrot.lane.b32.xlu0 %v4762, 60
      %v4987 = vpop.permute.xlu0 %4986
      %4988 = vrot.lane.b32.xlu0 %v4763, 60
      %v4989 = vpop.permute.xlu0 %4988
      %4990 = vrot.lane.b32.xlu0 %v4764, 60
      %v4991 = vpop.permute.xlu0 %4990
      %4992 = vrot.lane.b32.xlu0 %v4765, 60
      %v4993 = vpop.permute.xlu0 %4992
      %4994 = vrot.lane.b32.xlu0 %v4778, 60
      %v4995 = vpop.permute.xlu0 %4994
      %v4996 = vsel %vm4190, %v4977, %v4979
      %v4997 = vsel %vm4190, %v4979, %v4981
      %v4998 = vsel %vm4190, %v4981, %v4983
      %v4999 = vsel %vm4190, %v4983, %v4985
      %v5000 = vsel %vm4190, %v4985, %v4987
      %v5001 = vsel %vm4190, %v4987, %v4989
      %v5002 = vsel %vm4190, %v4989, %v4991
      %v5003 = vsel %vm4190, %v4991, %v4993
      %v5004 = vsel %vm4190, %v4993, %v4995
      %5015 = vrot.lane.b32.xlu0 %v4777, 59
      %v5016 = vpop.permute.xlu0 %5015
      %5017 = vrot.lane.b32.xlu0 %v4758, 59
      %v5018 = vpop.permute.xlu0 %5017
      %5019 = vrot.lane.b32.xlu0 %v4759, 59
      %v5020 = vpop.permute.xlu0 %5019
      %5021 = vrot.lane.b32.xlu0 %v4760, 59
      %v5022 = vpop.permute.xlu0 %5021
      %5023 = vrot.lane.b32.xlu0 %v4761, 59
      %v5024 = vpop.permute.xlu0 %5023
      %5025 = vrot.lane.b32.xlu0 %v4762, 59
      %v5026 = vpop.permute.xlu0 %5025
      %5027 = vrot.lane.b32.xlu0 %v4763, 59
      %v5028 = vpop.permute.xlu0 %5027
      %5029 = vrot.lane.b32.xlu0 %v4764, 59
      %v5030 = vpop.permute.xlu0 %5029
      %5031 = vrot.lane.b32.xlu0 %v4765, 59
      %v5032 = vpop.permute.xlu0 %5031
      %5033 = vrot.lane.b32.xlu0 %v4778, 59
      %v5034 = vpop.permute.xlu0 %5033
      %v5035 = vsel %vm4230, %v5016, %v5018
      %v5036 = vsel %vm4230, %v5018, %v5020
      %v5037 = vsel %vm4230, %v5020, %v5022
      %v5038 = vsel %vm4230, %v5022, %v5024
      %v5039 = vsel %vm4230, %v5024, %v5026
      %v5040 = vsel %vm4230, %v5026, %v5028
      %v5041 = vsel %vm4230, %v5028, %v5030
      %v5042 = vsel %vm4230, %v5030, %v5032
      %v5043 = vsel %vm4230, %v5032, %v5034
      %5054 = vrot.lane.b32.xlu0 %v4777, 58
      %v5055 = vpop.permute.xlu0 %5054
      %5056 = vrot.lane.b32.xlu0 %v4758, 58
      %v5057 = vpop.permute.xlu0 %5056
      %5058 = vrot.lane.b32.xlu0 %v4759, 58
      %v5059 = vpop.permute.xlu0 %5058
      %5060 = vrot.lane.b32.xlu0 %v4760, 58
      %v5061 = vpop.permute.xlu0 %5060
      %5062 = vrot.lane.b32.xlu0 %v4761, 58
      %v5063 = vpop.permute.xlu0 %5062
      %5064 = vrot.lane.b32.xlu0 %v4762, 58
      %v5065 = vpop.permute.xlu0 %5064
      %5066 = vrot.lane.b32.xlu0 %v4763, 58
      %v5067 = vpop.permute.xlu0 %5066
      %5068 = vrot.lane.b32.xlu0 %v4764, 58
      %v5069 = vpop.permute.xlu0 %5068
      %5070 = vrot.lane.b32.xlu0 %v4765, 58
      %v5071 = vpop.permute.xlu0 %5070
      %5072 = vrot.lane.b32.xlu0 %v4778, 58
      %v5073 = vpop.permute.xlu0 %5072
      %v5074 = vsel %vm4270, %v5055, %v5057
      %v5075 = vsel %vm4270, %v5057, %v5059
      %v5076 = vsel %vm4270, %v5059, %v5061
      %v5077 = vsel %vm4270, %v5061, %v5063
      %v5078 = vsel %vm4270, %v5063, %v5065
      %v5079 = vsel %vm4270, %v5065, %v5067
      %v5080 = vsel %vm4270, %v5067, %v5069
      %v5081 = vsel %vm4270, %v5069, %v5071
      %v5082 = vsel %vm4270, %v5071, %v5073
      %5094 = vset.pattern.permute.xlu0 0
      %5095 = vperm.xlu0 %5094, %v4727
      %v5096 = vpop.permute.xlu0 %5095
      %v5099 = vsel %vm4295, %v4726, 0
      %5101 = vmatprep.subr.mxu0 %v4758
      %5102 = vmatpush1.msra.mxu0 %v4777
      %5103 = vmatprep.subr.mxu0 %v4802
      %5104 = vmatpush1.msra.mxu0 %v4801
      %5105 = vmatprep.subr.mxu0 %v4841
      %5106 = vmatpush1.msra.mxu0 %v4840
      %5107 = vmatprep.subr.mxu0 %v4880
      %5108 = vmatpush1.msra.mxu0 %v4879
      %5109 = vmatprep.subr.mxu0 %v4919
      %5110 = vmatpush1.msra.mxu0 %v4918
      %5111 = vmatprep.subr.mxu0 %v4958
      %5112 = vmatpush1.msra.mxu0 %v4957
      %5113 = vmatprep.subr.mxu0 %v4997
      %5114 = vmatpush1.msra.mxu0 %v4996
      %5115 = vmatprep.subr.mxu0 %v5036
      %5116 = vmatpush1.msra.mxu0 %v5035
      %5117 = vmatprep.subr.mxu0 %v5075
      %5118 = vmatpush1.msra.mxu0 %v5074
      %5119 = vmatprep.subr.mxu0 0.0
      %5120 = vmatpush1.msra.mxu0 0.0
      %5121 = vmatprep.subr.mxu0 0.0
      %5122 = vmatpush1.msra.mxu0 0.0
      %5123 = vmatprep.subr.mxu0 0.0
      %5124 = vmatpush1.msra.mxu0 0.0
      %5125 = vmatprep.subr.mxu0 0.0
      %5126 = vmatpush1.msra.mxu0 0.0
      %5127 = vmatprep.subr.mxu0 0.0
      %5128 = vmatpush1.msra.mxu0 0.0
      %5129 = vmatprep.subr.mxu0 0.0
      %5130 = vmatpush1.msra.mxu0 0.0
      %5131 = vmatprep.subr.mxu0 0.0
      %5132 = vmatpush1.msra.mxu0 0.0
      %5133 = vmatprep.subr.mxu0 0.0
      %5134 = vmatpush1.msra.mxu0 0.0
      %5135 = vmatprep.subr.mxu0 0.0
      %5136 = vmatpush1.msra.mxu0 0.0
      %5137 = vmatprep.subr.mxu0 0.0
      %5138 = vmatpush1.msra.mxu0 0.0
      %5139 = vmatprep.subr.mxu0 0.0
      %5140 = vmatpush1.msra.mxu0 0.0
      %5141 = vmatprep.subr.mxu0 0.0
      %5142 = vmatpush1.msra.mxu0 0.0
      %5143 = vmatprep.subr.mxu0 0.0
      %5144 = vmatpush1.msra.mxu0 0.0
      %5145 = vmatprep.subr.mxu0 0.0
      %5146 = vmatpush1.msra.mxu0 0.0
      %5147 = vmatprep.subr.mxu0 0.0
      %5148 = vmatpush1.msra.mxu0 0.0
      %5149 = vmatprep.subr.mxu0 0.0
      %5150 = vmatpush1.msra.mxu0 0.0
      %5151 = vmatprep.subr.mxu0 0.0
      %5152 = vmatpush1.msra.mxu0 0.0
      %5153 = vmatprep.subr.mxu0 0.0
      %5154 = vmatpush1.msra.mxu0 0.0
      %5155 = vmatprep.subr.mxu0 0.0
      %5156 = vmatpush1.msra.mxu0 0.0
      %5157 = vmatprep.subr.mxu0 0.0
      %5158 = vmatpush1.msra.mxu0 0.0
      %5159 = vmatprep.subr.mxu0 0.0
      %5160 = vmatpush1.msra.mxu0 0.0
      %5161 = vmatprep.subr.mxu0 0.0
      %5162 = vmatpush1.msra.mxu0 0.0
      %5163 = vmatprep.subr.mxu0 0.0
      %5164 = vmatpush1.msra.mxu0 0.0
      %5165 = vmatprep.mubr.f32.mxu0 0.0
      %5166 = vmatmul.mubr.f32.gmra.mrb[0].mxu0 %v5099
      %v5167 = vpop.f32.mrb[0].mxu0
      %v5168 = vadd.f32 %v5096, %v5167
      %v5169 = vpop.f32.mrb[0].mxu0
      %v5170 = vadd.f32 %v5096, %v5169
      %5171 = vdwg.mxu0
      %5172 = vmatprep.subr.mxu0 %v4760
      %5173 = vmatpush1.msra.mxu0 %v4759
      %5174 = vmatprep.subr.mxu0 %v4804
      %5175 = vmatpush1.msra.mxu0 %v4803
      %5176 = vmatprep.subr.mxu0 %v4843
      %5177 = vmatpush1.msra.mxu0 %v4842
      %5178 = vmatprep.subr.mxu0 %v4882
      %5179 = vmatpush1.msra.mxu0 %v4881
      %5180 = vmatprep.subr.mxu0 %v4921
      %5181 = vmatpush1.msra.mxu0 %v4920
      %5182 = vmatprep.subr.mxu0 %v4960
      %5183 = vmatpush1.msra.mxu0 %v4959
      %5184 = vmatprep.subr.mxu0 %v4999
      %5185 = vmatpush1.msra.mxu0 %v4998
      %5186 = vmatprep.subr.mxu0 %v5038
      %5187 = vmatpush1.msra.mxu0 %v5037
      %5188 = vmatprep.subr.mxu0 %v5077
      %5189 = vmatpush1.msra.mxu0 %v5076
      %5190 = vmatprep.subr.mxu0 0.0
      %5191 = vmatpush1.msra.mxu0 0.0
      %5192 = vmatprep.subr.mxu0 0.0
      %5193 = vmatpush1.msra.mxu0 0.0
      %5194 = vmatprep.subr.mxu0 0.0
      %5195 = vmatpush1.msra.mxu0 0.0
      %5196 = vmatprep.subr.mxu0 0.0
      %5197 = vmatpush1.msra.mxu0 0.0
      %5198 = vmatprep.subr.mxu0 0.0
      %5199 = vmatpush1.msra.mxu0 0.0
      %5200 = vmatprep.subr.mxu0 0.0
      %5201 = vmatpush1.msra.mxu0 0.0
      %5202 = vmatprep.subr.mxu0 0.0
      %5203 = vmatpush1.msra.mxu0 0.0
      %5204 = vmatprep.subr.mxu0 0.0
      %5205 = vmatpush1.msra.mxu0 0.0
      %5206 = vmatprep.subr.mxu0 0.0
      %5207 = vmatpush1.msra.mxu0 0.0
      %5208 = vmatprep.subr.mxu0 0.0
      %5209 = vmatpush1.msra.mxu0 0.0
      %5210 = vmatprep.subr.mxu0 0.0
      %5211 = vmatpush1.msra.mxu0 0.0
      %5212 = vmatprep.subr.mxu0 0.0
      %5213 = vmatpush1.msra.mxu0 0.0
      %5214 = vmatprep.subr.mxu0 0.0
      %5215 = vmatpush1.msra.mxu0 0.0
      %5216 = vmatprep.subr.mxu0 0.0
      %5217 = vmatpush1.msra.mxu0 0.0
      %5218 = vmatprep.subr.mxu0 0.0
      %5219 = vmatpush1.msra.mxu0 0.0
      %5220 = vmatprep.subr.mxu0 0.0
      %5221 = vmatpush1.msra.mxu0 0.0
      %5222 = vmatprep.subr.mxu0 0.0
      %5223 = vmatpush1.msra.mxu0 0.0
      %5224 = vmatprep.subr.mxu0 0.0
      %5225 = vmatpush1.msra.mxu0 0.0
      %5226 = vmatprep.subr.mxu0 0.0
      %5227 = vmatpush1.msra.mxu0 0.0
      %5228 = vmatprep.subr.mxu0 0.0
      %5229 = vmatpush1.msra.mxu0 0.0
      %5230 = vmatprep.subr.mxu0 0.0
      %5231 = vmatpush1.msra.mxu0 0.0
      %5232 = vmatprep.subr.mxu0 0.0
      %5233 = vmatpush1.msra.mxu0 0.0
      %5234 = vmatprep.subr.mxu0 0.0
      %5235 = vmatpush1.msra.mxu0 0.0
      %5236 = vmatprep.mubr.f32.mxu0 0.0
      %5237 = vmatmul.mubr.f32.gmra.mrb[0].mxu0 %v5099
      %v5238 = vpop.f32.mrb[0].mxu0
      %v5239 = vadd.f32 %v5096, %v5238
      %v5240 = vpop.f32.mrb[0].mxu0
      %v5241 = vadd.f32 %v5096, %v5240
      %5242 = vdwg.mxu0
      %5243 = vmatprep.subr.mxu0 %v4762
      %5244 = vmatpush1.msra.mxu0 %v4761
      %5245 = vmatprep.subr.mxu0 %v4806
      %5246 = vmatpush1.msra.mxu0 %v4805
      %5247 = vmatprep.subr.mxu0 %v4845
      %5248 = vmatpush1.msra.mxu0 %v4844
      %5249 = vmatprep.subr.mxu0 %v4884
      %5250 = vmatpush1.msra.mxu0 %v4883
      %5251 = vmatprep.subr.mxu0 %v4923
      %5252 = vmatpush1.msra.mxu0 %v4922
      %5253 = vmatprep.subr.mxu0 %v4962
      %5254 = vmatpush1.msra.mxu0 %v4961
      %5255 = vmatprep.subr.mxu0 %v5001
      %5256 = vmatpush1.msra.mxu0 %v5000
      %5257 = vmatprep.subr.mxu0 %v5040
      %5258 = vmatpush1.msra.mxu0 %v5039
      %5259 = vmatprep.subr.mxu0 %v5079
      %5260 = vmatpush1.msra.mxu0 %v5078
      %5261 = vmatprep.subr.mxu0 0.0
      %5262 = vmatpush1.msra.mxu0 0.0
      %5263 = vmatprep.subr.mxu0 0.0
      %5264 = vmatpush1.msra.mxu0 0.0
      %5265 = vmatprep.subr.mxu0 0.0
      %5266 = vmatpush1.msra.mxu0 0.0
      %5267 = vmatprep.subr.mxu0 0.0
      %5268 = vmatpush1.msra.mxu0 0.0
      %5269 = vmatprep.subr.mxu0 0.0
      %5270 = vmatpush1.msra.mxu0 0.0
      %5271 = vmatprep.subr.mxu0 0.0
      %5272 = vmatpush1.msra.mxu0 0.0
      %5273 = vmatprep.subr.mxu0 0.0
      %5274 = vmatpush1.msra.mxu0 0.0
      %5275 = vmatprep.subr.mxu0 0.0
      %5276 = vmatpush1.msra.mxu0 0.0
      %5277 = vmatprep.subr.mxu0 0.0
      %5278 = vmatpush1.msra.mxu0 0.0
      %5279 = vmatprep.subr.mxu0 0.0
      %5280 = vmatpush1.msra.mxu0 0.0
      %5281 = vmatprep.subr.mxu0 0.0
      %5282 = vmatpush1.msra.mxu0 0.0
      %5283 = vmatprep.subr.mxu0 0.0
      %5284 = vmatpush1.msra.mxu0 0.0
      %5285 = vmatprep.subr.mxu0 0.0
      %5286 = vmatpush1.msra.mxu0 0.0
      %5287 = vmatprep.subr.mxu0 0.0
      %5288 = vmatpush1.msra.mxu0 0.0
      %5289 = vmatprep.subr.mxu0 0.0
      %5290 = vmatpush1.msra.mxu0 0.0
      %5291 = vmatprep.subr.mxu0 0.0
      %5292 = vmatpush1.msra.mxu0 0.0
      %5293 = vmatprep.subr.mxu0 0.0
      %5294 = vmatpush1.msra.mxu0 0.0
      %5295 = vmatprep.subr.mxu0 0.0
      %5296 = vmatpush1.msra.mxu0 0.0
      %5297 = vmatprep.subr.mxu0 0.0
      %5298 = vmatpush1.msra.mxu0 0.0
      %5299 = vmatprep.subr.mxu0 0.0
      %5300 = vmatpush1.msra.mxu0 0.0
      %5301 = vmatprep.subr.mxu0 0.0
      %5302 = vmatpush1.msra.mxu0 0.0
      %5303 = vmatprep.subr.mxu0 0.0
      %5304 = vmatpush1.msra.mxu0 0.0
      %5305 = vmatprep.subr.mxu0 0.0
      %5306 = vmatpush1.msra.mxu0 0.0
      %5307 = vmatprep.mubr.f32.mxu0 0.0
      %5308 = vmatmul.mubr.f32.gmra.mrb[0].mxu0 %v5099
      %v5309 = vpop.f32.mrb[0].mxu0
      %v5310 = vadd.f32 %v5096, %v5309
      %v5311 = vpop.f32.mrb[0].mxu0
      %v5312 = vadd.f32 %v5096, %v5311
      %5313 = vdwg.mxu0
      %5314 = vmatprep.subr.mxu0 %v4764
      %5315 = vmatpush1.msra.mxu0 %v4763
      %5316 = vmatprep.subr.mxu0 %v4808
      %5317 = vmatpush1.msra.mxu0 %v4807
      %5318 = vmatprep.subr.mxu0 %v4847
      %5319 = vmatpush1.msra.mxu0 %v4846
      %5320 = vmatprep.subr.mxu0 %v4886
      %5321 = vmatpush1.msra.mxu0 %v4885
      %5322 = vmatprep.subr.mxu0 %v4925
      %5323 = vmatpush1.msra.mxu0 %v4924
      %5324 = vmatprep.subr.mxu0 %v4964
      %5325 = vmatpush1.msra.mxu0 %v4963
      %5326 = vmatprep.subr.mxu0 %v5003
      %5327 = vmatpush1.msra.mxu0 %v5002
      %5328 = vmatprep.subr.mxu0 %v5042
      %5329 = vmatpush1.msra.mxu0 %v5041
      %5330 = vmatprep.subr.mxu0 %v5081
      %5331 = vmatpush1.msra.mxu0 %v5080
      %5332 = vmatprep.subr.mxu0 0.0
      %5333 = vmatpush1.msra.mxu0 0.0
      %5334 = vmatprep.subr.mxu0 0.0
      %5335 = vmatpush1.msra.mxu0 0.0
      %5336 = vmatprep.subr.mxu0 0.0
      %5337 = vmatpush1.msra.mxu0 0.0
      %5338 = vmatprep.subr.mxu0 0.0
      %5339 = vmatpush1.msra.mxu0 0.0
      %5340 = vmatprep.subr.mxu0 0.0
      %5341 = vmatpush1.msra.mxu0 0.0
      %5342 = vmatprep.subr.mxu0 0.0
      %5343 = vmatpush1.msra.mxu0 0.0
      %5344 = vmatprep.subr.mxu0 0.0
      %5345 = vmatpush1.msra.mxu0 0.0
      %5346 = vmatprep.subr.mxu0 0.0
      %5347 = vmatpush1.msra.mxu0 0.0
      %5348 = vmatprep.subr.mxu0 0.0
      %5349 = vmatpush1.msra.mxu0 0.0
      %5350 = vmatprep.subr.mxu0 0.0
      %5351 = vmatpush1.msra.mxu0 0.0
      %5352 = vmatprep.subr.mxu0 0.0
      %5353 = vmatpush1.msra.mxu0 0.0
      %5354 = vmatprep.subr.mxu0 0.0
      %5355 = vmatpush1.msra.mxu0 0.0
      %5356 = vmatprep.subr.mxu0 0.0
      %5357 = vmatpush1.msra.mxu0 0.0
      %5358 = vmatprep.subr.mxu0 0.0
      %5359 = vmatpush1.msra.mxu0 0.0
      %5360 = vmatprep.subr.mxu0 0.0
      %5361 = vmatpush1.msra.mxu0 0.0
      %5362 = vmatprep.subr.mxu0 0.0
      %5363 = vmatpush1.msra.mxu0 0.0
      %5364 = vmatprep.subr.mxu0 0.0
      %5365 = vmatpush1.msra.mxu0 0.0
      %5366 = vmatprep.subr.mxu0 0.0
      %5367 = vmatpush1.msra.mxu0 0.0
      %5368 = vmatprep.subr.mxu0 0.0
      %5369 = vmatpush1.msra.mxu0 0.0
      %5370 = vmatprep.subr.mxu0 0.0
      %5371 = vmatpush1.msra.mxu0 0.0
      %5372 = vmatprep.subr.mxu0 0.0
      %5373 = vmatpush1.msra.mxu0 0.0
      %5374 = vmatprep.subr.mxu0 0.0
      %5375 = vmatpush1.msra.mxu0 0.0
      %5376 = vmatprep.subr.mxu0 0.0
      %5377 = vmatpush1.msra.mxu0 0.0
      %5378 = vmatprep.mubr.f32.mxu0 0.0
      %5379 = vmatmul.mubr.f32.gmra.mrb[0].mxu0 %v5099
      %v5380 = vpop.f32.mrb[0].mxu0
      %v5381 = vadd.f32 %v5096, %v5380
      %v5382 = vpop.f32.mrb[0].mxu0
      %v5383 = vadd.f32 %v5096, %v5382
      %5384 = vdwg.mxu0
      %5385 = vmatprep.subr.mxu0 %v4778
      %5386 = vmatpush1.msra.mxu0 %v4765
      %5387 = vmatprep.subr.mxu0 %v4800
      %5388 = vmatpush1.msra.mxu0 %v4809
      %5389 = vmatprep.subr.mxu0 %v4839
      %5390 = vmatpush1.msra.mxu0 %v4848
      %5391 = vmatprep.subr.mxu0 %v4878
      %5392 = vmatpush1.msra.mxu0 %v4887
      %5393 = vmatprep.subr.mxu0 %v4917
      %5394 = vmatpush1.msra.mxu0 %v4926
      %5395 = vmatprep.subr.mxu0 %v4956
      %5396 = vmatpush1.msra.mxu0 %v4965
      %5397 = vmatprep.subr.mxu0 %v4995
      %5398 = vmatpush1.msra.mxu0 %v5004
      %5399 = vmatprep.subr.mxu0 %v5034
      %5400 = vmatpush1.msra.mxu0 %v5043
      %5401 = vmatprep.subr.mxu0 %v5073
      %5402 = vmatpush1.msra.mxu0 %v5082
      %5403 = vmatprep.subr.mxu0 0.0
      %5404 = vmatpush1.msra.mxu0 0.0
      %5405 = vmatprep.subr.mxu0 0.0
      %5406 = vmatpush1.msra.mxu0 0.0
      %5407 = vmatprep.subr.mxu0 0.0
      %5408 = vmatpush1.msra.mxu0 0.0
      %5409 = vmatprep.subr.mxu0 0.0
      %5410 = vmatpush1.msra.mxu0 0.0
      %5411 = vmatprep.subr.mxu0 0.0
      %5412 = vmatpush1.msra.mxu0 0.0
      %5413 = vmatprep.subr.mxu0 0.0
      %5414 = vmatpush1.msra.mxu0 0.0
      %5415 = vmatprep.subr.mxu0 0.0
      %5416 = vmatpush1.msra.mxu0 0.0
      %5417 = vmatprep.subr.mxu0 0.0
      %5418 = vmatpush1.msra.mxu0 0.0
      %5419 = vmatprep.subr.mxu0 0.0
      %5420 = vmatpush1.msra.mxu0 0.0
      %5421 = vmatprep.subr.mxu0 0.0
      %5422 = vmatpush1.msra.mxu0 0.0
      %5423 = vmatprep.subr.mxu0 0.0
      %5424 = vmatpush1.msra.mxu0 0.0
      %5425 = vmatprep.subr.mxu0 0.0
      %5426 = vmatpush1.msra.mxu0 0.0
      %5427 = vmatprep.subr.mxu0 0.0
      %5428 = vmatpush1.msra.mxu0 0.0
      %5429 = vmatprep.subr.mxu0 0.0
      %5430 = vmatpush1.msra.mxu0 0.0
      %5431 = vmatprep.subr.mxu0 0.0
      %5432 = vmatpush1.msra.mxu0 0.0
      %5433 = vmatprep.subr.mxu0 0.0
      %5434 = vmatpush1.msra.mxu0 0.0
      %5435 = vmatprep.subr.mxu0 0.0
      %5436 = vmatpush1.msra.mxu0 0.0
      %5437 = vmatprep.subr.mxu0 0.0
      %5438 = vmatpush1.msra.mxu0 0.0
      %5439 = vmatprep.subr.mxu0 0.0
      %5440 = vmatpush1.msra.mxu0 0.0
      %5441 = vmatprep.subr.mxu0 0.0
      %5442 = vmatpush1.msra.mxu0 0.0
      %5443 = vmatprep.subr.mxu0 0.0
      %5444 = vmatpush1.msra.mxu0 0.0
      %5445 = vmatprep.subr.mxu0 0.0
      %5446 = vmatpush1.msra.mxu0 0.0
      %5447 = vmatprep.subr.mxu0 0.0
      %5448 = vmatpush1.msra.mxu0 0.0
      %5449 = vmatprep.mubr.f32.mxu0 0.0
      %5450 = vmatmul.mubr.f32.gmra.mrb[0].mxu0 %v5099
      %v5451 = vpop.f32.mrb[0].mxu0
      %v5452 = vadd.f32 %v5096, %v5451
      %v5453 = vpop.f32.mrb[0].mxu0
      %v5454 = vadd.f32 %v5096, %v5453
      %5455 = vdwg.mxu0
      %v5456 = vtanh.pop %v5168
      %v5457 = vtanh.pop %v5170
      %v5458 = vtanh.pop %v5239
      %v5459 = vtanh.pop %v5241
      %v5460 = vtanh.pop %v5310
      %v5461 = vtanh.pop %v5312
      %v5462 = vtanh.pop %v5381
      %v5463 = vtanh.pop %v5383
      %v5464 = vtanh.pop %v5452
      %v5465 = vtanh.pop %v5454
      %v5466 = vmul.f32 %v5456, %v4669
      %v5467 = vmul.f32 %v5457, %v4673
      %v5468 = vmul.f32 %v5458, %v4677
      %v5469 = vmul.f32 %v5459, %v4681
      %v5470 = vmul.f32 %v5460, %v4685
      %v5471 = vmul.f32 %v5461, %v4689
      %v5472 = vmul.f32 %v5462, %v4693
      %v5473 = vmul.f32 %v5463, %v4697
      %v5474 = vmul.f32 %v5464, %v4701
      %v5475 = vmul.f32 %v5465, %v4705
      %v5486 = vcombine.low %v5466, %v5467
      %v5487 = vcombine.low %v5468, %v5469
      %v5488 = vcombine.low %v5470, %v5471
      %v5489 = vcombine.low %v5472, %v5473
      %v5490 = vcombine.low %v5474, %v5475
      %5496 = vst [vmem:[%s723] sm:$0x77] %v5486
      %5497 = vst [vmem:[%s723 + $0x8] sm:$0x77] %v5487
      %5498 = vst [vmem:[%s723 + $0x10] sm:$0x77] %v5488
      %5499 = vst [vmem:[%s723 + $0x18] sm:$0x77] %v5489
      %vm5500 = vcmask 1042432
      %vm5501 = vcmask 30724
      %vm5502 = vmor %vm5501, %vm5500
      %5503 = vst.msk [vmem:[%s723 + $0x20] sm:$0x77] %vm5502, %v5490
      %p5504 = scmp.lt.s32.totalorder %s33, 1
      %s5505 = scalar_select %p5504, %s33, 1
      %s5506 = smul.addr %s5505, 10
      %s5507 = smul.addr %s5506, 4
      %s5508 = scalar_lea.vmem %s22, %s5507
      // Predicated region
      $region109: #{dec_cnn_forward.1} parent=107 // pred_check
        %p5509 = pneg %p528
      $region110: #{dec_cnn_forward.1} parent=107 // pred_check_branch
        %5511 = sbr.rel (%p5509) target = $region112
      $region111: #{dec_cnn_forward.1} parent=107 // pred_region
        _
      $region112: #{dec_cnn_forward.1} parent=107 // pred_fallthru
        _
    $region108: #{dec_cnn_forward.1} parent=5 // pred_fallthru
      _
    %p5512 = scmp.le.s32.totalorder 2, %s28
    // Predicated region
    $region113: #{dec_cnn_forward.1} parent=5 // pred_check
      %p5513 = pneg %p5512
    $region114: #{dec_cnn_forward.1} parent=5 // pred_check_branch
      %5515 = sbr.rel (%p5513) target = $region116
    $region115: #{dec_cnn_forward.1} parent=5 // pred_region
      %s5516 = ssub.s32 %s28, 2
      // Predicated region
      $region117: #{dec_cnn_forward.1} parent=115 // pred_check
        %p5517 = pneg %p534
      $region118: #{dec_cnn_forward.1} parent=115 // pred_check_branch
        %5519 = sbr.rel (%p5517) target = $region120
      $region119: #{dec_cnn_forward.1} parent=115 // pred_region
        %p5520 = scmp.lt.s32.totalorder %s34, 1
        %s5521 = scalar_select %p5520, %s34, 1
        %s5522 = smul.addr %s5521, 10
        %s5523 = smul.addr %s5522, 4
        %s5524 = scalar_lea.vmem %s22, %s5523
      $region120: #{dec_cnn_forward.1} parent=115 // pred_fallthru
        _
    $region116: #{dec_cnn_forward.1} parent=5 // pred_fallthru
      _
  $region6: #{dec_cnn_forward.1} parent=0 // loop_footer
    %s32 = sadd.s32 1, %s28
  $region7: #{dec_cnn_forward.1} parent=0 // loop_footer_branch
    %27 = sbr.rel target = $region3
  $region8: #{dec_cnn_forward.1} parent=0 // loop_exit
    _

</llo_original>
